<compile_context>
chip_gen: v7x
topology: tpu7x:2x2x1
jax: 0.10.0
libtpu: 0.0.40
codegen_flags: <defaults>
</compile_context>

<pallas_src>
import functools
import numpy as np
import jax
import jax.numpy as jnp
from jax import lax
from jax.experimental import pallas as pl
from jax.experimental.pallas import tpu as pltpu


def _round_up(x, m):
    return ((int(x) + m - 1) // m) * m


# ---------------------------------------------------------------------------
# Fused encoder kernel (whole LSTM stack in one pallas_call, no grid)
# ---------------------------------------------------------------------------

def _make_encoder_kernel(num_layers, T, B_pad, in_pads, h_pads, compute_dtype):
    if np.dtype(compute_dtype) == np.dtype(jnp.float32):
        # f32 parity / debug mode
        dot = functools.partial(jnp.dot, preferred_element_type=jnp.float32,
                                precision=lax.Precision.HIGHEST)
    else:
        # fast path: bf16 MXU operands, f32 accumulation
        dot = functools.partial(jnp.dot, preferred_element_type=jnp.float32)

    # Partial unroll for long sequences (LLO cross-iteration scheduling) without
    # blowing up code size; full unroll for short T.
    unroll = T if T <= 32 else 8

    def kernel(*refs):
        x_ref = refs[0]
        w_refs = refs[1:1 + 3 * num_layers]
        out_ref = refs[1 + 3 * num_layers]
        slab_a, slab_b, gx_ref = refs[2 + 3 * num_layers:]
        slabs = (slab_a, slab_b)

        h_final = None
        for l in range(num_layers):
            wih_ref = w_refs[3 * l]
            whh_ref = w_refs[3 * l + 1]
            b_ref = w_refs[3 * l + 2]
            Ip, Hp = in_pads[l], h_pads[l]

            if l == 0:
                xin = x_ref[...]                       # (T*B_pad, Ip), compute_dtype
            else:
                xin = slabs[(l - 1) % 2][:, :Ip]       # previous layer's h sequence

            # Hoisted input projection (+ folded f32 bias) for ALL timesteps: one big
            # MXU matmul with f32 accumulation, stored in compute_dtype.
            gx = dot(xin, wih_ref[...]) + b_ref[...]
            gx_ref[:, :4 * Hp] = gx.astype(gx_ref.dtype)

            out_slab = slabs[l % 2]
            write_seq = (l < num_layers - 1)           # last layer: only final h is needed

            def step(t, carry):
                h_prev, c_prev = carry                 # f32 vreg-resident state
                row = pl.multiple_of(t * B_pad, B_pad)  # sublane-aligned offset
                gates = (gx_ref[pl.ds(row, B_pad), pl.ds(0, 4 * Hp)].astype(jnp.float32)
                         + dot(h_prev.astype(compute_dtype), whh_ref[...]))
                # PyTorch gate order i, f, g, o; each gate is its own 128-lane block.
                i = jax.nn.sigmoid(gates[:, 0 * Hp:1 * Hp])
                f = jax.nn.sigmoid(gates[:, 1 * Hp:2 * Hp])
                g = jnp.tanh(gates[:, 2 * Hp:3 * Hp])
                o = jax.nn.sigmoid(gates[:, 3 * Hp:4 * Hp])
                c = f * c_prev + i * g
                h = o * jnp.tanh(c)
                if write_seq:
                    out_slab[pl.ds(row, B_pad), pl.ds(0, Hp)] = h.astype(out_slab.dtype)
                return (h, c)

            h0 = jnp.zeros((B_pad, Hp), jnp.float32)
            c0 = jnp.zeros((B_pad, Hp), jnp.float32)
            h_last, _ = lax.fori_loop(0, T, step, (h0, c0), unroll=unroll)
            if l == num_layers - 1:
                h_final = h_last

        # Encoder output = final hidden state of the last layer; lane-dense (B_pad, Hp_last).
        out_ref[...] = h_final

    return kernel


# ---------------------------------------------------------------------------
# Weight packing: PyTorch (4H, I) -> lane-padded (I_pad, 4*H_pad), compute_dtype, gate-blocked
# ---------------------------------------------------------------------------

def _pack_lstm_weights(w_ih, w_hh, b_ih, b_hh, in_pad, h_pad, compute_dtype):
    fourH, _ = w_ih.shape
    H = fourH // 4

    def pack(w, ip):
        # (4H, in) -> (in, 4, H) -> zero-pad to (ip, 4, h_pad) -> (ip, 4*h_pad)
        w4 = jnp.transpose(w.reshape(4, H, -1), (2, 0, 1))
        out = jnp.zeros((ip, 4, h_pad), jnp.float32).at[:w.shape[1], :, :H].set(w4)
        return out.reshape(ip, 4 * h_pad).astype(compute_dtype)

    b = (b_ih + b_hh).reshape(4, H)                    # fold the two biases; keep f32
    b_p = jnp.zeros((4, h_pad), jnp.float32).at[:, :H].set(b).reshape(1, 4 * h_pad)
    return pack(w_ih, in_pad), pack(w_hh, h_pad), b_p


# ---------------------------------------------------------------------------
# Forward pass wrapper (matches LSTMEncoder.forward: returns x[:, -1, :].unsqueeze(1))
# ---------------------------------------------------------------------------

def lstm_encoder_forward(x, params, layer_sizes, *, compute_dtype=jnp.bfloat16):
    """x: (B, T, input_size) f32. params: list of (w_ih, w_hh, b_ih, b_hh), PyTorch shapes.
    Returns (B, 1, encoding_size) f32."""
    B, T, I = x.shape
    L = len(params)
    sizes = [I] + [int(s) for s in layer_sizes]
    pads = [_round_up(s, 128) for s in sizes]          # 128-lane padding per feature dim
    in_pads, h_pads = pads[:-1], pads[1:]
    # Inter-layer slab read window must equal what the previous layer wrote.
    for l in range(1, L):
        assert in_pads[l] == h_pads[l - 1], (l, in_pads[l], h_pads[l - 1])

    itemsize = np.dtype(compute_dtype).itemsize
    # 8 sublanes for f32, 16 for bf16 so per-step slab/gx accesses are full sublane tiles.
    b_tile = 8 if itemsize == 4 else 16
    B_pad = _round_up(max(B, b_tile), b_tile)
    N = T * B_pad
    slab_w = max(h_pads[:-1]) if L > 1 else 128        # last layer never writes its sequence
    gx_w = 4 * max(h_pads)

    # Lane/sublane-aligned, time-major input slab (T*B_pad, I_pad), already in compute_dtype.
    x_tbf = jnp.transpose(x, (1, 0, 2)).astype(jnp.float32)
    x_slab = jnp.zeros((T, B_pad, in_pads[0]), jnp.float32).at[:, :B, :I].set(x_tbf)
    x_slab = x_slab.reshape(N, in_pads[0]).astype(compute_dtype)

    packed = []
    for l, (w_ih, w_hh, b_ih, b_hh) in enumerate(params):
        packed.extend(_pack_lstm_weights(w_ih, w_hh, b_ih, b_hh,
                                         in_pads[l], h_pads[l], compute_dtype))

    kernel = _make_encoder_kernel(L, T, B_pad, in_pads, h_pads, compute_dtype)

    # VMEM budget: inputs + weights + output + scratch, with headroom; raise the scoped
    # default (16 MiB v5e / 32 MiB v6e,v7x) so realistic shapes do not get constrained.
    in_bytes = x_slab.size * x_slab.dtype.itemsize
    in_bytes += sum(int(w.size) * w.dtype.itemsize for w in packed)
    out_bytes = B_pad * h_pads[-1] * 4
    scratch_bytes = (2 * N * slab_w + N * gx_w) * itemsize
    total_bytes = in_bytes + out_bytes + scratch_bytes
    vmem_limit = int(min(128 * 2**20, max(int(total_bytes * 1.5), 32 * 2**20)))

    vmem_spec = pl.BlockSpec(memory_space=pltpu.MemorySpace.VMEM)
    out = pl.pallas_call(
        kernel,
        out_shape=jax.ShapeDtypeStruct((B_pad, h_pads[-1]), jnp.float32),
        in_specs=[vmem_spec] * (1 + 3 * L),
        out_specs=vmem_spec,
        scratch_shapes=[
            pltpu.VMEM((N, slab_w), compute_dtype),    # activation slab (ping)
            pltpu.VMEM((N, slab_w), compute_dtype),    # activation slab (pong)
            pltpu.VMEM((N, gx_w), compute_dtype),      # hoisted x-projection, all timesteps
        ],
        compiler_params=pltpu.CompilerParams(vmem_limit_bytes=vmem_limit),
    )(x_slab, *packed)

    E = sizes[-1]
    return out[:B, :E].reshape(B, 1, E)


# ---------------------------------------------------------------------------
# Parameter construction (deterministic, PyTorch-style shapes & init dist)
# ---------------------------------------------------------------------------

def make_lstm_params(key, in_size, hidden_size):
    k = 1.0 / np.sqrt(hidden_size)
    k1, k2, k3, k4 = jax.random.split(key, 4)
    w_ih = jax.random.uniform(k1, (4 * hidden_size, in_size), jnp.float32, -k, k)
    w_hh = jax.random.uniform(k2, (4 * hidden_size, hidden_size), jnp.float32, -k, k)
    b_ih = jax.random.uniform(k3, (4 * hidden_size,), jnp.float32, -k, k)
    b_hh = jax.random.uniform(k4, (4 * hidden_size,), jnp.float32, -k, k)
    return (w_ih, w_hh, b_ih, b_hh)


def make_encoder_params(key, input_size, first_layer_size, encoding_size, num_layers):
    layer_sizes = np.linspace(first_layer_size, encoding_size, num_layers, dtype=int)
    sizes = np.append(input_size, layer_sizes)
    keys = jax.random.split(key, num_layers)
    params = [make_lstm_params(keys[i], int(sizes[i]), int(sizes[i + 1]))
              for i in range(num_layers)]
    return params, layer_sizes


# ---------------------------------------------------------------------------
# Pure-JAX reference (f32, HIGHEST) for correctness checks
# ---------------------------------------------------------------------------

def _ref_lstm(x_tbf, w_ih, w_hh, b_ih, b_hh):
    H = w_hh.shape[1]
    B = x_tbf.shape[1]

    def step(carry, x_t):
        h, c = carry
        gates = (jnp.dot(x_t, w_ih.T, precision=lax.Precision.HIGHEST)
                 + jnp.dot(h, w_hh.T, precision=lax.Precision.HIGHEST)
                 + b_ih + b_hh)
        i = jax.nn.sigmoid(gates[:, 0 * H:1 * H])
        f = jax.nn.sigmoid(gates[:, 1 * H:2 * H])
        g = jnp.tanh(gates[:, 2 * H:3 * H])
        o = jax.nn.sigmoid(gates[:, 3 * H:4 * H])
        c = f * c + i * g
        h = o * jnp.tanh(c)
        return (h, c), h

    z = jnp.zeros((B, H), jnp.float32)
    _, hs = lax.scan(step, (z, z), x_tbf)
    return hs


def _ref_encoder(x, params):
    h = jnp.transpose(x, (1, 0, 2))
    for p in params:
        h = _ref_lstm(h, *p)
    return jnp.transpose(h[-1:], (1, 0, 2))           # == x[:, -1, :].unsqueeze(1)


# ---------------------------------------------------------------------------

if __name__ == "__main__":
    B, T = 2, 8
    input_size, first_layer_size, encoding_size, num_layers = 16, 64, 32, 2

    key = jax.random.PRNGKey(0)
    k_params, k_x = jax.random.split(key)
    params, layer_sizes = make_encoder_params(
        k_params, input_size, first_layer_size, encoding_size, num_layers)
    x = jax.random.normal(k_x, (B, T, input_size), jnp.float32)

    # Fast path: bf16 MXU operands & scratch slabs, f32 accumulation / gate math / state.
    out = lstm_encoder_forward(x, params, layer_sizes, compute_dtype=jnp.bfloat16)
    out = jax.block_until_ready(out)
    assert out.shape == (B, 1, encoding_size), out.shape
    assert bool(jnp.all(jnp.isfinite(out)))

    ref = jax.block_until_ready(_ref_encoder(x, params))
    np.testing.assert_allclose(np.asarray(out), np.asarray(ref), rtol=5e-2, atol=5e-2)

    # f32 + HIGHEST parity mode: tight check against the f32 reference.
    out_f32 = jax.block_until_ready(
        lstm_encoder_forward(x, params, layer_sizes, compute_dtype=jnp.float32))
    np.testing.assert_allclose(np.asarray(out_f32), np.asarray(ref), rtol=1e-4, atol=1e-4)

    print("KERNEL_OK")
</pallas_src>

<mosaic_0001>
module attributes {stable_mosaic.version = 11 : i64} {
  func.func @kernel(%arg0: memref<128x128xbf16, #tpu.memory_space<vmem>>, %arg1: memref<128x512xbf16, #tpu.memory_space<vmem>>, %arg2: memref<128x512xbf16, #tpu.memory_space<vmem>>, %arg3: memref<1x512xf32, #tpu.memory_space<vmem>>, %arg4: memref<128x512xbf16, #tpu.memory_space<vmem>>, %arg5: memref<128x512xbf16, #tpu.memory_space<vmem>>, %arg6: memref<1x512xf32, #tpu.memory_space<vmem>>, %arg7: memref<16x128xf32, #tpu.memory_space<vmem>>, %arg8: memref<128x128xbf16, #tpu.memory_space<vmem>>, %arg9: memref<128x128xbf16, #tpu.memory_space<vmem>>, %arg10: memref<128x512xbf16, #tpu.memory_space<vmem>>) attributes {dimension_semantics = [], scalar_prefetch = 0 : i64, scratch_operands = 3 : i64, tpu.core_type = #tpu.core_type<tc>} {
    %c0 = arith.constant 0 : index
    %c0_0 = arith.constant 0 : index
    %0 = vector.load %arg0[%c0, %c0_0] : memref<128x128xbf16, #tpu.memory_space<vmem>>, vector<128x128xbf16>
    %c0_1 = arith.constant 0 : index
    %c0_2 = arith.constant 0 : index
    %1 = vector.load %arg1[%c0_1, %c0_2] : memref<128x512xbf16, #tpu.memory_space<vmem>>, vector<128x512xbf16>
    %cst = arith.constant dense<0.000000e+00> : vector<128x512xf32>
    %2 = tpu.matmul %0, %1, %cst {dimension_numbers = #tpu.dot_dimension_numbers<[1], [0], [0], [1], [0, 0, 1, 1], [], []>} : vector<128x128xbf16>, vector<128x512xbf16>, vector<128x512xf32> -> vector<128x512xf32>
    %c0_3 = arith.constant 0 : index
    %c0_4 = arith.constant 0 : index
    %3 = vector.load %arg3[%c0_3, %c0_4] : memref<1x512xf32, #tpu.memory_space<vmem>>, vector<1x512xf32>
    %4 = vector.broadcast %3 : vector<1x512xf32> to vector<128x512xf32>
    %5 = arith.addf %2, %4 : vector<128x512xf32>
    %6 = arith.truncf %5 : vector<128x512xf32> to vector<128x512xbf16>
    %c0_5 = arith.constant 0 : index
    %c0_6 = arith.constant 0 : index
    %7 = vector.load %arg10[%c0_5, %c0_6] : memref<128x512xbf16, #tpu.memory_space<vmem>>, vector<128x512xbf16>
    tpu.vector_store %arg10[%c0_5, %c0_6], %6 {strides = array<i32>} : memref<128x512xbf16, #tpu.memory_space<vmem>>, vector<128x512xbf16>,
    %cst_7 = arith.constant 0.000000e+00 : f32
    %8 = vector.broadcast %cst_7 : f32 to vector<16x128xf32>
    %cst_8 = arith.constant 0.000000e+00 : f32
    %9 = vector.broadcast %cst_8 : f32 to vector<16x128xf32>
    %c0_i32 = arith.constant 0 : i32
    %c16_i32 = arith.constant 16 : i32
    %10 = arith.muli %c0_i32, %c16_i32 : i32
    %11 = tpu.assume_multiple %10, 16 : i32
    %12 = arith.index_cast %11 : i32 to index
    %c0_9 = arith.constant 0 : index
    %13 = vector.load %arg10[%12, %c0_9] : memref<128x512xbf16, #tpu.memory_space<vmem>>, vector<16x512xbf16>
    %14 = arith.extf %13 : vector<16x512xbf16> to vector<16x512xf32>
    %15 = arith.truncf %8 : vector<16x128xf32> to vector<16x128xbf16>
    %c0_10 = arith.constant 0 : index
    %c0_11 = arith.constant 0 : index
    %16 = vector.load %arg2[%c0_10, %c0_11] : memref<128x512xbf16, #tpu.memory_space<vmem>>, vector<128x512xbf16>
    %cst_12 = arith.constant dense<0.000000e+00> : vector<16x512xf32>
    %17 = tpu.matmul %15, %16, %cst_12 {dimension_numbers = #tpu.dot_dimension_numbers<[1], [0], [0], [1], [0, 0, 1, 1], [], []>} : vector<16x128xbf16>, vector<128x512xbf16>, vector<16x512xf32> -> vector<16x512xf32>
    %18 = arith.addf %14, %17 : vector<16x512xf32>
    %19 = vector.extract_strided_slice %18 {offsets = [0, 0], sizes = [16, 128], strides = [1, 1]} : vector<16x512xf32> to vector<16x128xf32>
    %20 = arith.negf %19 : vector<16x128xf32>
    %21 = math.exp %20 : vector<16x128xf32>
    %cst_13 = arith.constant 1.000000e+00 : f32
    %22 = vector.broadcast %cst_13 : f32 to vector<16x128xf32>
    %23 = arith.addf %22, %21 : vector<16x128xf32>
    %24 = arith.divf %22, %23 : vector<16x128xf32>
    %25 = vector.extract_strided_slice %18 {offsets = [0, 128], sizes = [16, 128], strides = [1, 1]} : vector<16x512xf32> to vector<16x128xf32>
    %26 = arith.negf %25 : vector<16x128xf32>
    %27 = math.exp %26 : vector<16x128xf32>
    %cst_14 = arith.constant 1.000000e+00 : f32
    %28 = vector.broadcast %cst_14 : f32 to vector<16x128xf32>
    %29 = arith.addf %28, %27 : vector<16x128xf32>
    %30 = arith.divf %28, %29 : vector<16x128xf32>
    %31 = vector.extract_strided_slice %18 {offsets = [0, 256], sizes = [16, 128], strides = [1, 1]} : vector<16x512xf32> to vector<16x128xf32>
    %32 = math.tanh %31 : vector<16x128xf32>
    %33 = vector.extract_strided_slice %18 {offsets = [0, 384], sizes = [16, 128], strides = [1, 1]} : vector<16x512xf32> to vector<16x128xf32>
    %34 = arith.negf %33 : vector<16x128xf32>
    %35 = math.exp %34 : vector<16x128xf32>
    %cst_15 = arith.constant 1.000000e+00 : f32
    %36 = vector.broadcast %cst_15 : f32 to vector<16x128xf32>
    %37 = arith.addf %36, %35 : vector<16x128xf32>
    %38 = arith.divf %36, %37 : vector<16x128xf32>
    %39 = arith.mulf %30, %9 : vector<16x128xf32>
    %40 = arith.mulf %24, %32 : vector<16x128xf32>
    %41 = arith.addf %39, %40 : vector<16x128xf32>
    %42 = math.tanh %41 : vector<16x128xf32>
    %43 = arith.mulf %38, %42 : vector<16x128xf32>
    %44 = arith.truncf %43 : vector<16x128xf32> to vector<16x128xbf16>
    %45 = arith.index_cast %11 : i32 to index
    %c0_16 = arith.constant 0 : index
    %46 = vector.load %arg8[%45, %c0_16] : memref<128x128xbf16, #tpu.memory_space<vmem>>, vector<16x128xbf16>
    tpu.vector_store %arg8[%45, %c0_16], %44 {strides = array<i32>} : memref<128x128xbf16, #tpu.memory_space<vmem>>, vector<16x128xbf16>,
    %c1_i32 = arith.constant 1 : i32
    %c16_i32_17 = arith.constant 16 : i32
    %47 = arith.muli %c1_i32, %c16_i32_17 : i32
    %48 = tpu.assume_multiple %47, 16 : i32
    %49 = arith.index_cast %48 : i32 to index
    %c0_18 = arith.constant 0 : index
    %50 = vector.load %arg10[%49, %c0_18] : memref<128x512xbf16, #tpu.memory_space<vmem>>, vector<16x512xbf16>
    %51 = arith.extf %50 : vector<16x512xbf16> to vector<16x512xf32>
    %52 = arith.truncf %43 : vector<16x128xf32> to vector<16x128xbf16>
    %c0_19 = arith.constant 0 : index
    %c0_20 = arith.constant 0 : index
    %53 = vector.load %arg2[%c0_19, %c0_20] : memref<128x512xbf16, #tpu.memory_space<vmem>>, vector<128x512xbf16>
    %cst_21 = arith.constant dense<0.000000e+00> : vector<16x512xf32>
    %54 = tpu.matmul %52, %53, %cst_21 {dimension_numbers = #tpu.dot_dimension_numbers<[1], [0], [0], [1], [0, 0, 1, 1], [], []>} : vector<16x128xbf16>, vector<128x512xbf16>, vector<16x512xf32> -> vector<16x512xf32>
    %55 = arith.addf %51, %54 : vector<16x512xf32>
    %56 = vector.extract_strided_slice %55 {offsets = [0, 0], sizes = [16, 128], strides = [1, 1]} : vector<16x512xf32> to vector<16x128xf32>
    %57 = arith.negf %56 : vector<16x128xf32>
    %58 = math.exp %57 : vector<16x128xf32>
    %cst_22 = arith.constant 1.000000e+00 : f32
    %59 = vector.broadcast %cst_22 : f32 to vector<16x128xf32>
    %60 = arith.addf %59, %58 : vector<16x128xf32>
    %61 = arith.divf %59, %60 : vector<16x128xf32>
    %62 = vector.extract_strided_slice %55 {offsets = [0, 128], sizes = [16, 128], strides = [1, 1]} : vector<16x512xf32> to vector<16x128xf32>
    %63 = arith.negf %62 : vector<16x128xf32>
    %64 = math.exp %63 : vector<16x128xf32>
    %cst_23 = arith.constant 1.000000e+00 : f32
    %65 = vector.broadcast %cst_23 : f32 to vector<16x128xf32>
    %66 = arith.addf %65, %64 : vector<16x128xf32>
    %67 = arith.divf %65, %66 : vector<16x128xf32>
    %68 = vector.extract_strided_slice %55 {offsets = [0, 256], sizes = [16, 128], strides = [1, 1]} : vector<16x512xf32> to vector<16x128xf32>
    %69 = math.tanh %68 : vector<16x128xf32>
    %70 = vector.extract_strided_slice %55 {offsets = [0, 384], sizes = [16, 128], strides = [1, 1]} : vector<16x512xf32> to vector<16x128xf32>
    %71 = arith.negf %70 : vector<16x128xf32>
    %72 = math.exp %71 : vector<16x128xf32>
    %cst_24 = arith.constant 1.000000e+00 : f32
    %73 = vector.broadcast %cst_24 : f32 to vector<16x128xf32>
    %74 = arith.addf %73, %72 : vector<16x128xf32>
    %75 = arith.divf %73, %74 : vector<16x128xf32>
    %76 = arith.mulf %67, %41 : vector<16x128xf32>
    %77 = arith.mulf %61, %69 : vector<16x128xf32>
    %78 = arith.addf %76, %77 : vector<16x128xf32>
    %79 = math.tanh %78 : vector<16x128xf32>
    %80 = arith.mulf %75, %79 : vector<16x128xf32>
    %81 = arith.truncf %80 : vector<16x128xf32> to vector<16x128xbf16>
    %82 = arith.index_cast %48 : i32 to index
    %c0_25 = arith.constant 0 : index
    %83 = vector.load %arg8[%82, %c0_25] : memref<128x128xbf16, #tpu.memory_space<vmem>>, vector<16x128xbf16>
    tpu.vector_store %arg8[%82, %c0_25], %81 {strides = array<i32>} : memref<128x128xbf16, #tpu.memory_space<vmem>>, vector<16x128xbf16>,
    %c2_i32 = arith.constant 2 : i32
    %c16_i32_26 = arith.constant 16 : i32
    %84 = arith.muli %c2_i32, %c16_i32_26 : i32
    %85 = tpu.assume_multiple %84, 16 : i32
    %86 = arith.index_cast %85 : i32 to index
    %c0_27 = arith.constant 0 : index
    %87 = vector.load %arg10[%86, %c0_27] : memref<128x512xbf16, #tpu.memory_space<vmem>>, vector<16x512xbf16>
    %88 = arith.extf %87 : vector<16x512xbf16> to vector<16x512xf32>
    %89 = arith.truncf %80 : vector<16x128xf32> to vector<16x128xbf16>
    %c0_28 = arith.constant 0 : index
    %c0_29 = arith.constant 0 : index
    %90 = vector.load %arg2[%c0_28, %c0_29] : memref<128x512xbf16, #tpu.memory_space<vmem>>, vector<128x512xbf16>
    %cst_30 = arith.constant dense<0.000000e+00> : vector<16x512xf32>
    %91 = tpu.matmul %89, %90, %cst_30 {dimension_numbers = #tpu.dot_dimension_numbers<[1], [0], [0], [1], [0, 0, 1, 1], [], []>} : vector<16x128xbf16>, vector<128x512xbf16>, vector<16x512xf32> -> vector<16x512xf32>
    %92 = arith.addf %88, %91 : vector<16x512xf32>
    %93 = vector.extract_strided_slice %92 {offsets = [0, 0], sizes = [16, 128], strides = [1, 1]} : vector<16x512xf32> to vector<16x128xf32>
    %94 = arith.negf %93 : vector<16x128xf32>
    %95 = math.exp %94 : vector<16x128xf32>
    %cst_31 = arith.constant 1.000000e+00 : f32
    %96 = vector.broadcast %cst_31 : f32 to vector<16x128xf32>
    %97 = arith.addf %96, %95 : vector<16x128xf32>
    %98 = arith.divf %96, %97 : vector<16x128xf32>
    %99 = vector.extract_strided_slice %92 {offsets = [0, 128], sizes = [16, 128], strides = [1, 1]} : vector<16x512xf32> to vector<16x128xf32>
    %100 = arith.negf %99 : vector<16x128xf32>
    %101 = math.exp %100 : vector<16x128xf32>
    %cst_32 = arith.constant 1.000000e+00 : f32
    %102 = vector.broadcast %cst_32 : f32 to vector<16x128xf32>
    %103 = arith.addf %102, %101 : vector<16x128xf32>
    %104 = arith.divf %102, %103 : vector<16x128xf32>
    %105 = vector.extract_strided_slice %92 {offsets = [0, 256], sizes = [16, 128], strides = [1, 1]} : vector<16x512xf32> to vector<16x128xf32>
    %106 = math.tanh %105 : vector<16x128xf32>
    %107 = vector.extract_strided_slice %92 {offsets = [0, 384], sizes = [16, 128], strides = [1, 1]} : vector<16x512xf32> to vector<16x128xf32>
    %108 = arith.negf %107 : vector<16x128xf32>
    %109 = math.exp %108 : vector<16x128xf32>
    %cst_33 = arith.constant 1.000000e+00 : f32
    %110 = vector.broadcast %cst_33 : f32 to vector<16x128xf32>
    %111 = arith.addf %110, %109 : vector<16x128xf32>
    %112 = arith.divf %110, %111 : vector<16x128xf32>
    %113 = arith.mulf %104, %78 : vector<16x128xf32>
    %114 = arith.mulf %98, %106 : vector<16x128xf32>
    %115 = arith.addf %113, %114 : vector<16x128xf32>
    %116 = math.tanh %115 : vector<16x128xf32>
    %117 = arith.mulf %112, %116 : vector<16x128xf32>
    %118 = arith.truncf %117 : vector<16x128xf32> to vector<16x128xbf16>
    %119 = arith.index_cast %85 : i32 to index
    %c0_34 = arith.constant 0 : index
    %120 = vector.load %arg8[%119, %c0_34] : memref<128x128xbf16, #tpu.memory_space<vmem>>, vector<16x128xbf16>
    tpu.vector_store %arg8[%119, %c0_34], %118 {strides = array<i32>} : memref<128x128xbf16, #tpu.memory_space<vmem>>, vector<16x128xbf16>,
    %c3_i32 = arith.constant 3 : i32
    %c16_i32_35 = arith.constant 16 : i32
    %121 = arith.muli %c3_i32, %c16_i32_35 : i32
    %122 = tpu.assume_multiple %121, 16 : i32
    %123 = arith.index_cast %122 : i32 to index
    %c0_36 = arith.constant 0 : index
    %124 = vector.load %arg10[%123, %c0_36] : memref<128x512xbf16, #tpu.memory_space<vmem>>, vector<16x512xbf16>
    %125 = arith.extf %124 : vector<16x512xbf16> to vector<16x512xf32>
    %126 = arith.truncf %117 : vector<16x128xf32> to vector<16x128xbf16>
    %c0_37 = arith.constant 0 : index
    %c0_38 = arith.constant 0 : index
    %127 = vector.load %arg2[%c0_37, %c0_38] : memref<128x512xbf16, #tpu.memory_space<vmem>>, vector<128x512xbf16>
    %cst_39 = arith.constant dense<0.000000e+00> : vector<16x512xf32>
    %128 = tpu.matmul %126, %127, %cst_39 {dimension_numbers = #tpu.dot_dimension_numbers<[1], [0], [0], [1], [0, 0, 1, 1], [], []>} : vector<16x128xbf16>, vector<128x512xbf16>, vector<16x512xf32> -> vector<16x512xf32>
    %129 = arith.addf %125, %128 : vector<16x512xf32>
    %130 = vector.extract_strided_slice %129 {offsets = [0, 0], sizes = [16, 128], strides = [1, 1]} : vector<16x512xf32> to vector<16x128xf32>
    %131 = arith.negf %130 : vector<16x128xf32>
    %132 = math.exp %131 : vector<16x128xf32>
    %cst_40 = arith.constant 1.000000e+00 : f32
    %133 = vector.broadcast %cst_40 : f32 to vector<16x128xf32>
    %134 = arith.addf %133, %132 : vector<16x128xf32>
    %135 = arith.divf %133, %134 : vector<16x128xf32>
    %136 = vector.extract_strided_slice %129 {offsets = [0, 128], sizes = [16, 128], strides = [1, 1]} : vector<16x512xf32> to vector<16x128xf32>
    %137 = arith.negf %136 : vector<16x128xf32>
    %138 = math.exp %137 : vector<16x128xf32>
    %cst_41 = arith.constant 1.000000e+00 : f32
    %139 = vector.broadcast %cst_41 : f32 to vector<16x128xf32>
    %140 = arith.addf %139, %138 : vector<16x128xf32>
    %141 = arith.divf %139, %140 : vector<16x128xf32>
    %142 = vector.extract_strided_slice %129 {offsets = [0, 256], sizes = [16, 128], strides = [1, 1]} : vector<16x512xf32> to vector<16x128xf32>
    %143 = math.tanh %142 : vector<16x128xf32>
    %144 = vector.extract_strided_slice %129 {offsets = [0, 384], sizes = [16, 128], strides = [1, 1]} : vector<16x512xf32> to vector<16x128xf32>
    %145 = arith.negf %144 : vector<16x128xf32>
    %146 = math.exp %145 : vector<16x128xf32>
    %cst_42 = arith.constant 1.000000e+00 : f32
    %147 = vector.broadcast %cst_42 : f32 to vector<16x128xf32>
    %148 = arith.addf %147, %146 : vector<16x128xf32>
    %149 = arith.divf %147, %148 : vector<16x128xf32>
    %150 = arith.mulf %141, %115 : vector<16x128xf32>
    %151 = arith.mulf %135, %143 : vector<16x128xf32>
    %152 = arith.addf %150, %151 : vector<16x128xf32>
    %153 = math.tanh %152 : vector<16x128xf32>
    %154 = arith.mulf %149, %153 : vector<16x128xf32>
    %155 = arith.truncf %154 : vector<16x128xf32> to vector<16x128xbf16>
    %156 = arith.index_cast %122 : i32 to index
    %c0_43 = arith.constant 0 : index
    %157 = vector.load %arg8[%156, %c0_43] : memref<128x128xbf16, #tpu.memory_space<vmem>>, vector<16x128xbf16>
    tpu.vector_store %arg8[%156, %c0_43], %155 {strides = array<i32>} : memref<128x128xbf16, #tpu.memory_space<vmem>>, vector<16x128xbf16>,
    %c4_i32 = arith.constant 4 : i32
    %c16_i32_44 = arith.constant 16 : i32
    %158 = arith.muli %c4_i32, %c16_i32_44 : i32
    %159 = tpu.assume_multiple %158, 16 : i32
    %160 = arith.index_cast %159 : i32 to index
    %c0_45 = arith.constant 0 : index
    %161 = vector.load %arg10[%160, %c0_45] : memref<128x512xbf16, #tpu.memory_space<vmem>>, vector<16x512xbf16>
    %162 = arith.extf %161 : vector<16x512xbf16> to vector<16x512xf32>
    %163 = arith.truncf %154 : vector<16x128xf32> to vector<16x128xbf16>
    %c0_46 = arith.constant 0 : index
    %c0_47 = arith.constant 0 : index
    %164 = vector.load %arg2[%c0_46, %c0_47] : memref<128x512xbf16, #tpu.memory_space<vmem>>, vector<128x512xbf16>
    %cst_48 = arith.constant dense<0.000000e+00> : vector<16x512xf32>
    %165 = tpu.matmul %163, %164, %cst_48 {dimension_numbers = #tpu.dot_dimension_numbers<[1], [0], [0], [1], [0, 0, 1, 1], [], []>} : vector<16x128xbf16>, vector<128x512xbf16>, vector<16x512xf32> -> vector<16x512xf32>
    %166 = arith.addf %162, %165 : vector<16x512xf32>
    %167 = vector.extract_strided_slice %166 {offsets = [0, 0], sizes = [16, 128], strides = [1, 1]} : vector<16x512xf32> to vector<16x128xf32>
    %168 = arith.negf %167 : vector<16x128xf32>
    %169 = math.exp %168 : vector<16x128xf32>
    %cst_49 = arith.constant 1.000000e+00 : f32
    %170 = vector.broadcast %cst_49 : f32 to vector<16x128xf32>
    %171 = arith.addf %170, %169 : vector<16x128xf32>
    %172 = arith.divf %170, %171 : vector<16x128xf32>
    %173 = vector.extract_strided_slice %166 {offsets = [0, 128], sizes = [16, 128], strides = [1, 1]} : vector<16x512xf32> to vector<16x128xf32>
    %174 = arith.negf %173 : vector<16x128xf32>
    %175 = math.exp %174 : vector<16x128xf32>
    %cst_50 = arith.constant 1.000000e+00 : f32
    %176 = vector.broadcast %cst_50 : f32 to vector<16x128xf32>
    %177 = arith.addf %176, %175 : vector<16x128xf32>
    %178 = arith.divf %176, %177 : vector<16x128xf32>
    %179 = vector.extract_strided_slice %166 {offsets = [0, 256], sizes = [16, 128], strides = [1, 1]} : vector<16x512xf32> to vector<16x128xf32>
    %180 = math.tanh %179 : vector<16x128xf32>
    %181 = vector.extract_strided_slice %166 {offsets = [0, 384], sizes = [16, 128], strides = [1, 1]} : vector<16x512xf32> to vector<16x128xf32>
    %182 = arith.negf %181 : vector<16x128xf32>
    %183 = math.exp %182 : vector<16x128xf32>
    %cst_51 = arith.constant 1.000000e+00 : f32
    %184 = vector.broadcast %cst_51 : f32 to vector<16x128xf32>
    %185 = arith.addf %184, %183 : vector<16x128xf32>
    %186 = arith.divf %184, %185 : vector<16x128xf32>
    %187 = arith.mulf %178, %152 : vector<16x128xf32>
    %188 = arith.mulf %172, %180 : vector<16x128xf32>
    %189 = arith.addf %187, %188 : vector<16x128xf32>
    %190 = math.tanh %189 : vector<16x128xf32>
    %191 = arith.mulf %186, %190 : vector<16x128xf32>
    %192 = arith.truncf %191 : vector<16x128xf32> to vector<16x128xbf16>
    %193 = arith.index_cast %159 : i32 to index
    %c0_52 = arith.constant 0 : index
    %194 = vector.load %arg8[%193, %c0_52] : memref<128x128xbf16, #tpu.memory_space<vmem>>, vector<16x128xbf16>
    tpu.vector_store %arg8[%193, %c0_52], %192 {strides = array<i32>} : memref<128x128xbf16, #tpu.memory_space<vmem>>, vector<16x128xbf16>,
    %c5_i32 = arith.constant 5 : i32
    %c16_i32_53 = arith.constant 16 : i32
    %195 = arith.muli %c5_i32, %c16_i32_53 : i32
    %196 = tpu.assume_multiple %195, 16 : i32
    %197 = arith.index_cast %196 : i32 to index
    %c0_54 = arith.constant 0 : index
    %198 = vector.load %arg10[%197, %c0_54] : memref<128x512xbf16, #tpu.memory_space<vmem>>, vector<16x512xbf16>
    %199 = arith.extf %198 : vector<16x512xbf16> to vector<16x512xf32>
    %200 = arith.truncf %191 : vector<16x128xf32> to vector<16x128xbf16>
    %c0_55 = arith.constant 0 : index
    %c0_56 = arith.constant 0 : index
    %201 = vector.load %arg2[%c0_55, %c0_56] : memref<128x512xbf16, #tpu.memory_space<vmem>>, vector<128x512xbf16>
    %cst_57 = arith.constant dense<0.000000e+00> : vector<16x512xf32>
    %202 = tpu.matmul %200, %201, %cst_57 {dimension_numbers = #tpu.dot_dimension_numbers<[1], [0], [0], [1], [0, 0, 1, 1], [], []>} : vector<16x128xbf16>, vector<128x512xbf16>, vector<16x512xf32> -> vector<16x512xf32>
    %203 = arith.addf %199, %202 : vector<16x512xf32>
    %204 = vector.extract_strided_slice %203 {offsets = [0, 0], sizes = [16, 128], strides = [1, 1]} : vector<16x512xf32> to vector<16x128xf32>
    %205 = arith.negf %204 : vector<16x128xf32>
    %206 = math.exp %205 : vector<16x128xf32>
    %cst_58 = arith.constant 1.000000e+00 : f32
    %207 = vector.broadcast %cst_58 : f32 to vector<16x128xf32>
    %208 = arith.addf %207, %206 : vector<16x128xf32>
    %209 = arith.divf %207, %208 : vector<16x128xf32>
    %210 = vector.extract_strided_slice %203 {offsets = [0, 128], sizes = [16, 128], strides = [1, 1]} : vector<16x512xf32> to vector<16x128xf32>
    %211 = arith.negf %210 : vector<16x128xf32>
    %212 = math.exp %211 : vector<16x128xf32>
    %cst_59 = arith.constant 1.000000e+00 : f32
    %213 = vector.broadcast %cst_59 : f32 to vector<16x128xf32>
    %214 = arith.addf %213, %212 : vector<16x128xf32>
    %215 = arith.divf %213, %214 : vector<16x128xf32>
    %216 = vector.extract_strided_slice %203 {offsets = [0, 256], sizes = [16, 128], strides = [1, 1]} : vector<16x512xf32> to vector<16x128xf32>
    %217 = math.tanh %216 : vector<16x128xf32>
    %218 = vector.extract_strided_slice %203 {offsets = [0, 384], sizes = [16, 128], strides = [1, 1]} : vector<16x512xf32> to vector<16x128xf32>
    %219 = arith.negf %218 : vector<16x128xf32>
    %220 = math.exp %219 : vector<16x128xf32>
    %cst_60 = arith.constant 1.000000e+00 : f32
    %221 = vector.broadcast %cst_60 : f32 to vector<16x128xf32>
    %222 = arith.addf %221, %220 : vector<16x128xf32>
    %223 = arith.divf %221, %222 : vector<16x128xf32>
    %224 = arith.mulf %215, %189 : vector<16x128xf32>
    %225 = arith.mulf %209, %217 : vector<16x128xf32>
    %226 = arith.addf %224, %225 : vector<16x128xf32>
    %227 = math.tanh %226 : vector<16x128xf32>
    %228 = arith.mulf %223, %227 : vector<16x128xf32>
    %229 = arith.truncf %228 : vector<16x128xf32> to vector<16x128xbf16>
    %230 = arith.index_cast %196 : i32 to index
    %c0_61 = arith.constant 0 : index
    %231 = vector.load %arg8[%230, %c0_61] : memref<128x128xbf16, #tpu.memory_space<vmem>>, vector<16x128xbf16>
    tpu.vector_store %arg8[%230, %c0_61], %229 {strides = array<i32>} : memref<128x128xbf16, #tpu.memory_space<vmem>>, vector<16x128xbf16>,
    %c6_i32 = arith.constant 6 : i32
    %c16_i32_62 = arith.constant 16 : i32
    %232 = arith.muli %c6_i32, %c16_i32_62 : i32
    %233 = tpu.assume_multiple %232, 16 : i32
    %234 = arith.index_cast %233 : i32 to index
    %c0_63 = arith.constant 0 : index
    %235 = vector.load %arg10[%234, %c0_63] : memref<128x512xbf16, #tpu.memory_space<vmem>>, vector<16x512xbf16>
    %236 = arith.extf %235 : vector<16x512xbf16> to vector<16x512xf32>
    %237 = arith.truncf %228 : vector<16x128xf32> to vector<16x128xbf16>
    %c0_64 = arith.constant 0 : index
    %c0_65 = arith.constant 0 : index
    %238 = vector.load %arg2[%c0_64, %c0_65] : memref<128x512xbf16, #tpu.memory_space<vmem>>, vector<128x512xbf16>
    %cst_66 = arith.constant dense<0.000000e+00> : vector<16x512xf32>
    %239 = tpu.matmul %237, %238, %cst_66 {dimension_numbers = #tpu.dot_dimension_numbers<[1], [0], [0], [1], [0, 0, 1, 1], [], []>} : vector<16x128xbf16>, vector<128x512xbf16>, vector<16x512xf32> -> vector<16x512xf32>
    %240 = arith.addf %236, %239 : vector<16x512xf32>
    %241 = vector.extract_strided_slice %240 {offsets = [0, 0], sizes = [16, 128], strides = [1, 1]} : vector<16x512xf32> to vector<16x128xf32>
    %242 = arith.negf %241 : vector<16x128xf32>
    %243 = math.exp %242 : vector<16x128xf32>
    %cst_67 = arith.constant 1.000000e+00 : f32
    %244 = vector.broadcast %cst_67 : f32 to vector<16x128xf32>
    %245 = arith.addf %244, %243 : vector<16x128xf32>
    %246 = arith.divf %244, %245 : vector<16x128xf32>
    %247 = vector.extract_strided_slice %240 {offsets = [0, 128], sizes = [16, 128], strides = [1, 1]} : vector<16x512xf32> to vector<16x128xf32>
    %248 = arith.negf %247 : vector<16x128xf32>
    %249 = math.exp %248 : vector<16x128xf32>
    %cst_68 = arith.constant 1.000000e+00 : f32
    %250 = vector.broadcast %cst_68 : f32 to vector<16x128xf32>
    %251 = arith.addf %250, %249 : vector<16x128xf32>
    %252 = arith.divf %250, %251 : vector<16x128xf32>
    %253 = vector.extract_strided_slice %240 {offsets = [0, 256], sizes = [16, 128], strides = [1, 1]} : vector<16x512xf32> to vector<16x128xf32>
    %254 = math.tanh %253 : vector<16x128xf32>
    %255 = vector.extract_strided_slice %240 {offsets = [0, 384], sizes = [16, 128], strides = [1, 1]} : vector<16x512xf32> to vector<16x128xf32>
    %256 = arith.negf %255 : vector<16x128xf32>
    %257 = math.exp %256 : vector<16x128xf32>
    %cst_69 = arith.constant 1.000000e+00 : f32
    %258 = vector.broadcast %cst_69 : f32 to vector<16x128xf32>
    %259 = arith.addf %258, %257 : vector<16x128xf32>
    %260 = arith.divf %258, %259 : vector<16x128xf32>
    %261 = arith.mulf %252, %226 : vector<16x128xf32>
    %262 = arith.mulf %246, %254 : vector<16x128xf32>
    %263 = arith.addf %261, %262 : vector<16x128xf32>
    %264 = math.tanh %263 : vector<16x128xf32>
    %265 = arith.mulf %260, %264 : vector<16x128xf32>
    %266 = arith.truncf %265 : vector<16x128xf32> to vector<16x128xbf16>
    %267 = arith.index_cast %233 : i32 to index
    %c0_70 = arith.constant 0 : index
    %268 = vector.load %arg8[%267, %c0_70] : memref<128x128xbf16, #tpu.memory_space<vmem>>, vector<16x128xbf16>
    tpu.vector_store %arg8[%267, %c0_70], %266 {strides = array<i32>} : memref<128x128xbf16, #tpu.memory_space<vmem>>, vector<16x128xbf16>,
    %c7_i32 = arith.constant 7 : i32
    %c16_i32_71 = arith.constant 16 : i32
    %269 = arith.muli %c7_i32, %c16_i32_71 : i32
    %270 = tpu.assume_multiple %269, 16 : i32
    %271 = arith.index_cast %270 : i32 to index
    %c0_72 = arith.constant 0 : index
    %272 = vector.load %arg10[%271, %c0_72] : memref<128x512xbf16, #tpu.memory_space<vmem>>, vector<16x512xbf16>
    %273 = arith.extf %272 : vector<16x512xbf16> to vector<16x512xf32>
    %274 = arith.truncf %265 : vector<16x128xf32> to vector<16x128xbf16>
    %c0_73 = arith.constant 0 : index
    %c0_74 = arith.constant 0 : index
    %275 = vector.load %arg2[%c0_73, %c0_74] : memref<128x512xbf16, #tpu.memory_space<vmem>>, vector<128x512xbf16>
    %cst_75 = arith.constant dense<0.000000e+00> : vector<16x512xf32>
    %276 = tpu.matmul %274, %275, %cst_75 {dimension_numbers = #tpu.dot_dimension_numbers<[1], [0], [0], [1], [0, 0, 1, 1], [], []>} : vector<16x128xbf16>, vector<128x512xbf16>, vector<16x512xf32> -> vector<16x512xf32>
    %277 = arith.addf %273, %276 : vector<16x512xf32>
    %278 = vector.extract_strided_slice %277 {offsets = [0, 0], sizes = [16, 128], strides = [1, 1]} : vector<16x512xf32> to vector<16x128xf32>
    %279 = arith.negf %278 : vector<16x128xf32>
    %280 = math.exp %279 : vector<16x128xf32>
    %cst_76 = arith.constant 1.000000e+00 : f32
    %281 = vector.broadcast %cst_76 : f32 to vector<16x128xf32>
    %282 = arith.addf %281, %280 : vector<16x128xf32>
    %283 = arith.divf %281, %282 : vector<16x128xf32>
    %284 = vector.extract_strided_slice %277 {offsets = [0, 128], sizes = [16, 128], strides = [1, 1]} : vector<16x512xf32> to vector<16x128xf32>
    %285 = arith.negf %284 : vector<16x128xf32>
    %286 = math.exp %285 : vector<16x128xf32>
    %cst_77 = arith.constant 1.000000e+00 : f32
    %287 = vector.broadcast %cst_77 : f32 to vector<16x128xf32>
    %288 = arith.addf %287, %286 : vector<16x128xf32>
    %289 = arith.divf %287, %288 : vector<16x128xf32>
    %290 = vector.extract_strided_slice %277 {offsets = [0, 256], sizes = [16, 128], strides = [1, 1]} : vector<16x512xf32> to vector<16x128xf32>
    %291 = math.tanh %290 : vector<16x128xf32>
    %292 = vector.extract_strided_slice %277 {offsets = [0, 384], sizes = [16, 128], strides = [1, 1]} : vector<16x512xf32> to vector<16x128xf32>
    %293 = arith.negf %292 : vector<16x128xf32>
    %294 = math.exp %293 : vector<16x128xf32>
    %cst_78 = arith.constant 1.000000e+00 : f32
    %295 = vector.broadcast %cst_78 : f32 to vector<16x128xf32>
    %296 = arith.addf %295, %294 : vector<16x128xf32>
    %297 = arith.divf %295, %296 : vector<16x128xf32>
    %298 = arith.mulf %289, %263 : vector<16x128xf32>
    %299 = arith.mulf %283, %291 : vector<16x128xf32>
    %300 = arith.addf %298, %299 : vector<16x128xf32>
    %301 = math.tanh %300 : vector<16x128xf32>
    %302 = arith.mulf %297, %301 : vector<16x128xf32>
    %303 = arith.truncf %302 : vector<16x128xf32> to vector<16x128xbf16>
    %304 = arith.index_cast %270 : i32 to index
    %c0_79 = arith.constant 0 : index
    %305 = vector.load %arg8[%304, %c0_79] : memref<128x128xbf16, #tpu.memory_space<vmem>>, vector<16x128xbf16>
    tpu.vector_store %arg8[%304, %c0_79], %303 {strides = array<i32>} : memref<128x128xbf16, #tpu.memory_space<vmem>>, vector<16x128xbf16>,
    %c8_i32 = arith.constant 8 : i32
    %c0_80 = arith.constant 0 : index
    %c0_81 = arith.constant 0 : index
    %306 = vector.load %arg8[%c0_80, %c0_81] : memref<128x128xbf16, #tpu.memory_space<vmem>>, vector<128x128xbf16>
    %c0_82 = arith.constant 0 : index
    %c0_83 = arith.constant 0 : index
    %307 = vector.load %arg4[%c0_82, %c0_83] : memref<128x512xbf16, #tpu.memory_space<vmem>>, vector<128x512xbf16>
    %cst_84 = arith.constant dense<0.000000e+00> : vector<128x512xf32>
    %308 = tpu.matmul %306, %307, %cst_84 {dimension_numbers = #tpu.dot_dimension_numbers<[1], [0], [0], [1], [0, 0, 1, 1], [], []>} : vector<128x128xbf16>, vector<128x512xbf16>, vector<128x512xf32> -> vector<128x512xf32>
    %c0_85 = arith.constant 0 : index
    %c0_86 = arith.constant 0 : index
    %309 = vector.load %arg6[%c0_85, %c0_86] : memref<1x512xf32, #tpu.memory_space<vmem>>, vector<1x512xf32>
    %310 = vector.broadcast %309 : vector<1x512xf32> to vector<128x512xf32>
    %311 = arith.addf %308, %310 : vector<128x512xf32>
    %312 = arith.truncf %311 : vector<128x512xf32> to vector<128x512xbf16>
    %c0_87 = arith.constant 0 : index
    %c0_88 = arith.constant 0 : index
    %313 = vector.load %arg10[%c0_87, %c0_88] : memref<128x512xbf16, #tpu.memory_space<vmem>>, vector<128x512xbf16>
    tpu.vector_store %arg10[%c0_87, %c0_88], %312 {strides = array<i32>} : memref<128x512xbf16, #tpu.memory_space<vmem>>, vector<128x512xbf16>,
    %cst_89 = arith.constant 0.000000e+00 : f32
    %314 = vector.broadcast %cst_89 : f32 to vector<16x128xf32>
    %cst_90 = arith.constant 0.000000e+00 : f32
    %315 = vector.broadcast %cst_90 : f32 to vector<16x128xf32>
    %c0_i32_91 = arith.constant 0 : i32
    %c16_i32_92 = arith.constant 16 : i32
    %316 = arith.muli %c0_i32_91, %c16_i32_92 : i32
    %317 = tpu.assume_multiple %316, 16 : i32
    %318 = arith.index_cast %317 : i32 to index
    %c0_93 = arith.constant 0 : index
    %319 = vector.load %arg10[%318, %c0_93] : memref<128x512xbf16, #tpu.memory_space<vmem>>, vector<16x512xbf16>
    %320 = arith.extf %319 : vector<16x512xbf16> to vector<16x512xf32>
    %321 = arith.truncf %314 : vector<16x128xf32> to vector<16x128xbf16>
    %c0_94 = arith.constant 0 : index
    %c0_95 = arith.constant 0 : index
    %322 = vector.load %arg5[%c0_94, %c0_95] : memref<128x512xbf16, #tpu.memory_space<vmem>>, vector<128x512xbf16>
    %cst_96 = arith.constant dense<0.000000e+00> : vector<16x512xf32>
    %323 = tpu.matmul %321, %322, %cst_96 {dimension_numbers = #tpu.dot_dimension_numbers<[1], [0], [0], [1], [0, 0, 1, 1], [], []>} : vector<16x128xbf16>, vector<128x512xbf16>, vector<16x512xf32> -> vector<16x512xf32>
    %324 = arith.addf %320, %323 : vector<16x512xf32>
    %325 = vector.extract_strided_slice %324 {offsets = [0, 0], sizes = [16, 128], strides = [1, 1]} : vector<16x512xf32> to vector<16x128xf32>
    %326 = arith.negf %325 : vector<16x128xf32>
    %327 = math.exp %326 : vector<16x128xf32>
    %cst_97 = arith.constant 1.000000e+00 : f32
    %328 = vector.broadcast %cst_97 : f32 to vector<16x128xf32>
    %329 = arith.addf %328, %327 : vector<16x128xf32>
    %330 = arith.divf %328, %329 : vector<16x128xf32>
    %331 = vector.extract_strided_slice %324 {offsets = [0, 128], sizes = [16, 128], strides = [1, 1]} : vector<16x512xf32> to vector<16x128xf32>
    %332 = arith.negf %331 : vector<16x128xf32>
    %333 = math.exp %332 : vector<16x128xf32>
    %cst_98 = arith.constant 1.000000e+00 : f32
    %334 = vector.broadcast %cst_98 : f32 to vector<16x128xf32>
    %335 = arith.addf %334, %333 : vector<16x128xf32>
    %336 = arith.divf %334, %335 : vector<16x128xf32>
    %337 = vector.extract_strided_slice %324 {offsets = [0, 256], sizes = [16, 128], strides = [1, 1]} : vector<16x512xf32> to vector<16x128xf32>
    %338 = math.tanh %337 : vector<16x128xf32>
    %339 = vector.extract_strided_slice %324 {offsets = [0, 384], sizes = [16, 128], strides = [1, 1]} : vector<16x512xf32> to vector<16x128xf32>
    %340 = arith.negf %339 : vector<16x128xf32>
    %341 = math.exp %340 : vector<16x128xf32>
    %cst_99 = arith.constant 1.000000e+00 : f32
    %342 = vector.broadcast %cst_99 : f32 to vector<16x128xf32>
    %343 = arith.addf %342, %341 : vector<16x128xf32>
    %344 = arith.divf %342, %343 : vector<16x128xf32>
    %345 = arith.mulf %336, %315 : vector<16x128xf32>
    %346 = arith.mulf %330, %338 : vector<16x128xf32>
    %347 = arith.addf %345, %346 : vector<16x128xf32>
    %348 = math.tanh %347 : vector<16x128xf32>
    %349 = arith.mulf %344, %348 : vector<16x128xf32>
    %c1_i32_100 = arith.constant 1 : i32
    %c16_i32_101 = arith.constant 16 : i32
    %350 = arith.muli %c1_i32_100, %c16_i32_101 : i32
    %351 = tpu.assume_multiple %350, 16 : i32
    %352 = arith.index_cast %351 : i32 to index
    %c0_102 = arith.constant 0 : index
    %353 = vector.load %arg10[%352, %c0_102] : memref<128x512xbf16, #tpu.memory_space<vmem>>, vector<16x512xbf16>
    %354 = arith.extf %353 : vector<16x512xbf16> to vector<16x512xf32>
    %355 = arith.truncf %349 : vector<16x128xf32> to vector<16x128xbf16>
    %c0_103 = arith.constant 0 : index
    %c0_104 = arith.constant 0 : index
    %356 = vector.load %arg5[%c0_103, %c0_104] : memref<128x512xbf16, #tpu.memory_space<vmem>>, vector<128x512xbf16>
    %cst_105 = arith.constant dense<0.000000e+00> : vector<16x512xf32>
    %357 = tpu.matmul %355, %356, %cst_105 {dimension_numbers = #tpu.dot_dimension_numbers<[1], [0], [0], [1], [0, 0, 1, 1], [], []>} : vector<16x128xbf16>, vector<128x512xbf16>, vector<16x512xf32> -> vector<16x512xf32>
    %358 = arith.addf %354, %357 : vector<16x512xf32>
    %359 = vector.extract_strided_slice %358 {offsets = [0, 0], sizes = [16, 128], strides = [1, 1]} : vector<16x512xf32> to vector<16x128xf32>
    %360 = arith.negf %359 : vector<16x128xf32>
    %361 = math.exp %360 : vector<16x128xf32>
    %cst_106 = arith.constant 1.000000e+00 : f32
    %362 = vector.broadcast %cst_106 : f32 to vector<16x128xf32>
    %363 = arith.addf %362, %361 : vector<16x128xf32>
    %364 = arith.divf %362, %363 : vector<16x128xf32>
    %365 = vector.extract_strided_slice %358 {offsets = [0, 128], sizes = [16, 128], strides = [1, 1]} : vector<16x512xf32> to vector<16x128xf32>
    %366 = arith.negf %365 : vector<16x128xf32>
    %367 = math.exp %366 : vector<16x128xf32>
    %cst_107 = arith.constant 1.000000e+00 : f32
    %368 = vector.broadcast %cst_107 : f32 to vector<16x128xf32>
    %369 = arith.addf %368, %367 : vector<16x128xf32>
    %370 = arith.divf %368, %369 : vector<16x128xf32>
    %371 = vector.extract_strided_slice %358 {offsets = [0, 256], sizes = [16, 128], strides = [1, 1]} : vector<16x512xf32> to vector<16x128xf32>
    %372 = math.tanh %371 : vector<16x128xf32>
    %373 = vector.extract_strided_slice %358 {offsets = [0, 384], sizes = [16, 128], strides = [1, 1]} : vector<16x512xf32> to vector<16x128xf32>
    %374 = arith.negf %373 : vector<16x128xf32>
    %375 = math.exp %374 : vector<16x128xf32>
    %cst_108 = arith.constant 1.000000e+00 : f32
    %376 = vector.broadcast %cst_108 : f32 to vector<16x128xf32>
    %377 = arith.addf %376, %375 : vector<16x128xf32>
    %378 = arith.divf %376, %377 : vector<16x128xf32>
    %379 = arith.mulf %370, %347 : vector<16x128xf32>
    %380 = arith.mulf %364, %372 : vector<16x128xf32>
    %381 = arith.addf %379, %380 : vector<16x128xf32>
    %382 = math.tanh %381 : vector<16x128xf32>
    %383 = arith.mulf %378, %382 : vector<16x128xf32>
    %c2_i32_109 = arith.constant 2 : i32
    %c16_i32_110 = arith.constant 16 : i32
    %384 = arith.muli %c2_i32_109, %c16_i32_110 : i32
    %385 = tpu.assume_multiple %384, 16 : i32
    %386 = arith.index_cast %385 : i32 to index
    %c0_111 = arith.constant 0 : index
    %387 = vector.load %arg10[%386, %c0_111] : memref<128x512xbf16, #tpu.memory_space<vmem>>, vector<16x512xbf16>
    %388 = arith.extf %387 : vector<16x512xbf16> to vector<16x512xf32>
    %389 = arith.truncf %383 : vector<16x128xf32> to vector<16x128xbf16>
    %c0_112 = arith.constant 0 : index
    %c0_113 = arith.constant 0 : index
    %390 = vector.load %arg5[%c0_112, %c0_113] : memref<128x512xbf16, #tpu.memory_space<vmem>>, vector<128x512xbf16>
    %cst_114 = arith.constant dense<0.000000e+00> : vector<16x512xf32>
    %391 = tpu.matmul %389, %390, %cst_114 {dimension_numbers = #tpu.dot_dimension_numbers<[1], [0], [0], [1], [0, 0, 1, 1], [], []>} : vector<16x128xbf16>, vector<128x512xbf16>, vector<16x512xf32> -> vector<16x512xf32>
    %392 = arith.addf %388, %391 : vector<16x512xf32>
    %393 = vector.extract_strided_slice %392 {offsets = [0, 0], sizes = [16, 128], strides = [1, 1]} : vector<16x512xf32> to vector<16x128xf32>
    %394 = arith.negf %393 : vector<16x128xf32>
    %395 = math.exp %394 : vector<16x128xf32>
    %cst_115 = arith.constant 1.000000e+00 : f32
    %396 = vector.broadcast %cst_115 : f32 to vector<16x128xf32>
    %397 = arith.addf %396, %395 : vector<16x128xf32>
    %398 = arith.divf %396, %397 : vector<16x128xf32>
    %399 = vector.extract_strided_slice %392 {offsets = [0, 128], sizes = [16, 128], strides = [1, 1]} : vector<16x512xf32> to vector<16x128xf32>
    %400 = arith.negf %399 : vector<16x128xf32>
    %401 = math.exp %400 : vector<16x128xf32>
    %cst_116 = arith.constant 1.000000e+00 : f32
    %402 = vector.broadcast %cst_116 : f32 to vector<16x128xf32>
    %403 = arith.addf %402, %401 : vector<16x128xf32>
    %404 = arith.divf %402, %403 : vector<16x128xf32>
    %405 = vector.extract_strided_slice %392 {offsets = [0, 256], sizes = [16, 128], strides = [1, 1]} : vector<16x512xf32> to vector<16x128xf32>
    %406 = math.tanh %405 : vector<16x128xf32>
    %407 = vector.extract_strided_slice %392 {offsets = [0, 384], sizes = [16, 128], strides = [1, 1]} : vector<16x512xf32> to vector<16x128xf32>
    %408 = arith.negf %407 : vector<16x128xf32>
    %409 = math.exp %408 : vector<16x128xf32>
    %cst_117 = arith.constant 1.000000e+00 : f32
    %410 = vector.broadcast %cst_117 : f32 to vector<16x128xf32>
    %411 = arith.addf %410, %409 : vector<16x128xf32>
    %412 = arith.divf %410, %411 : vector<16x128xf32>
    %413 = arith.mulf %404, %381 : vector<16x128xf32>
    %414 = arith.mulf %398, %406 : vector<16x128xf32>
    %415 = arith.addf %413, %414 : vector<16x128xf32>
    %416 = math.tanh %415 : vector<16x128xf32>
    %417 = arith.mulf %412, %416 : vector<16x128xf32>
    %c3_i32_118 = arith.constant 3 : i32
    %c16_i32_119 = arith.constant 16 : i32
    %418 = arith.muli %c3_i32_118, %c16_i32_119 : i32
    %419 = tpu.assume_multiple %418, 16 : i32
    %420 = arith.index_cast %419 : i32 to index
    %c0_120 = arith.constant 0 : index
    %421 = vector.load %arg10[%420, %c0_120] : memref<128x512xbf16, #tpu.memory_space<vmem>>, vector<16x512xbf16>
    %422 = arith.extf %421 : vector<16x512xbf16> to vector<16x512xf32>
    %423 = arith.truncf %417 : vector<16x128xf32> to vector<16x128xbf16>
    %c0_121 = arith.constant 0 : index
    %c0_122 = arith.constant 0 : index
    %424 = vector.load %arg5[%c0_121, %c0_122] : memref<128x512xbf16, #tpu.memory_space<vmem>>, vector<128x512xbf16>
    %cst_123 = arith.constant dense<0.000000e+00> : vector<16x512xf32>
    %425 = tpu.matmul %423, %424, %cst_123 {dimension_numbers = #tpu.dot_dimension_numbers<[1], [0], [0], [1], [0, 0, 1, 1], [], []>} : vector<16x128xbf16>, vector<128x512xbf16>, vector<16x512xf32> -> vector<16x512xf32>
    %426 = arith.addf %422, %425 : vector<16x512xf32>
    %427 = vector.extract_strided_slice %426 {offsets = [0, 0], sizes = [16, 128], strides = [1, 1]} : vector<16x512xf32> to vector<16x128xf32>
    %428 = arith.negf %427 : vector<16x128xf32>
    %429 = math.exp %428 : vector<16x128xf32>
    %cst_124 = arith.constant 1.000000e+00 : f32
    %430 = vector.broadcast %cst_124 : f32 to vector<16x128xf32>
    %431 = arith.addf %430, %429 : vector<16x128xf32>
    %432 = arith.divf %430, %431 : vector<16x128xf32>
    %433 = vector.extract_strided_slice %426 {offsets = [0, 128], sizes = [16, 128], strides = [1, 1]} : vector<16x512xf32> to vector<16x128xf32>
    %434 = arith.negf %433 : vector<16x128xf32>
    %435 = math.exp %434 : vector<16x128xf32>
    %cst_125 = arith.constant 1.000000e+00 : f32
    %436 = vector.broadcast %cst_125 : f32 to vector<16x128xf32>
    %437 = arith.addf %436, %435 : vector<16x128xf32>
    %438 = arith.divf %436, %437 : vector<16x128xf32>
    %439 = vector.extract_strided_slice %426 {offsets = [0, 256], sizes = [16, 128], strides = [1, 1]} : vector<16x512xf32> to vector<16x128xf32>
    %440 = math.tanh %439 : vector<16x128xf32>
    %441 = vector.extract_strided_slice %426 {offsets = [0, 384], sizes = [16, 128], strides = [1, 1]} : vector<16x512xf32> to vector<16x128xf32>
    %442 = arith.negf %441 : vector<16x128xf32>
    %443 = math.exp %442 : vector<16x128xf32>
    %cst_126 = arith.constant 1.000000e+00 : f32
    %444 = vector.broadcast %cst_126 : f32 to vector<16x128xf32>
    %445 = arith.addf %444, %443 : vector<16x128xf32>
    %446 = arith.divf %444, %445 : vector<16x128xf32>
    %447 = arith.mulf %438, %415 : vector<16x128xf32>
    %448 = arith.mulf %432, %440 : vector<16x128xf32>
    %449 = arith.addf %447, %448 : vector<16x128xf32>
    %450 = math.tanh %449 : vector<16x128xf32>
    %451 = arith.mulf %446, %450 : vector<16x128xf32>
    %c4_i32_127 = arith.constant 4 : i32
    %c16_i32_128 = arith.constant 16 : i32
    %452 = arith.muli %c4_i32_127, %c16_i32_128 : i32
    %453 = tpu.assume_multiple %452, 16 : i32
    %454 = arith.index_cast %453 : i32 to index
    %c0_129 = arith.constant 0 : index
    %455 = vector.load %arg10[%454, %c0_129] : memref<128x512xbf16, #tpu.memory_space<vmem>>, vector<16x512xbf16>
    %456 = arith.extf %455 : vector<16x512xbf16> to vector<16x512xf32>
    %457 = arith.truncf %451 : vector<16x128xf32> to vector<16x128xbf16>
    %c0_130 = arith.constant 0 : index
    %c0_131 = arith.constant 0 : index
    %458 = vector.load %arg5[%c0_130, %c0_131] : memref<128x512xbf16, #tpu.memory_space<vmem>>, vector<128x512xbf16>
    %cst_132 = arith.constant dense<0.000000e+00> : vector<16x512xf32>
    %459 = tpu.matmul %457, %458, %cst_132 {dimension_numbers = #tpu.dot_dimension_numbers<[1], [0], [0], [1], [0, 0, 1, 1], [], []>} : vector<16x128xbf16>, vector<128x512xbf16>, vector<16x512xf32> -> vector<16x512xf32>
    %460 = arith.addf %456, %459 : vector<16x512xf32>
    %461 = vector.extract_strided_slice %460 {offsets = [0, 0], sizes = [16, 128], strides = [1, 1]} : vector<16x512xf32> to vector<16x128xf32>
    %462 = arith.negf %461 : vector<16x128xf32>
    %463 = math.exp %462 : vector<16x128xf32>
    %cst_133 = arith.constant 1.000000e+00 : f32
    %464 = vector.broadcast %cst_133 : f32 to vector<16x128xf32>
    %465 = arith.addf %464, %463 : vector<16x128xf32>
    %466 = arith.divf %464, %465 : vector<16x128xf32>
    %467 = vector.extract_strided_slice %460 {offsets = [0, 128], sizes = [16, 128], strides = [1, 1]} : vector<16x512xf32> to vector<16x128xf32>
    %468 = arith.negf %467 : vector<16x128xf32>
    %469 = math.exp %468 : vector<16x128xf32>
    %cst_134 = arith.constant 1.000000e+00 : f32
    %470 = vector.broadcast %cst_134 : f32 to vector<16x128xf32>
    %471 = arith.addf %470, %469 : vector<16x128xf32>
    %472 = arith.divf %470, %471 : vector<16x128xf32>
    %473 = vector.extract_strided_slice %460 {offsets = [0, 256], sizes = [16, 128], strides = [1, 1]} : vector<16x512xf32> to vector<16x128xf32>
    %474 = math.tanh %473 : vector<16x128xf32>
    %475 = vector.extract_strided_slice %460 {offsets = [0, 384], sizes = [16, 128], strides = [1, 1]} : vector<16x512xf32> to vector<16x128xf32>
    %476 = arith.negf %475 : vector<16x128xf32>
    %477 = math.exp %476 : vector<16x128xf32>
    %cst_135 = arith.constant 1.000000e+00 : f32
    %478 = vector.broadcast %cst_135 : f32 to vector<16x128xf32>
    %479 = arith.addf %478, %477 : vector<16x128xf32>
    %480 = arith.divf %478, %479 : vector<16x128xf32>
    %481 = arith.mulf %472, %449 : vector<16x128xf32>
    %482 = arith.mulf %466, %474 : vector<16x128xf32>
    %483 = arith.addf %481, %482 : vector<16x128xf32>
    %484 = math.tanh %483 : vector<16x128xf32>
    %485 = arith.mulf %480, %484 : vector<16x128xf32>
    %c5_i32_136 = arith.constant 5 : i32
    %c16_i32_137 = arith.constant 16 : i32
    %486 = arith.muli %c5_i32_136, %c16_i32_137 : i32
    %487 = tpu.assume_multiple %486, 16 : i32
    %488 = arith.index_cast %487 : i32 to index
    %c0_138 = arith.constant 0 : index
    %489 = vector.load %arg10[%488, %c0_138] : memref<128x512xbf16, #tpu.memory_space<vmem>>, vector<16x512xbf16>
    %490 = arith.extf %489 : vector<16x512xbf16> to vector<16x512xf32>
    %491 = arith.truncf %485 : vector<16x128xf32> to vector<16x128xbf16>
    %c0_139 = arith.constant 0 : index
    %c0_140 = arith.constant 0 : index
    %492 = vector.load %arg5[%c0_139, %c0_140] : memref<128x512xbf16, #tpu.memory_space<vmem>>, vector<128x512xbf16>
    %cst_141 = arith.constant dense<0.000000e+00> : vector<16x512xf32>
    %493 = tpu.matmul %491, %492, %cst_141 {dimension_numbers = #tpu.dot_dimension_numbers<[1], [0], [0], [1], [0, 0, 1, 1], [], []>} : vector<16x128xbf16>, vector<128x512xbf16>, vector<16x512xf32> -> vector<16x512xf32>
    %494 = arith.addf %490, %493 : vector<16x512xf32>
    %495 = vector.extract_strided_slice %494 {offsets = [0, 0], sizes = [16, 128], strides = [1, 1]} : vector<16x512xf32> to vector<16x128xf32>
    %496 = arith.negf %495 : vector<16x128xf32>
    %497 = math.exp %496 : vector<16x128xf32>
    %cst_142 = arith.constant 1.000000e+00 : f32
    %498 = vector.broadcast %cst_142 : f32 to vector<16x128xf32>
    %499 = arith.addf %498, %497 : vector<16x128xf32>
    %500 = arith.divf %498, %499 : vector<16x128xf32>
    %501 = vector.extract_strided_slice %494 {offsets = [0, 128], sizes = [16, 128], strides = [1, 1]} : vector<16x512xf32> to vector<16x128xf32>
    %502 = arith.negf %501 : vector<16x128xf32>
    %503 = math.exp %502 : vector<16x128xf32>
    %cst_143 = arith.constant 1.000000e+00 : f32
    %504 = vector.broadcast %cst_143 : f32 to vector<16x128xf32>
    %505 = arith.addf %504, %503 : vector<16x128xf32>
    %506 = arith.divf %504, %505 : vector<16x128xf32>
    %507 = vector.extract_strided_slice %494 {offsets = [0, 256], sizes = [16, 128], strides = [1, 1]} : vector<16x512xf32> to vector<16x128xf32>
    %508 = math.tanh %507 : vector<16x128xf32>
    %509 = vector.extract_strided_slice %494 {offsets = [0, 384], sizes = [16, 128], strides = [1, 1]} : vector<16x512xf32> to vector<16x128xf32>
    %510 = arith.negf %509 : vector<16x128xf32>
    %511 = math.exp %510 : vector<16x128xf32>
    %cst_144 = arith.constant 1.000000e+00 : f32
    %512 = vector.broadcast %cst_144 : f32 to vector<16x128xf32>
    %513 = arith.addf %512, %511 : vector<16x128xf32>
    %514 = arith.divf %512, %513 : vector<16x128xf32>
    %515 = arith.mulf %506, %483 : vector<16x128xf32>
    %516 = arith.mulf %500, %508 : vector<16x128xf32>
    %517 = arith.addf %515, %516 : vector<16x128xf32>
    %518 = math.tanh %517 : vector<16x128xf32>
    %519 = arith.mulf %514, %518 : vector<16x128xf32>
    %c6_i32_145 = arith.constant 6 : i32
    %c16_i32_146 = arith.constant 16 : i32
    %520 = arith.muli %c6_i32_145, %c16_i32_146 : i32
    %521 = tpu.assume_multiple %520, 16 : i32
    %522 = arith.index_cast %521 : i32 to index
    %c0_147 = arith.constant 0 : index
    %523 = vector.load %arg10[%522, %c0_147] : memref<128x512xbf16, #tpu.memory_space<vmem>>, vector<16x512xbf16>
    %524 = arith.extf %523 : vector<16x512xbf16> to vector<16x512xf32>
    %525 = arith.truncf %519 : vector<16x128xf32> to vector<16x128xbf16>
    %c0_148 = arith.constant 0 : index
    %c0_149 = arith.constant 0 : index
    %526 = vector.load %arg5[%c0_148, %c0_149] : memref<128x512xbf16, #tpu.memory_space<vmem>>, vector<128x512xbf16>
    %cst_150 = arith.constant dense<0.000000e+00> : vector<16x512xf32>
    %527 = tpu.matmul %525, %526, %cst_150 {dimension_numbers = #tpu.dot_dimension_numbers<[1], [0], [0], [1], [0, 0, 1, 1], [], []>} : vector<16x128xbf16>, vector<128x512xbf16>, vector<16x512xf32> -> vector<16x512xf32>
    %528 = arith.addf %524, %527 : vector<16x512xf32>
    %529 = vector.extract_strided_slice %528 {offsets = [0, 0], sizes = [16, 128], strides = [1, 1]} : vector<16x512xf32> to vector<16x128xf32>
    %530 = arith.negf %529 : vector<16x128xf32>
    %531 = math.exp %530 : vector<16x128xf32>
    %cst_151 = arith.constant 1.000000e+00 : f32
    %532 = vector.broadcast %cst_151 : f32 to vector<16x128xf32>
    %533 = arith.addf %532, %531 : vector<16x128xf32>
    %534 = arith.divf %532, %533 : vector<16x128xf32>
    %535 = vector.extract_strided_slice %528 {offsets = [0, 128], sizes = [16, 128], strides = [1, 1]} : vector<16x512xf32> to vector<16x128xf32>
    %536 = arith.negf %535 : vector<16x128xf32>
    %537 = math.exp %536 : vector<16x128xf32>
    %cst_152 = arith.constant 1.000000e+00 : f32
    %538 = vector.broadcast %cst_152 : f32 to vector<16x128xf32>
    %539 = arith.addf %538, %537 : vector<16x128xf32>
    %540 = arith.divf %538, %539 : vector<16x128xf32>
    %541 = vector.extract_strided_slice %528 {offsets = [0, 256], sizes = [16, 128], strides = [1, 1]} : vector<16x512xf32> to vector<16x128xf32>
    %542 = math.tanh %541 : vector<16x128xf32>
    %543 = vector.extract_strided_slice %528 {offsets = [0, 384], sizes = [16, 128], strides = [1, 1]} : vector<16x512xf32> to vector<16x128xf32>
    %544 = arith.negf %543 : vector<16x128xf32>
    %545 = math.exp %544 : vector<16x128xf32>
    %cst_153 = arith.constant 1.000000e+00 : f32
    %546 = vector.broadcast %cst_153 : f32 to vector<16x128xf32>
    %547 = arith.addf %546, %545 : vector<16x128xf32>
    %548 = arith.divf %546, %547 : vector<16x128xf32>
    %549 = arith.mulf %540, %517 : vector<16x128xf32>
    %550 = arith.mulf %534, %542 : vector<16x128xf32>
    %551 = arith.addf %549, %550 : vector<16x128xf32>
    %552 = math.tanh %551 : vector<16x128xf32>
    %553 = arith.mulf %548, %552 : vector<16x128xf32>
    %c7_i32_154 = arith.constant 7 : i32
    %c16_i32_155 = arith.constant 16 : i32
    %554 = arith.muli %c7_i32_154, %c16_i32_155 : i32
    %555 = tpu.assume_multiple %554, 16 : i32
    %556 = arith.index_cast %555 : i32 to index
    %c0_156 = arith.constant 0 : index
    %557 = vector.load %arg10[%556, %c0_156] : memref<128x512xbf16, #tpu.memory_space<vmem>>, vector<16x512xbf16>
    %558 = arith.extf %557 : vector<16x512xbf16> to vector<16x512xf32>
    %559 = arith.truncf %553 : vector<16x128xf32> to vector<16x128xbf16>
    %c0_157 = arith.constant 0 : index
    %c0_158 = arith.constant 0 : index
    %560 = vector.load %arg5[%c0_157, %c0_158] : memref<128x512xbf16, #tpu.memory_space<vmem>>, vector<128x512xbf16>
    %cst_159 = arith.constant dense<0.000000e+00> : vector<16x512xf32>
    %561 = tpu.matmul %559, %560, %cst_159 {dimension_numbers = #tpu.dot_dimension_numbers<[1], [0], [0], [1], [0, 0, 1, 1], [], []>} : vector<16x128xbf16>, vector<128x512xbf16>, vector<16x512xf32> -> vector<16x512xf32>
    %562 = arith.addf %558, %561 : vector<16x512xf32>
    %563 = vector.extract_strided_slice %562 {offsets = [0, 0], sizes = [16, 128], strides = [1, 1]} : vector<16x512xf32> to vector<16x128xf32>
    %564 = arith.negf %563 : vector<16x128xf32>
    %565 = math.exp %564 : vector<16x128xf32>
    %cst_160 = arith.constant 1.000000e+00 : f32
    %566 = vector.broadcast %cst_160 : f32 to vector<16x128xf32>
    %567 = arith.addf %566, %565 : vector<16x128xf32>
    %568 = arith.divf %566, %567 : vector<16x128xf32>
    %569 = vector.extract_strided_slice %562 {offsets = [0, 128], sizes = [16, 128], strides = [1, 1]} : vector<16x512xf32> to vector<16x128xf32>
    %570 = arith.negf %569 : vector<16x128xf32>
    %571 = math.exp %570 : vector<16x128xf32>
    %cst_161 = arith.constant 1.000000e+00 : f32
    %572 = vector.broadcast %cst_161 : f32 to vector<16x128xf32>
    %573 = arith.addf %572, %571 : vector<16x128xf32>
    %574 = arith.divf %572, %573 : vector<16x128xf32>
    %575 = vector.extract_strided_slice %562 {offsets = [0, 256], sizes = [16, 128], strides = [1, 1]} : vector<16x512xf32> to vector<16x128xf32>
    %576 = math.tanh %575 : vector<16x128xf32>
    %577 = vector.extract_strided_slice %562 {offsets = [0, 384], sizes = [16, 128], strides = [1, 1]} : vector<16x512xf32> to vector<16x128xf32>
    %578 = arith.negf %577 : vector<16x128xf32>
    %579 = math.exp %578 : vector<16x128xf32>
    %cst_162 = arith.constant 1.000000e+00 : f32
    %580 = vector.broadcast %cst_162 : f32 to vector<16x128xf32>
    %581 = arith.addf %580, %579 : vector<16x128xf32>
    %582 = arith.divf %580, %581 : vector<16x128xf32>
    %583 = arith.mulf %574, %551 : vector<16x128xf32>
    %584 = arith.mulf %568, %576 : vector<16x128xf32>
    %585 = arith.addf %583, %584 : vector<16x128xf32>
    %586 = math.tanh %585 : vector<16x128xf32>
    %587 = arith.mulf %582, %586 : vector<16x128xf32>
    %c8_i32_163 = arith.constant 8 : i32
    %c0_164 = arith.constant 0 : index
    %c0_165 = arith.constant 0 : index
    %588 = vector.load %arg7[%c0_164, %c0_165] : memref<16x128xf32, #tpu.memory_space<vmem>>, vector<16x128xf32>
    tpu.vector_store %arg7[%c0_164, %c0_165], %587 {strides = array<i32>} : memref<16x128xf32, #tpu.memory_space<vmem>>, vector<16x128xf32>,
    return
  }
}

</mosaic_0001>

<llo_original>
// kernel: tpu_custom_call.1
$region0: #{tpu_custom_call.1}
  #allocation0 [shape = 'u32[]', space=smem, size = 0x4, offset = 0x4, fixed_abs, tag = 'smem constant byte address 0x4 - core index']
  #allocation1 [shape = 'u32[144,128]{1,0:T(1,128)}', space=vmem, size = 0x12000, scoped, tag = 'internal scratch']
  #allocation2 [shape = 'bf16[128,128]{1,0:T(16,128)(2,1)}', space=vmem, size = 0x8000, scoped, tag = 'scratch operand']
  #allocation3 [shape = 'bf16[128,128]{1,0:T(16,128)(2,1)}', space=vmem, size = 0x8000, scoped, tag = 'scratch operand']
  #allocation4 [shape = 'bf16[128,512]{1,0:T(16,128)(2,1)}', space=vmem, size = 0x20000, scoped, tag = 'scratch operand']
  %s0 = inlined_call_operand.hbm [shape: bf16[128,128], index: 0, kind: input, shape index: {}]
  %s1 = inlined_call_operand.hbm [shape: bf16[128,512], index: 1, kind: input, shape index: {}]
  %s2 = inlined_call_operand.hbm [shape: bf16[128,512], index: 2, kind: input, shape index: {}]
  %s3 = inlined_call_operand.vmem [shape: f32[1,512], index: 3, kind: input, shape index: {}]
  %s4 = inlined_call_operand.hbm [shape: bf16[128,512], index: 4, kind: input, shape index: {}]
  %s5 = inlined_call_operand.hbm [shape: bf16[128,512], index: 5, kind: input, shape index: {}]
  %s6 = inlined_call_operand.vmem [shape: f32[1,512], index: 6, kind: input, shape index: {}]
  %s7 = inlined_call_operand.hbm [shape: f32[16,128], index: 7, kind: output, shape index: {}]
  %s8 = sld [smem:[#allocation0]]
  $region58: #{tpu_custom_call.1} parent=0
    _
  %s10 = ssub.s32 1, %s8
  %s11 = scalar_select 0, %s10, %s8
  $region1: #{tpu_custom_call.1} parent=0
    #allocation5 [shape = 'u8[32768]{0}', space=vmem, size = 0x8000, scoped, tag = 'input window, operand 0, single buffered']
    #allocation6 [shape = 's32[1]{0}', space=sflag, size = 0x4, scoped, tag = 'scoped memory for tpu_custom_call.1']
    #allocation7 [shape = 's32[1]{0}', space=sflag, size = 0x4, scoped, tag = 'scoped memory for tpu_custom_call.1']
    #allocation8 [shape = 'u8[131072]{0}', space=vmem, size = 0x20000, scoped, tag = 'input window, operand 1, single buffered']
    #allocation9 [shape = 's32[1]{0}', space=sflag, size = 0x4, scoped, tag = 'scoped memory for tpu_custom_call.1']
    #allocation10 [shape = 'u8[131072]{0}', space=vmem, size = 0x20000, scoped, tag = 'input window, operand 2, single buffered']
    #allocation11 [shape = 'u8[131072]{0}', space=vmem, size = 0x20000, scoped, tag = 'input window, operand 4, single buffered']
    #allocation12 [shape = 's32[1]{0}', space=sflag, size = 0x4, scoped, tag = 'scoped memory for tpu_custom_call.1']
    #allocation13 [shape = 'u8[131072]{0}', space=vmem, size = 0x20000, scoped, tag = 'input window, operand 5, single buffered']
    #allocation14 [shape = 'u8[8192]{0}', space=vmem, size = 0x2000, scoped, tag = 'output window, operand 0, single buffered']
    %12 = vsyncpa [#allocation6], 0
    %13 = vsyncpa [#allocation9], 0
    %14 = vsyncpa [#allocation12], 0
    %15 = vsyncpa [#allocation7], 0
    // Predicated region
    $region2: #{tpu_custom_call.1} parent=1 // pred_check
      _
    $region3: #{tpu_custom_call.1} parent=1 // pred_check_branch
      %17 = sbr.rel (0) target = $region5
    $region4: #{tpu_custom_call.1} parent=1 // pred_region
      %s19 = ssub.s32 1024, 1024
      %20 = vsyncadd [#allocation6], %s19
      %s21 = sshll.u32 [#allocation5], 4
      %s22 = int_to_ptr.vmem [resolvable:$true] %s21
      %27 = dma.hbm_to_vmem [thread:$0]  %s0, 1024, %s22, [#allocation6], 64, 64, 4
    $region5: #{tpu_custom_call.1} parent=1 // pred_fallthru
      _
    // Predicated region
    $region6: #{tpu_custom_call.1} parent=1 // pred_check
      _
    $region7: #{tpu_custom_call.1} parent=1 // pred_check_branch
      %29 = sbr.rel (0) target = $region9
    $region8: #{tpu_custom_call.1} parent=1 // pred_region
      %s31 = ssub.s32 4096, 4096
      %32 = vsyncadd [#allocation9], %s31
      %s33 = sshll.u32 [#allocation8], 4
      %s34 = int_to_ptr.vmem [resolvable:$true] %s33
      %39 = dma.hbm_to_vmem [thread:$0]  %s1, 4096, %s34, [#allocation9], 256, 256, 16
    $region9: #{tpu_custom_call.1} parent=1 // pred_fallthru
      _
    // Predicated region
    $region10: #{tpu_custom_call.1} parent=1 // pred_check
      _
    $region11: #{tpu_custom_call.1} parent=1 // pred_check_branch
      %41 = sbr.rel (0) target = $region13
    $region12: #{tpu_custom_call.1} parent=1 // pred_region
      %s43 = ssub.s32 4096, 4096
      %44 = vsyncadd [#allocation9], %s43
      %s45 = sshll.u32 [#allocation10], 4
      %s46 = int_to_ptr.vmem [resolvable:$true] %s45
      %51 = dma.hbm_to_vmem [thread:$0]  %s2, 4096, %s46, [#allocation9], 256, 256, 16
    $region13: #{tpu_custom_call.1} parent=1 // pred_fallthru
      _
    // Predicated region
    $region14: #{tpu_custom_call.1} parent=1 // pred_check
      _
    $region15: #{tpu_custom_call.1} parent=1 // pred_check_branch
      %53 = sbr.rel (0) target = $region17
    $region16: #{tpu_custom_call.1} parent=1 // pred_region
      _
    $region17: #{tpu_custom_call.1} parent=1 // pred_fallthru
      _
    // Predicated region
    $region18: #{tpu_custom_call.1} parent=1 // pred_check
      _
    $region19: #{tpu_custom_call.1} parent=1 // pred_check_branch
      %55 = sbr.rel (0) target = $region21
    $region20: #{tpu_custom_call.1} parent=1 // pred_region
      %s57 = ssub.s32 4096, 4096
      %58 = vsyncadd [#allocation12], %s57
      %s59 = sshll.u32 [#allocation11], 4
      %s60 = int_to_ptr.vmem [resolvable:$true] %s59
      %65 = dma.hbm_to_vmem [thread:$0]  %s4, 4096, %s60, [#allocation12], 256, 256, 16
    $region21: #{tpu_custom_call.1} parent=1 // pred_fallthru
      _
    // Predicated region
    $region22: #{tpu_custom_call.1} parent=1 // pred_check
      _
    $region23: #{tpu_custom_call.1} parent=1 // pred_check_branch
      %67 = sbr.rel (0) target = $region25
    $region24: #{tpu_custom_call.1} parent=1 // pred_region
      %s69 = ssub.s32 4096, 4096
      %70 = vsyncadd [#allocation12], %s69
      %s71 = sshll.u32 [#allocation13], 4
      %s72 = int_to_ptr.vmem [resolvable:$true] %s71
      %77 = dma.hbm_to_vmem [thread:$0]  %s5, 4096, %s72, [#allocation12], 256, 256, 16
    $region25: #{tpu_custom_call.1} parent=1 // pred_fallthru
      _
    // Predicated region
    $region26: #{tpu_custom_call.1} parent=1 // pred_check
      _
    $region27: #{tpu_custom_call.1} parent=1 // pred_check_branch
      %79 = sbr.rel (0) target = $region29
    $region28: #{tpu_custom_call.1} parent=1 // pred_region
      _
    $region29: #{tpu_custom_call.1} parent=1 // pred_fallthru
      _
    // Predicated region
    $region30: #{tpu_custom_call.1} parent=1 // pred_check
      _
    $region31: #{tpu_custom_call.1} parent=1 // pred_check_branch
      %81 = sbr.rel (0) target = $region33
    $region32: #{tpu_custom_call.1} parent=1 // pred_region
      %82 = dma.done [#allocation6], 1024
    $region33: #{tpu_custom_call.1} parent=1 // pred_fallthru
      _
    // Predicated region
    $region34: #{tpu_custom_call.1} parent=1 // pred_check
      _
    $region35: #{tpu_custom_call.1} parent=1 // pred_check_branch
      %84 = sbr.rel (0) target = $region37
    $region36: #{tpu_custom_call.1} parent=1 // pred_region
      %85 = dma.done [#allocation9], 4096
    $region37: #{tpu_custom_call.1} parent=1 // pred_fallthru
      _
    // Predicated region
    $region38: #{tpu_custom_call.1} parent=1 // pred_check
      _
    $region39: #{tpu_custom_call.1} parent=1 // pred_check_branch
      %87 = sbr.rel (0) target = $region41
    $region40: #{tpu_custom_call.1} parent=1 // pred_region
      %88 = dma.done [#allocation9], 4096
    $region41: #{tpu_custom_call.1} parent=1 // pred_fallthru
      _
    // Predicated region
    $region42: #{tpu_custom_call.1} parent=1 // pred_check
      _
    $region43: #{tpu_custom_call.1} parent=1 // pred_check_branch
      %90 = sbr.rel (0) target = $region45
    $region44: #{tpu_custom_call.1} parent=1 // pred_region
      %91 = dma.done [#allocation12], 4096
    $region45: #{tpu_custom_call.1} parent=1 // pred_fallthru
      _
    // Predicated region
    $region46: #{tpu_custom_call.1} parent=1 // pred_check
      _
    $region47: #{tpu_custom_call.1} parent=1 // pred_check_branch
      %93 = sbr.rel (0) target = $region49
    $region48: #{tpu_custom_call.1} parent=1 // pred_region
      %94 = dma.done [#allocation12], 4096
    $region49: #{tpu_custom_call.1} parent=1 // pred_fallthru
      _
    %v96 = vld [vmem:[#allocation5] sm:$0xf]
    %v97 = vld [vmem:[#allocation5 + $0x4] sm:$0xf]
    %v98 = vld [vmem:[#allocation5 + $0x8] sm:$0xf]
    %v99 = vld [vmem:[#allocation5 + $0xc] sm:$0xf]
    %v100 = vld [vmem:[#allocation5 + $0x10] sm:$0xf]
    %v101 = vld [vmem:[#allocation5 + $0x14] sm:$0xf]
    %v102 = vld [vmem:[#allocation5 + $0x18] sm:$0xf]
    %v103 = vld [vmem:[#allocation5 + $0x1c] sm:$0xf]
    %v104 = vld [vmem:[#allocation5 + $0x20] sm:$0xf]
    %v105 = vld [vmem:[#allocation5 + $0x24] sm:$0xf]
    %v106 = vld [vmem:[#allocation5 + $0x28] sm:$0xf]
    %v107 = vld [vmem:[#allocation5 + $0x2c] sm:$0xf]
    %v108 = vld [vmem:[#allocation5 + $0x30] sm:$0xf]
    %v109 = vld [vmem:[#allocation5 + $0x34] sm:$0xf]
    %v110 = vld [vmem:[#allocation5 + $0x38] sm:$0xf]
    %v111 = vld [vmem:[#allocation5 + $0x3c] sm:$0xf]
    %v112 = vld [vmem:[#allocation8] sm:$0xff]
    %v113 = vld [vmem:[#allocation8 + $0x8] sm:$0xff]
    %v114 = vld [vmem:[#allocation8 + $0x10] sm:$0xff]
    %v115 = vld [vmem:[#allocation8 + $0x18] sm:$0xff]
    %v116 = vld [vmem:[#allocation8 + $0x20] sm:$0xff]
    %v117 = vld [vmem:[#allocation8 + $0x28] sm:$0xff]
    %v118 = vld [vmem:[#allocation8 + $0x30] sm:$0xff]
    %v119 = vld [vmem:[#allocation8 + $0x38] sm:$0xff]
    %v120 = vld [vmem:[#allocation8 + $0x40] sm:$0xff]
    %v121 = vld [vmem:[#allocation8 + $0x48] sm:$0xff]
    %v122 = vld [vmem:[#allocation8 + $0x50] sm:$0xff]
    %v123 = vld [vmem:[#allocation8 + $0x58] sm:$0xff]
    %v124 = vld [vmem:[#allocation8 + $0x60] sm:$0xff]
    %v125 = vld [vmem:[#allocation8 + $0x68] sm:$0xff]
    %v126 = vld [vmem:[#allocation8 + $0x70] sm:$0xff]
    %v127 = vld [vmem:[#allocation8 + $0x78] sm:$0xff]
    %v128 = vld [vmem:[#allocation8 + $0x80] sm:$0xff]
    %v129 = vld [vmem:[#allocation8 + $0x88] sm:$0xff]
    %v130 = vld [vmem:[#allocation8 + $0x90] sm:$0xff]
    %v131 = vld [vmem:[#allocation8 + $0x98] sm:$0xff]
    %v132 = vld [vmem:[#allocation8 + $0xa0] sm:$0xff]
    %v133 = vld [vmem:[#allocation8 + $0xa8] sm:$0xff]
    %v134 = vld [vmem:[#allocation8 + $0xb0] sm:$0xff]
    %v135 = vld [vmem:[#allocation8 + $0xb8] sm:$0xff]
    %v136 = vld [vmem:[#allocation8 + $0xc0] sm:$0xff]
    %v137 = vld [vmem:[#allocation8 + $0xc8] sm:$0xff]
    %v138 = vld [vmem:[#allocation8 + $0xd0] sm:$0xff]
    %v139 = vld [vmem:[#allocation8 + $0xd8] sm:$0xff]
    %v140 = vld [vmem:[#allocation8 + $0xe0] sm:$0xff]
    %v141 = vld [vmem:[#allocation8 + $0xe8] sm:$0xff]
    %v142 = vld [vmem:[#allocation8 + $0xf0] sm:$0xff]
    %v143 = vld [vmem:[#allocation8 + $0xf8] sm:$0xff]
    %v144 = vld [vmem:[%s3] sm:$0xf]
    %v146 = vlaneseq
    %v147 = vshrl.u32 %v146, 7
    %v148 = vsub.s32 0, %v147
    %v149 = vrot.slane %v144, %v148
    %v150 = vlaneseq
    %v151 = vshrl.u32 %v150, 7
    %v152 = vsub.s32 1, %v151
    %v153 = vrot.slane %v144, %v152
    %v154 = vlaneseq
    %v155 = vshrl.u32 %v154, 7
    %v156 = vsub.s32 2, %v155
    %v157 = vrot.slane %v144, %v156
    %v158 = vlaneseq
    %v159 = vshrl.u32 %v158, 7
    %v160 = vsub.s32 3, %v159
    %v161 = vrot.slane %v144, %v160
    %v182 = vunpack.c.l.b16 %v96
    %v183 = vunpack.c.l.b16 %v97
    %v184 = vunpack.c.l.b16 %v98
    %v185 = vunpack.c.l.b16 %v99
    %v186 = vunpack.c.l.b16 %v100
    %v187 = vunpack.c.l.b16 %v101
    %v188 = vunpack.c.l.b16 %v102
    %v189 = vunpack.c.l.b16 %v103
    %v190 = vunpack.c.l.b16 %v104
    %v191 = vunpack.c.l.b16 %v105
    %v192 = vunpack.c.l.b16 %v106
    %v193 = vunpack.c.l.b16 %v107
    %v194 = vunpack.c.l.b16 %v108
    %v195 = vunpack.c.l.b16 %v109
    %v196 = vunpack.c.l.b16 %v110
    %v197 = vunpack.c.l.b16 %v111
    %v198 = vpack.c.b16 %v183, %v182
    %v199 = vpack.c.b16 %v185, %v184
    %v200 = vpack.c.b16 %v187, %v186
    %v201 = vpack.c.b16 %v189, %v188
    %v202 = vpack.c.b16 %v191, %v190
    %v203 = vpack.c.b16 %v193, %v192
    %v204 = vpack.c.b16 %v195, %v194
    %v205 = vpack.c.b16 %v197, %v196
    %v246 = vunpack.c.l.b16 %v112
    %v247 = vunpack.c.h.b16 %v112
    %v248 = vunpack.c.l.b16 %v113
    %v249 = vunpack.c.h.b16 %v113
    %v250 = vunpack.c.l.b16 %v114
    %v251 = vunpack.c.h.b16 %v114
    %v252 = vunpack.c.l.b16 %v115
    %v253 = vunpack.c.h.b16 %v115
    %v254 = vunpack.c.l.b16 %v116
    %v255 = vunpack.c.h.b16 %v116
    %v256 = vunpack.c.l.b16 %v117
    %v257 = vunpack.c.h.b16 %v117
    %v258 = vunpack.c.l.b16 %v118
    %v259 = vunpack.c.h.b16 %v118
    %v260 = vunpack.c.l.b16 %v119
    %v261 = vunpack.c.h.b16 %v119
    %v262 = vunpack.c.l.b16 %v120
    %v263 = vunpack.c.h.b16 %v120
    %v264 = vunpack.c.l.b16 %v121
    %v265 = vunpack.c.h.b16 %v121
    %v266 = vunpack.c.l.b16 %v122
    %v267 = vunpack.c.h.b16 %v122
    %v268 = vunpack.c.l.b16 %v123
    %v269 = vunpack.c.h.b16 %v123
    %v270 = vunpack.c.l.b16 %v124
    %v271 = vunpack.c.h.b16 %v124
    %v272 = vunpack.c.l.b16 %v125
    %v273 = vunpack.c.h.b16 %v125
    %v274 = vunpack.c.l.b16 %v126
    %v275 = vunpack.c.h.b16 %v126
    %v276 = vunpack.c.l.b16 %v127
    %v277 = vunpack.c.h.b16 %v127
    %v278 = vunpack.c.l.b16 %v128
    %v279 = vunpack.c.h.b16 %v128
    %v280 = vunpack.c.l.b16 %v129
    %v281 = vunpack.c.h.b16 %v129
    %v282 = vunpack.c.l.b16 %v130
    %v283 = vunpack.c.h.b16 %v130
    %v284 = vunpack.c.l.b16 %v131
    %v285 = vunpack.c.h.b16 %v131
    %v286 = vunpack.c.l.b16 %v132
    %v287 = vunpack.c.h.b16 %v132
    %v288 = vunpack.c.l.b16 %v133
    %v289 = vunpack.c.h.b16 %v133
    %v290 = vunpack.c.l.b16 %v134
    %v291 = vunpack.c.h.b16 %v134
    %v292 = vunpack.c.l.b16 %v135
    %v293 = vunpack.c.h.b16 %v135
    %v294 = vunpack.c.l.b16 %v136
    %v295 = vunpack.c.h.b16 %v136
    %v296 = vunpack.c.l.b16 %v137
    %v297 = vunpack.c.h.b16 %v137
    %v298 = vunpack.c.l.b16 %v138
    %v299 = vunpack.c.h.b16 %v138
    %v300 = vunpack.c.l.b16 %v139
    %v301 = vunpack.c.h.b16 %v139
    %v302 = vunpack.c.l.b16 %v140
    %v303 = vunpack.c.h.b16 %v140
    %v304 = vunpack.c.l.b16 %v141
    %v305 = vunpack.c.h.b16 %v141
    %v306 = vunpack.c.l.b16 %v142
    %v307 = vunpack.c.h.b16 %v142
    %v308 = vunpack.c.l.b16 %v143
    %v309 = vunpack.c.h.b16 %v143
    %v310 = vpack.c.b16 %v250, %v246
    %v311 = vpack.c.b16 %v251, %v247
    %v312 = vpack.c.b16 %v252, %v248
    %v313 = vpack.c.b16 %v253, %v249
    %v314 = vpack.c.b16 %v258, %v254
    %v315 = vpack.c.b16 %v259, %v255
    %v316 = vpack.c.b16 %v260, %v256
    %v317 = vpack.c.b16 %v261, %v257
    %v318 = vpack.c.b16 %v266, %v262
    %v319 = vpack.c.b16 %v267, %v263
    %v320 = vpack.c.b16 %v268, %v264
    %v321 = vpack.c.b16 %v269, %v265
    %v322 = vpack.c.b16 %v274, %v270
    %v323 = vpack.c.b16 %v275, %v271
    %v324 = vpack.c.b16 %v276, %v272
    %v325 = vpack.c.b16 %v277, %v273
    %v326 = vpack.c.b16 %v282, %v278
    %v327 = vpack.c.b16 %v283, %v279
    %v328 = vpack.c.b16 %v284, %v280
    %v329 = vpack.c.b16 %v285, %v281
    %v330 = vpack.c.b16 %v290, %v286
    %v331 = vpack.c.b16 %v291, %v287
    %v332 = vpack.c.b16 %v292, %v288
    %v333 = vpack.c.b16 %v293, %v289
    %v334 = vpack.c.b16 %v298, %v294
    %v335 = vpack.c.b16 %v299, %v295
    %v336 = vpack.c.b16 %v300, %v296
    %v337 = vpack.c.b16 %v301, %v297
    %v338 = vpack.c.b16 %v306, %v302
    %v339 = vpack.c.b16 %v307, %v303
    %v340 = vpack.c.b16 %v308, %v304
    %v341 = vpack.c.b16 %v309, %v305
    %374 = vmatprep.subr.bf16.mxu0 %v311
    %375 = vmatpush1.bf16.msra.mxu0 %v310
    %376 = vmatprep.subr.bf16.mxu0 %v315
    %377 = vmatpush1.bf16.msra.mxu0 %v314
    %378 = vmatprep.subr.bf16.mxu0 %v319
    %379 = vmatpush1.bf16.msra.mxu0 %v318
    %380 = vmatprep.subr.bf16.mxu0 %v323
    %381 = vmatpush1.bf16.msra.mxu0 %v322
    %382 = vmatprep.subr.bf16.mxu0 %v327
    %383 = vmatpush1.bf16.msra.mxu0 %v326
    %384 = vmatprep.subr.bf16.mxu0 %v331
    %385 = vmatpush1.bf16.msra.mxu0 %v330
    %386 = vmatprep.subr.bf16.mxu0 %v335
    %387 = vmatpush1.bf16.msra.mxu0 %v334
    %388 = vmatprep.subr.bf16.mxu0 %v339
    %389 = vmatpush1.bf16.msra.mxu0 %v338
    %390 = vmatprep.subr.bf16.mxu0 0
    %391 = vmatpush1.bf16.msra.mxu0 0
    %392 = vmatprep.subr.bf16.mxu0 0
    %393 = vmatpush1.bf16.msra.mxu0 0
    %394 = vmatprep.subr.bf16.mxu0 0
    %395 = vmatpush1.bf16.msra.mxu0 0
    %396 = vmatprep.subr.bf16.mxu0 0
    %397 = vmatpush1.bf16.msra.mxu0 0
    %398 = vmatprep.subr.bf16.mxu0 0
    %399 = vmatpush1.bf16.msra.mxu0 0
    %400 = vmatprep.subr.bf16.mxu0 0
    %401 = vmatpush1.bf16.msra.mxu0 0
    %402 = vmatprep.subr.bf16.mxu0 0
    %403 = vmatpush1.bf16.msra.mxu0 0
    %404 = vmatprep.subr.bf16.mxu0 0
    %405 = vmatpush1.bf16.msra.mxu0 0
    %406 = vmatprep.mubr.bf16.mxu0 0
    %407 = vmatmul.mubr.bf16.gmra.mrb[0].mxu0 %v198
    %v408 = vpop.f32.mrb[0].mxu0
    %v409 = vadd.f32 %v149, %v408
    %v410 = vpop.f32.mrb[0].mxu0
    %v411 = vadd.f32 %v153, %v410
    %v412 = vpop.f32.mrb[0].mxu0
    %v413 = vadd.f32 %v149, %v412
    %v414 = vpop.f32.mrb[0].mxu0
    %v415 = vadd.f32 %v153, %v414
    %416 = vmatprep.mubr.bf16.mxu0 0
    %417 = vmatmul.mubr.bf16.gmra.mrb[0].mxu0 %v199
    %v418 = vpop.f32.mrb[0].mxu0
    %v419 = vadd.f32 %v149, %v418
    %v420 = vpop.f32.mrb[0].mxu0
    %v421 = vadd.f32 %v153, %v420
    %v422 = vpop.f32.mrb[0].mxu0
    %v423 = vadd.f32 %v149, %v422
    %v424 = vpop.f32.mrb[0].mxu0
    %v425 = vadd.f32 %v153, %v424
    %426 = vmatprep.mubr.bf16.mxu0 0
    %427 = vmatmul.mubr.bf16.gmra.mrb[0].mxu0 %v200
    %v428 = vpop.f32.mrb[0].mxu0
    %v429 = vadd.f32 %v149, %v428
    %v430 = vpop.f32.mrb[0].mxu0
    %v431 = vadd.f32 %v153, %v430
    %v432 = vpop.f32.mrb[0].mxu0
    %v433 = vadd.f32 %v149, %v432
    %v434 = vpop.f32.mrb[0].mxu0
    %v435 = vadd.f32 %v153, %v434
    %436 = vmatprep.mubr.bf16.mxu0 0
    %437 = vmatmul.mubr.bf16.gmra.mrb[0].mxu0 %v201
    %v438 = vpop.f32.mrb[0].mxu0
    %v439 = vadd.f32 %v149, %v438
    %v440 = vpop.f32.mrb[0].mxu0
    %v441 = vadd.f32 %v153, %v440
    %v442 = vpop.f32.mrb[0].mxu0
    %v443 = vadd.f32 %v149, %v442
    %v444 = vpop.f32.mrb[0].mxu0
    %v445 = vadd.f32 %v153, %v444
    %446 = vmatprep.mubr.bf16.mxu0 0
    %447 = vmatmul.mubr.bf16.gmra.mrb[0].mxu0 %v202
    %v448 = vpop.f32.mrb[0].mxu0
    %v449 = vadd.f32 %v149, %v448
    %v450 = vpop.f32.mrb[0].mxu0
    %v451 = vadd.f32 %v153, %v450
    %v452 = vpop.f32.mrb[0].mxu0
    %v453 = vadd.f32 %v149, %v452
    %v454 = vpop.f32.mrb[0].mxu0
    %v455 = vadd.f32 %v153, %v454
    %456 = vmatprep.mubr.bf16.mxu0 0
    %457 = vmatmul.mubr.bf16.gmra.mrb[0].mxu0 %v203
    %v458 = vpop.f32.mrb[0].mxu0
    %v459 = vadd.f32 %v149, %v458
    %v460 = vpop.f32.mrb[0].mxu0
    %v461 = vadd.f32 %v153, %v460
    %v462 = vpop.f32.mrb[0].mxu0
    %v463 = vadd.f32 %v149, %v462
    %v464 = vpop.f32.mrb[0].mxu0
    %v465 = vadd.f32 %v153, %v464
    %466 = vmatprep.mubr.bf16.mxu0 0
    %467 = vmatmul.mubr.bf16.gmra.mrb[0].mxu0 %v204
    %v468 = vpop.f32.mrb[0].mxu0
    %v469 = vadd.f32 %v149, %v468
    %v470 = vpop.f32.mrb[0].mxu0
    %v471 = vadd.f32 %v153, %v470
    %v472 = vpop.f32.mrb[0].mxu0
    %v473 = vadd.f32 %v149, %v472
    %v474 = vpop.f32.mrb[0].mxu0
    %v475 = vadd.f32 %v153, %v474
    %476 = vmatprep.mubr.bf16.mxu0 0
    %477 = vmatmul.mubr.bf16.gmra.mrb[0].mxu0 %v205
    %v478 = vpop.f32.mrb[0].mxu0
    %v479 = vadd.f32 %v149, %v478
    %v480 = vpop.f32.mrb[0].mxu0
    %v481 = vadd.f32 %v153, %v480
    %v482 = vpop.f32.mrb[0].mxu0
    %v483 = vadd.f32 %v149, %v482
    %v484 = vpop.f32.mrb[0].mxu0
    %v485 = vadd.f32 %v153, %v484
    %486 = vdwg.mxu0
    %487 = vmatprep.subr.bf16.mxu0 %v313
    %488 = vmatpush1.bf16.msra.mxu0 %v312
    %489 = vmatprep.subr.bf16.mxu0 %v317
    %490 = vmatpush1.bf16.msra.mxu0 %v316
    %491 = vmatprep.subr.bf16.mxu0 %v321
    %492 = vmatpush1.bf16.msra.mxu0 %v320
    %493 = vmatprep.subr.bf16.mxu0 %v325
    %494 = vmatpush1.bf16.msra.mxu0 %v324
    %495 = vmatprep.subr.bf16.mxu0 %v329
    %496 = vmatpush1.bf16.msra.mxu0 %v328
    %497 = vmatprep.subr.bf16.mxu0 %v333
    %498 = vmatpush1.bf16.msra.mxu0 %v332
    %499 = vmatprep.subr.bf16.mxu0 %v337
    %500 = vmatpush1.bf16.msra.mxu0 %v336
    %501 = vmatprep.subr.bf16.mxu0 %v341
    %502 = vmatpush1.bf16.msra.mxu0 %v340
    %503 = vmatprep.subr.bf16.mxu0 0
    %504 = vmatpush1.bf16.msra.mxu0 0
    %505 = vmatprep.subr.bf16.mxu0 0
    %506 = vmatpush1.bf16.msra.mxu0 0
    %507 = vmatprep.subr.bf16.mxu0 0
    %508 = vmatpush1.bf16.msra.mxu0 0
    %509 = vmatprep.subr.bf16.mxu0 0
    %510 = vmatpush1.bf16.msra.mxu0 0
    %511 = vmatprep.subr.bf16.mxu0 0
    %512 = vmatpush1.bf16.msra.mxu0 0
    %513 = vmatprep.subr.bf16.mxu0 0
    %514 = vmatpush1.bf16.msra.mxu0 0
    %515 = vmatprep.subr.bf16.mxu0 0
    %516 = vmatpush1.bf16.msra.mxu0 0
    %517 = vmatprep.subr.bf16.mxu0 0
    %518 = vmatpush1.bf16.msra.mxu0 0
    %519 = vmatprep.mubr.bf16.mxu0 0
    %520 = vmatmul.mubr.bf16.gmra.mrb[0].mxu0 %v198
    %v521 = vpop.f32.mrb[0].mxu0
    %v522 = vadd.f32 %v157, %v521
    %v523 = vpop.f32.mrb[0].mxu0
    %v524 = vadd.f32 %v161, %v523
    %v525 = vpop.f32.mrb[0].mxu0
    %v526 = vadd.f32 %v157, %v525
    %v527 = vpop.f32.mrb[0].mxu0
    %v528 = vadd.f32 %v161, %v527
    %529 = vmatprep.mubr.bf16.mxu0 0
    %530 = vmatmul.mubr.bf16.gmra.mrb[0].mxu0 %v199
    %v531 = vpop.f32.mrb[0].mxu0
    %v532 = vadd.f32 %v157, %v531
    %v533 = vpop.f32.mrb[0].mxu0
    %v534 = vadd.f32 %v161, %v533
    %v535 = vpop.f32.mrb[0].mxu0
    %v536 = vadd.f32 %v157, %v535
    %v537 = vpop.f32.mrb[0].mxu0
    %v538 = vadd.f32 %v161, %v537
    %539 = vmatprep.mubr.bf16.mxu0 0
    %540 = vmatmul.mubr.bf16.gmra.mrb[0].mxu0 %v200
    %v541 = vpop.f32.mrb[0].mxu0
    %v542 = vadd.f32 %v157, %v541
    %v543 = vpop.f32.mrb[0].mxu0
    %v544 = vadd.f32 %v161, %v543
    %v545 = vpop.f32.mrb[0].mxu0
    %v546 = vadd.f32 %v157, %v545
    %v547 = vpop.f32.mrb[0].mxu0
    %v548 = vadd.f32 %v161, %v547
    %549 = vmatprep.mubr.bf16.mxu0 0
    %550 = vmatmul.mubr.bf16.gmra.mrb[0].mxu0 %v201
    %v551 = vpop.f32.mrb[0].mxu0
    %v552 = vadd.f32 %v157, %v551
    %v553 = vpop.f32.mrb[0].mxu0
    %v554 = vadd.f32 %v161, %v553
    %v555 = vpop.f32.mrb[0].mxu0
    %v556 = vadd.f32 %v157, %v555
    %v557 = vpop.f32.mrb[0].mxu0
    %v558 = vadd.f32 %v161, %v557
    %559 = vmatprep.mubr.bf16.mxu0 0
    %560 = vmatmul.mubr.bf16.gmra.mrb[0].mxu0 %v202
    %v561 = vpop.f32.mrb[0].mxu0
    %v562 = vadd.f32 %v157, %v561
    %v563 = vpop.f32.mrb[0].mxu0
    %v564 = vadd.f32 %v161, %v563
    %v565 = vpop.f32.mrb[0].mxu0
    %v566 = vadd.f32 %v157, %v565
    %v567 = vpop.f32.mrb[0].mxu0
    %v568 = vadd.f32 %v161, %v567
    %569 = vmatprep.mubr.bf16.mxu0 0
    %570 = vmatmul.mubr.bf16.gmra.mrb[0].mxu0 %v203
    %v571 = vpop.f32.mrb[0].mxu0
    %v572 = vadd.f32 %v157, %v571
    %v573 = vpop.f32.mrb[0].mxu0
    %v574 = vadd.f32 %v161, %v573
    %v575 = vpop.f32.mrb[0].mxu0
    %v576 = vadd.f32 %v157, %v575
    %v577 = vpop.f32.mrb[0].mxu0
    %v578 = vadd.f32 %v161, %v577
    %579 = vmatprep.mubr.bf16.mxu0 0
    %580 = vmatmul.mubr.bf16.gmra.mrb[0].mxu0 %v204
    %v581 = vpop.f32.mrb[0].mxu0
    %v582 = vadd.f32 %v157, %v581
    %v583 = vpop.f32.mrb[0].mxu0
    %v584 = vadd.f32 %v161, %v583
    %v585 = vpop.f32.mrb[0].mxu0
    %v586 = vadd.f32 %v157, %v585
    %v587 = vpop.f32.mrb[0].mxu0
    %v588 = vadd.f32 %v161, %v587
    %589 = vmatprep.mubr.bf16.mxu0 0
    %590 = vmatmul.mubr.bf16.gmra.mrb[0].mxu0 %v205
    %v591 = vpop.f32.mrb[0].mxu0
    %v592 = vadd.f32 %v157, %v591
    %v593 = vpop.f32.mrb[0].mxu0
    %v594 = vadd.f32 %v161, %v593
    %v595 = vpop.f32.mrb[0].mxu0
    %v596 = vadd.f32 %v157, %v595
    %v597 = vpop.f32.mrb[0].mxu0
    %v598 = vadd.f32 %v161, %v597
    %599 = vdwg.mxu0
    %v600 = vpack.c.bf16 %v413, %v409
    %v601 = vpack.c.bf16 %v415, %v411
    %v602 = vpack.c.bf16 %v526, %v522
    %v603 = vpack.c.bf16 %v528, %v524
    %v604 = vpack.c.bf16 %v423, %v419
    %v605 = vpack.c.bf16 %v425, %v421
    %v606 = vpack.c.bf16 %v536, %v532
    %v607 = vpack.c.bf16 %v538, %v534
    %v608 = vpack.c.bf16 %v433, %v429
    %v609 = vpack.c.bf16 %v435, %v431
    %v610 = vpack.c.bf16 %v546, %v542
    %v611 = vpack.c.bf16 %v548, %v544
    %v612 = vpack.c.bf16 %v443, %v439
    %v613 = vpack.c.bf16 %v445, %v441
    %v614 = vpack.c.bf16 %v556, %v552
    %v615 = vpack.c.bf16 %v558, %v554
    %v616 = vpack.c.bf16 %v453, %v449
    %v617 = vpack.c.bf16 %v455, %v451
    %v618 = vpack.c.bf16 %v566, %v562
    %v619 = vpack.c.bf16 %v568, %v564
    %v620 = vpack.c.bf16 %v463, %v459
    %v621 = vpack.c.bf16 %v465, %v461
    %v622 = vpack.c.bf16 %v576, %v572
    %v623 = vpack.c.bf16 %v578, %v574
    %v624 = vpack.c.bf16 %v473, %v469
    %v625 = vpack.c.bf16 %v475, %v471
    %v626 = vpack.c.bf16 %v586, %v582
    %v627 = vpack.c.bf16 %v588, %v584
    %v628 = vpack.c.bf16 %v483, %v479
    %v629 = vpack.c.bf16 %v485, %v481
    %v630 = vpack.c.bf16 %v596, %v592
    %v631 = vpack.c.bf16 %v598, %v594
    %632 = vst [vmem:[#allocation4] sm:$0xff] %v600
    %633 = vst [vmem:[#allocation4 + $0x8] sm:$0xff] %v601
    %634 = vst [vmem:[#allocation4 + $0x10] sm:$0xff] %v602
    %635 = vst [vmem:[#allocation4 + $0x18] sm:$0xff] %v603
    %636 = vst [vmem:[#allocation4 + $0x20] sm:$0xff] %v604
    %637 = vst [vmem:[#allocation4 + $0x28] sm:$0xff] %v605
    %638 = vst [vmem:[#allocation4 + $0x30] sm:$0xff] %v606
    %639 = vst [vmem:[#allocation4 + $0x38] sm:$0xff] %v607
    %640 = vst [vmem:[#allocation4 + $0x40] sm:$0xff] %v608
    %641 = vst [vmem:[#allocation4 + $0x48] sm:$0xff] %v609
    %642 = vst [vmem:[#allocation4 + $0x50] sm:$0xff] %v610
    %643 = vst [vmem:[#allocation4 + $0x58] sm:$0xff] %v611
    %644 = vst [vmem:[#allocation4 + $0x60] sm:$0xff] %v612
    %645 = vst [vmem:[#allocation4 + $0x68] sm:$0xff] %v613
    %646 = vst [vmem:[#allocation4 + $0x70] sm:$0xff] %v614
    %647 = vst [vmem:[#allocation4 + $0x78] sm:$0xff] %v615
    %648 = vst [vmem:[#allocation4 + $0x80] sm:$0xff] %v616
    %649 = vst [vmem:[#allocation4 + $0x88] sm:$0xff] %v617
    %650 = vst [vmem:[#allocation4 + $0x90] sm:$0xff] %v618
    %651 = vst [vmem:[#allocation4 + $0x98] sm:$0xff] %v619
    %652 = vst [vmem:[#allocation4 + $0xa0] sm:$0xff] %v620
    %653 = vst [vmem:[#allocation4 + $0xa8] sm:$0xff] %v621
    %654 = vst [vmem:[#allocation4 + $0xb0] sm:$0xff] %v622
    %655 = vst [vmem:[#allocation4 + $0xb8] sm:$0xff] %v623
    %656 = vst [vmem:[#allocation4 + $0xc0] sm:$0xff] %v624
    %657 = vst [vmem:[#allocation4 + $0xc8] sm:$0xff] %v625
    %658 = vst [vmem:[#allocation4 + $0xd0] sm:$0xff] %v626
    %659 = vst [vmem:[#allocation4 + $0xd8] sm:$0xff] %v627
    %660 = vst [vmem:[#allocation4 + $0xe0] sm:$0xff] %v628
    %661 = vst [vmem:[#allocation4 + $0xe8] sm:$0xff] %v629
    %662 = vst [vmem:[#allocation4 + $0xf0] sm:$0xff] %v630
    %663 = vst [vmem:[#allocation4 + $0xf8] sm:$0xff] %v631
    %s664 = smul.u32 0, 4
    %s665 = smul.addr %s664, 8
    %s666 = scalar_lea.vmem [#allocation4], %s665
    %v667 = vld [vmem:[%s666] sm:$0xff]
    %v668 = vld [vmem:[%s666 + $0x8] sm:$0xff]
    %v669 = vld [vmem:[%s666 + $0x10] sm:$0xff]
    %v670 = vld [vmem:[%s666 + $0x18] sm:$0xff]
    %v671 = vunpack.c.l.bf16 %v667
    %v672 = vunpack.c.l.bf16 %v668
    %v673 = vunpack.c.l.bf16 %v669
    %v674 = vunpack.c.l.bf16 %v670
    %v675 = vunpack.c.h.bf16 %v667
    %v676 = vunpack.c.h.bf16 %v668
    %v677 = vunpack.c.h.bf16 %v669
    %v678 = vunpack.c.h.bf16 %v670
    %v679 = vld [vmem:[#allocation10] sm:$0xff]
    %v680 = vld [vmem:[#allocation10 + $0x8] sm:$0xff]
    %v681 = vld [vmem:[#allocation10 + $0x10] sm:$0xff]
    %v682 = vld [vmem:[#allocation10 + $0x18] sm:$0xff]
    %v683 = vld [vmem:[#allocation10 + $0x20] sm:$0xff]
    %v684 = vld [vmem:[#allocation10 + $0x28] sm:$0xff]
    %v685 = vld [vmem:[#allocation10 + $0x30] sm:$0xff]
    %v686 = vld [vmem:[#allocation10 + $0x38] sm:$0xff]
    %v687 = vld [vmem:[#allocation10 + $0x40] sm:$0xff]
    %v688 = vld [vmem:[#allocation10 + $0x48] sm:$0xff]
    %v689 = vld [vmem:[#allocation10 + $0x50] sm:$0xff]
    %v690 = vld [vmem:[#allocation10 + $0x58] sm:$0xff]
    %v691 = vld [vmem:[#allocation10 + $0x60] sm:$0xff]
    %v692 = vld [vmem:[#allocation10 + $0x68] sm:$0xff]
    %v693 = vld [vmem:[#allocation10 + $0x70] sm:$0xff]
    %v694 = vld [vmem:[#allocation10 + $0x78] sm:$0xff]
    %v695 = vld [vmem:[#allocation10 + $0x80] sm:$0xff]
    %v696 = vld [vmem:[#allocation10 + $0x88] sm:$0xff]
    %v697 = vld [vmem:[#allocation10 + $0x90] sm:$0xff]
    %v698 = vld [vmem:[#allocation10 + $0x98] sm:$0xff]
    %v699 = vld [vmem:[#allocation10 + $0xa0] sm:$0xff]
    %v700 = vld [vmem:[#allocation10 + $0xa8] sm:$0xff]
    %v701 = vld [vmem:[#allocation10 + $0xb0] sm:$0xff]
    %v702 = vld [vmem:[#allocation10 + $0xb8] sm:$0xff]
    %v703 = vld [vmem:[#allocation10 + $0xc0] sm:$0xff]
    %v704 = vld [vmem:[#allocation10 + $0xc8] sm:$0xff]
    %v705 = vld [vmem:[#allocation10 + $0xd0] sm:$0xff]
    %v706 = vld [vmem:[#allocation10 + $0xd8] sm:$0xff]
    %v707 = vld [vmem:[#allocation10 + $0xe0] sm:$0xff]
    %v708 = vld [vmem:[#allocation10 + $0xe8] sm:$0xff]
    %v709 = vld [vmem:[#allocation10 + $0xf0] sm:$0xff]
    %v710 = vld [vmem:[#allocation10 + $0xf8] sm:$0xff]
    %v743 = vunpack.c.l.b16 %v679
    %v744 = vunpack.c.h.b16 %v679
    %v745 = vunpack.c.l.b16 %v680
    %v746 = vunpack.c.h.b16 %v680
    %v747 = vunpack.c.l.b16 %v681
    %v748 = vunpack.c.h.b16 %v681
    %v749 = vunpack.c.l.b16 %v682
    %v750 = vunpack.c.h.b16 %v682
    %v751 = vunpack.c.l.b16 %v683
    %v752 = vunpack.c.h.b16 %v683
    %v753 = vunpack.c.l.b16 %v684
    %v754 = vunpack.c.h.b16 %v684
    %v755 = vunpack.c.l.b16 %v685
    %v756 = vunpack.c.h.b16 %v685
    %v757 = vunpack.c.l.b16 %v686
    %v758 = vunpack.c.h.b16 %v686
    %v759 = vunpack.c.l.b16 %v687
    %v760 = vunpack.c.h.b16 %v687
    %v761 = vunpack.c.l.b16 %v688
    %v762 = vunpack.c.h.b16 %v688
    %v763 = vunpack.c.l.b16 %v689
    %v764 = vunpack.c.h.b16 %v689
    %v765 = vunpack.c.l.b16 %v690
    %v766 = vunpack.c.h.b16 %v690
    %v767 = vunpack.c.l.b16 %v691
    %v768 = vunpack.c.h.b16 %v691
    %v769 = vunpack.c.l.b16 %v692
    %v770 = vunpack.c.h.b16 %v692
    %v771 = vunpack.c.l.b16 %v693
    %v772 = vunpack.c.h.b16 %v693
    %v773 = vunpack.c.l.b16 %v694
    %v774 = vunpack.c.h.b16 %v694
    %v775 = vunpack.c.l.b16 %v695
    %v776 = vunpack.c.h.b16 %v695
    %v777 = vunpack.c.l.b16 %v696
    %v778 = vunpack.c.h.b16 %v696
    %v779 = vunpack.c.l.b16 %v697
    %v780 = vunpack.c.h.b16 %v697
    %v781 = vunpack.c.l.b16 %v698
    %v782 = vunpack.c.h.b16 %v698
    %v783 = vunpack.c.l.b16 %v699
    %v784 = vunpack.c.h.b16 %v699
    %v785 = vunpack.c.l.b16 %v700
    %v786 = vunpack.c.h.b16 %v700
    %v787 = vunpack.c.l.b16 %v701
    %v788 = vunpack.c.h.b16 %v701
    %v789 = vunpack.c.l.b16 %v702
    %v790 = vunpack.c.h.b16 %v702
    %v791 = vunpack.c.l.b16 %v703
    %v792 = vunpack.c.h.b16 %v703
    %v793 = vunpack.c.l.b16 %v704
    %v794 = vunpack.c.h.b16 %v704
    %v795 = vunpack.c.l.b16 %v705
    %v796 = vunpack.c.h.b16 %v705
    %v797 = vunpack.c.l.b16 %v706
    %v798 = vunpack.c.h.b16 %v706
    %v799 = vunpack.c.l.b16 %v707
    %v800 = vunpack.c.h.b16 %v707
    %v801 = vunpack.c.l.b16 %v708
    %v802 = vunpack.c.h.b16 %v708
    %v803 = vunpack.c.l.b16 %v709
    %v804 = vunpack.c.h.b16 %v709
    %v805 = vunpack.c.l.b16 %v710
    %v806 = vunpack.c.h.b16 %v710
    %v807 = vpack.c.b16 %v747, %v743
    %v808 = vpack.c.b16 %v748, %v744
    %v809 = vpack.c.b16 %v749, %v745
    %v810 = vpack.c.b16 %v750, %v746
    %v811 = vpack.c.b16 %v755, %v751
    %v812 = vpack.c.b16 %v756, %v752
    %v813 = vpack.c.b16 %v757, %v753
    %v814 = vpack.c.b16 %v758, %v754
    %v815 = vpack.c.b16 %v763, %v759
    %v816 = vpack.c.b16 %v764, %v760
    %v817 = vpack.c.b16 %v765, %v761
    %v818 = vpack.c.b16 %v766, %v762
    %v819 = vpack.c.b16 %v771, %v767
    %v820 = vpack.c.b16 %v772, %v768
    %v821 = vpack.c.b16 %v773, %v769
    %v822 = vpack.c.b16 %v774, %v770
    %v823 = vpack.c.b16 %v779, %v775
    %v824 = vpack.c.b16 %v780, %v776
    %v825 = vpack.c.b16 %v781, %v777
    %v826 = vpack.c.b16 %v782, %v778
    %v827 = vpack.c.b16 %v787, %v783
    %v828 = vpack.c.b16 %v788, %v784
    %v829 = vpack.c.b16 %v789, %v785
    %v830 = vpack.c.b16 %v790, %v786
    %v831 = vpack.c.b16 %v795, %v791
    %v832 = vpack.c.b16 %v796, %v792
    %v833 = vpack.c.b16 %v797, %v793
    %v834 = vpack.c.b16 %v798, %v794
    %v835 = vpack.c.b16 %v803, %v799
    %v836 = vpack.c.b16 %v804, %v800
    %v837 = vpack.c.b16 %v805, %v801
    %v838 = vpack.c.b16 %v806, %v802
    %871 = vmatprep.subr.bf16.mxu0 %v808
    %872 = vmatpush1.bf16.msra.mxu0 %v807
    %873 = vmatprep.subr.bf16.mxu0 %v812
    %874 = vmatpush1.bf16.msra.mxu0 %v811
    %875 = vmatprep.subr.bf16.mxu0 %v816
    %876 = vmatpush1.bf16.msra.mxu0 %v815
    %877 = vmatprep.subr.bf16.mxu0 %v820
    %878 = vmatpush1.bf16.msra.mxu0 %v819
    %879 = vmatprep.subr.bf16.mxu0 %v824
    %880 = vmatpush1.bf16.msra.mxu0 %v823
    %881 = vmatprep.subr.bf16.mxu0 %v828
    %882 = vmatpush1.bf16.msra.mxu0 %v827
    %883 = vmatprep.subr.bf16.mxu0 %v832
    %884 = vmatpush1.bf16.msra.mxu0 %v831
    %885 = vmatprep.subr.bf16.mxu0 %v836
    %886 = vmatpush1.bf16.msra.mxu0 %v835
    %887 = vmatprep.subr.bf16.mxu0 0
    %888 = vmatpush1.bf16.msra.mxu0 0
    %889 = vmatprep.subr.bf16.mxu0 0
    %890 = vmatpush1.bf16.msra.mxu0 0
    %891 = vmatprep.subr.bf16.mxu0 0
    %892 = vmatpush1.bf16.msra.mxu0 0
    %893 = vmatprep.subr.bf16.mxu0 0
    %894 = vmatpush1.bf16.msra.mxu0 0
    %895 = vmatprep.subr.bf16.mxu0 0
    %896 = vmatpush1.bf16.msra.mxu0 0
    %897 = vmatprep.subr.bf16.mxu0 0
    %898 = vmatpush1.bf16.msra.mxu0 0
    %899 = vmatprep.subr.bf16.mxu0 0
    %900 = vmatpush1.bf16.msra.mxu0 0
    %901 = vmatprep.subr.bf16.mxu0 0
    %902 = vmatpush1.bf16.msra.mxu0 0
    %903 = vmatprep.mubr.bf16.mxu0 0
    %904 = vmatmul.mubr.bf16.gmra.mrb[0].mxu0 0
    %v905 = vpop.f32.mrb[0].mxu0
    %v906 = vadd.f32 0.0, %v905
    %v907 = vpop.f32.mrb[0].mxu0
    %v908 = vadd.f32 0.0, %v907
    %v909 = vpop.f32.mrb[0].mxu0
    %v910 = vadd.f32 0.0, %v909
    %v911 = vpop.f32.mrb[0].mxu0
    %v912 = vadd.f32 0.0, %v911
    %913 = vdwg.mxu0
    %914 = vmatprep.subr.bf16.mxu0 %v810
    %915 = vmatpush1.bf16.msra.mxu0 %v809
    %916 = vmatprep.subr.bf16.mxu0 %v814
    %917 = vmatpush1.bf16.msra.mxu0 %v813
    %918 = vmatprep.subr.bf16.mxu0 %v818
    %919 = vmatpush1.bf16.msra.mxu0 %v817
    %920 = vmatprep.subr.bf16.mxu0 %v822
    %921 = vmatpush1.bf16.msra.mxu0 %v821
    %922 = vmatprep.subr.bf16.mxu0 %v826
    %923 = vmatpush1.bf16.msra.mxu0 %v825
    %924 = vmatprep.subr.bf16.mxu0 %v830
    %925 = vmatpush1.bf16.msra.mxu0 %v829
    %926 = vmatprep.subr.bf16.mxu0 %v834
    %927 = vmatpush1.bf16.msra.mxu0 %v833
    %928 = vmatprep.subr.bf16.mxu0 %v838
    %929 = vmatpush1.bf16.msra.mxu0 %v837
    %930 = vmatprep.subr.bf16.mxu0 0
    %931 = vmatpush1.bf16.msra.mxu0 0
    %932 = vmatprep.subr.bf16.mxu0 0
    %933 = vmatpush1.bf16.msra.mxu0 0
    %934 = vmatprep.subr.bf16.mxu0 0
    %935 = vmatpush1.bf16.msra.mxu0 0
    %936 = vmatprep.subr.bf16.mxu0 0
    %937 = vmatpush1.bf16.msra.mxu0 0
    %938 = vmatprep.subr.bf16.mxu0 0
    %939 = vmatpush1.bf16.msra.mxu0 0
    %940 = vmatprep.subr.bf16.mxu0 0
    %941 = vmatpush1.bf16.msra.mxu0 0
    %942 = vmatprep.subr.bf16.mxu0 0
    %943 = vmatpush1.bf16.msra.mxu0 0
    %944 = vmatprep.subr.bf16.mxu0 0
    %945 = vmatpush1.bf16.msra.mxu0 0
    %946 = vmatprep.mubr.bf16.mxu0 0
    %947 = vmatmul.mubr.bf16.gmra.mrb[0].mxu0 0
    %v948 = vpop.f32.mrb[0].mxu0
    %v949 = vadd.f32 0.0, %v948
    %v950 = vpop.f32.mrb[0].mxu0
    %v951 = vadd.f32 0.0, %v950
    %v952 = vpop.f32.mrb[0].mxu0
    %v953 = vadd.f32 0.0, %v952
    %v954 = vpop.f32.mrb[0].mxu0
    %v955 = vadd.f32 0.0, %v954
    %956 = vdwg.mxu0
    %v957 = vadd.f32 %v671, %v906
    %v958 = vadd.f32 %v672, %v908
    %v959 = vadd.f32 %v673, %v949
    %v960 = vadd.f32 %v674, %v951
    %v961 = vadd.f32 %v675, %v910
    %v962 = vadd.f32 %v676, %v912
    %v963 = vadd.f32 %v677, %v953
    %v964 = vadd.f32 %v678, %v955
    %v965 = vxor.u32 %v957, 2147483648
    %v966 = vxor.u32 %v961, 2147483648
    %v967 = vmul.f32 %v965, 1.442695
    %v968 = vpow.pop %v967
    %v969 = vmul.f32 %v966, 1.442695
    %v970 = vpow.pop %v969
    %v971 = vadd.f32 %v968, 1.0
    %v972 = vadd.f32 %v970, 1.0
    %v973 = vrcp.pop %v971
    %v974 = vmul.f32 1.0, %v973
    %v975 = vrcp.pop %v972
    %v976 = vmul.f32 1.0, %v975
    %v977 = vxor.u32 %v958, 2147483648
    %v978 = vxor.u32 %v962, 2147483648
    %v979 = vmul.f32 %v977, 1.442695
    %v980 = vpow.pop %v979
    %v981 = vmul.f32 %v978, 1.442695
    %v982 = vpow.pop %v981
    %v983 = vadd.f32 %v980, 1.0
    %v984 = vadd.f32 %v982, 1.0
    %v985 = vrcp.pop %v983
    %v986 = vmul.f32 1.0, %v985
    %v987 = vrcp.pop %v984
    %v988 = vmul.f32 1.0, %v987
    %v989 = vtanh.pop %v959
    %v990 = vtanh.pop %v963
    %v991 = vxor.u32 %v960, 2147483648
    %v992 = vxor.u32 %v964, 2147483648
    %v993 = vmul.f32 %v991, 1.442695
    %v994 = vpow.pop %v993
    %v995 = vmul.f32 %v992, 1.442695
    %v996 = vpow.pop %v995
    %v997 = vadd.f32 %v994, 1.0
    %v998 = vadd.f32 %v996, 1.0
    %v999 = vrcp.pop %v997
    %v1000 = vmul.f32 1.0, %v999
    %v1001 = vrcp.pop %v998
    %v1002 = vmul.f32 1.0, %v1001
    %v1003 = vmul.f32 %v986, 0.0
    %v1004 = vmul.f32 %v988, 0.0
    %v1005 = vmul.f32 %v974, %v989
    %v1006 = vmul.f32 %v976, %v990
    %v1007 = vadd.f32 %v1003, %v1005
    %v1008 = vadd.f32 %v1004, %v1006
    %v1009 = vtanh.pop %v1007
    %v1010 = vtanh.pop %v1008
    %v1011 = vmul.f32 %v1000, %v1009
    %v1012 = vmul.f32 %v1002, %v1010
    %v1013 = vpack.c.bf16 %v1012, %v1011
    %1014 = vst [vmem:[#allocation2] sm:$0xff] %v1013
    %s1015 = smul.u32 1, 4
    %s1016 = smul.addr %s1015, 8
    %s1017 = scalar_lea.vmem [#allocation4], %s1016
    %v1018 = vld [vmem:[%s1017] sm:$0xff]
    %v1019 = vld [vmem:[%s1017 + $0x8] sm:$0xff]
    %v1020 = vld [vmem:[%s1017 + $0x10] sm:$0xff]
    %v1021 = vld [vmem:[%s1017 + $0x18] sm:$0xff]
    %v1022 = vunpack.c.l.bf16 %v1018
    %v1023 = vunpack.c.l.bf16 %v1019
    %v1024 = vunpack.c.l.bf16 %v1020
    %v1025 = vunpack.c.l.bf16 %v1021
    %v1026 = vunpack.c.h.bf16 %v1018
    %v1027 = vunpack.c.h.bf16 %v1019
    %v1028 = vunpack.c.h.bf16 %v1020
    %v1029 = vunpack.c.h.bf16 %v1021
    %v1030 = vld [vmem:[#allocation10] sm:$0xff]
    %v1031 = vld [vmem:[#allocation10 + $0x8] sm:$0xff]
    %v1032 = vld [vmem:[#allocation10 + $0x10] sm:$0xff]
    %v1033 = vld [vmem:[#allocation10 + $0x18] sm:$0xff]
    %v1034 = vld [vmem:[#allocation10 + $0x20] sm:$0xff]
    %v1035 = vld [vmem:[#allocation10 + $0x28] sm:$0xff]
    %v1036 = vld [vmem:[#allocation10 + $0x30] sm:$0xff]
    %v1037 = vld [vmem:[#allocation10 + $0x38] sm:$0xff]
    %v1038 = vld [vmem:[#allocation10 + $0x40] sm:$0xff]
    %v1039 = vld [vmem:[#allocation10 + $0x48] sm:$0xff]
    %v1040 = vld [vmem:[#allocation10 + $0x50] sm:$0xff]
    %v1041 = vld [vmem:[#allocation10 + $0x58] sm:$0xff]
    %v1042 = vld [vmem:[#allocation10 + $0x60] sm:$0xff]
    %v1043 = vld [vmem:[#allocation10 + $0x68] sm:$0xff]
    %v1044 = vld [vmem:[#allocation10 + $0x70] sm:$0xff]
    %v1045 = vld [vmem:[#allocation10 + $0x78] sm:$0xff]
    %v1046 = vld [vmem:[#allocation10 + $0x80] sm:$0xff]
    %v1047 = vld [vmem:[#allocation10 + $0x88] sm:$0xff]
    %v1048 = vld [vmem:[#allocation10 + $0x90] sm:$0xff]
    %v1049 = vld [vmem:[#allocation10 + $0x98] sm:$0xff]
    %v1050 = vld [vmem:[#allocation10 + $0xa0] sm:$0xff]
    %v1051 = vld [vmem:[#allocation10 + $0xa8] sm:$0xff]
    %v1052 = vld [vmem:[#allocation10 + $0xb0] sm:$0xff]
    %v1053 = vld [vmem:[#allocation10 + $0xb8] sm:$0xff]
    %v1054 = vld [vmem:[#allocation10 + $0xc0] sm:$0xff]
    %v1055 = vld [vmem:[#allocation10 + $0xc8] sm:$0xff]
    %v1056 = vld [vmem:[#allocation10 + $0xd0] sm:$0xff]
    %v1057 = vld [vmem:[#allocation10 + $0xd8] sm:$0xff]
    %v1058 = vld [vmem:[#allocation10 + $0xe0] sm:$0xff]
    %v1059 = vld [vmem:[#allocation10 + $0xe8] sm:$0xff]
    %v1060 = vld [vmem:[#allocation10 + $0xf0] sm:$0xff]
    %v1061 = vld [vmem:[#allocation10 + $0xf8] sm:$0xff]
    %v1094 = vunpack.c.l.b16 %v1030
    %v1095 = vunpack.c.h.b16 %v1030
    %v1096 = vunpack.c.l.b16 %v1031
    %v1097 = vunpack.c.h.b16 %v1031
    %v1098 = vunpack.c.l.b16 %v1032
    %v1099 = vunpack.c.h.b16 %v1032
    %v1100 = vunpack.c.l.b16 %v1033
    %v1101 = vunpack.c.h.b16 %v1033
    %v1102 = vunpack.c.l.b16 %v1034
    %v1103 = vunpack.c.h.b16 %v1034
    %v1104 = vunpack.c.l.b16 %v1035
    %v1105 = vunpack.c.h.b16 %v1035
    %v1106 = vunpack.c.l.b16 %v1036
    %v1107 = vunpack.c.h.b16 %v1036
    %v1108 = vunpack.c.l.b16 %v1037
    %v1109 = vunpack.c.h.b16 %v1037
    %v1110 = vunpack.c.l.b16 %v1038
    %v1111 = vunpack.c.h.b16 %v1038
    %v1112 = vunpack.c.l.b16 %v1039
    %v1113 = vunpack.c.h.b16 %v1039
    %v1114 = vunpack.c.l.b16 %v1040
    %v1115 = vunpack.c.h.b16 %v1040
    %v1116 = vunpack.c.l.b16 %v1041
    %v1117 = vunpack.c.h.b16 %v1041
    %v1118 = vunpack.c.l.b16 %v1042
    %v1119 = vunpack.c.h.b16 %v1042
    %v1120 = vunpack.c.l.b16 %v1043
    %v1121 = vunpack.c.h.b16 %v1043
    %v1122 = vunpack.c.l.b16 %v1044
    %v1123 = vunpack.c.h.b16 %v1044
    %v1124 = vunpack.c.l.b16 %v1045
    %v1125 = vunpack.c.h.b16 %v1045
    %v1126 = vunpack.c.l.b16 %v1046
    %v1127 = vunpack.c.h.b16 %v1046
    %v1128 = vunpack.c.l.b16 %v1047
    %v1129 = vunpack.c.h.b16 %v1047
    %v1130 = vunpack.c.l.b16 %v1048
    %v1131 = vunpack.c.h.b16 %v1048
    %v1132 = vunpack.c.l.b16 %v1049
    %v1133 = vunpack.c.h.b16 %v1049
    %v1134 = vunpack.c.l.b16 %v1050
    %v1135 = vunpack.c.h.b16 %v1050
    %v1136 = vunpack.c.l.b16 %v1051
    %v1137 = vunpack.c.h.b16 %v1051
    %v1138 = vunpack.c.l.b16 %v1052
    %v1139 = vunpack.c.h.b16 %v1052
    %v1140 = vunpack.c.l.b16 %v1053
    %v1141 = vunpack.c.h.b16 %v1053
    %v1142 = vunpack.c.l.b16 %v1054
    %v1143 = vunpack.c.h.b16 %v1054
    %v1144 = vunpack.c.l.b16 %v1055
    %v1145 = vunpack.c.h.b16 %v1055
    %v1146 = vunpack.c.l.b16 %v1056
    %v1147 = vunpack.c.h.b16 %v1056
    %v1148 = vunpack.c.l.b16 %v1057
    %v1149 = vunpack.c.h.b16 %v1057
    %v1150 = vunpack.c.l.b16 %v1058
    %v1151 = vunpack.c.h.b16 %v1058
    %v1152 = vunpack.c.l.b16 %v1059
    %v1153 = vunpack.c.h.b16 %v1059
    %v1154 = vunpack.c.l.b16 %v1060
    %v1155 = vunpack.c.h.b16 %v1060
    %v1156 = vunpack.c.l.b16 %v1061
    %v1157 = vunpack.c.h.b16 %v1061
    %v1158 = vpack.c.b16 %v1098, %v1094
    %v1159 = vpack.c.b16 %v1099, %v1095
    %v1160 = vpack.c.b16 %v1100, %v1096
    %v1161 = vpack.c.b16 %v1101, %v1097
    %v1162 = vpack.c.b16 %v1106, %v1102
    %v1163 = vpack.c.b16 %v1107, %v1103
    %v1164 = vpack.c.b16 %v1108, %v1104
    %v1165 = vpack.c.b16 %v1109, %v1105
    %v1166 = vpack.c.b16 %v1114, %v1110
    %v1167 = vpack.c.b16 %v1115, %v1111
    %v1168 = vpack.c.b16 %v1116, %v1112
    %v1169 = vpack.c.b16 %v1117, %v1113
    %v1170 = vpack.c.b16 %v1122, %v1118
    %v1171 = vpack.c.b16 %v1123, %v1119
    %v1172 = vpack.c.b16 %v1124, %v1120
    %v1173 = vpack.c.b16 %v1125, %v1121
    %v1174 = vpack.c.b16 %v1130, %v1126
    %v1175 = vpack.c.b16 %v1131, %v1127
    %v1176 = vpack.c.b16 %v1132, %v1128
    %v1177 = vpack.c.b16 %v1133, %v1129
    %v1178 = vpack.c.b16 %v1138, %v1134
    %v1179 = vpack.c.b16 %v1139, %v1135
    %v1180 = vpack.c.b16 %v1140, %v1136
    %v1181 = vpack.c.b16 %v1141, %v1137
    %v1182 = vpack.c.b16 %v1146, %v1142
    %v1183 = vpack.c.b16 %v1147, %v1143
    %v1184 = vpack.c.b16 %v1148, %v1144
    %v1185 = vpack.c.b16 %v1149, %v1145
    %v1186 = vpack.c.b16 %v1154, %v1150
    %v1187 = vpack.c.b16 %v1155, %v1151
    %v1188 = vpack.c.b16 %v1156, %v1152
    %v1189 = vpack.c.b16 %v1157, %v1153
    %1222 = vmatprep.subr.bf16.mxu0 %v1159
    %1223 = vmatpush1.bf16.msra.mxu0 %v1158
    %1224 = vmatprep.subr.bf16.mxu0 %v1163
    %1225 = vmatpush1.bf16.msra.mxu0 %v1162
    %1226 = vmatprep.subr.bf16.mxu0 %v1167
    %1227 = vmatpush1.bf16.msra.mxu0 %v1166
    %1228 = vmatprep.subr.bf16.mxu0 %v1171
    %1229 = vmatpush1.bf16.msra.mxu0 %v1170
    %1230 = vmatprep.subr.bf16.mxu0 %v1175
    %1231 = vmatpush1.bf16.msra.mxu0 %v1174
    %1232 = vmatprep.subr.bf16.mxu0 %v1179
    %1233 = vmatpush1.bf16.msra.mxu0 %v1178
    %1234 = vmatprep.subr.bf16.mxu0 %v1183
    %1235 = vmatpush1.bf16.msra.mxu0 %v1182
    %1236 = vmatprep.subr.bf16.mxu0 %v1187
    %1237 = vmatpush1.bf16.msra.mxu0 %v1186
    %1238 = vmatprep.subr.bf16.mxu0 0
    %1239 = vmatpush1.bf16.msra.mxu0 0
    %1240 = vmatprep.subr.bf16.mxu0 0
    %1241 = vmatpush1.bf16.msra.mxu0 0
    %1242 = vmatprep.subr.bf16.mxu0 0
    %1243 = vmatpush1.bf16.msra.mxu0 0
    %1244 = vmatprep.subr.bf16.mxu0 0
    %1245 = vmatpush1.bf16.msra.mxu0 0
    %1246 = vmatprep.subr.bf16.mxu0 0
    %1247 = vmatpush1.bf16.msra.mxu0 0
    %1248 = vmatprep.subr.bf16.mxu0 0
    %1249 = vmatpush1.bf16.msra.mxu0 0
    %1250 = vmatprep.subr.bf16.mxu0 0
    %1251 = vmatpush1.bf16.msra.mxu0 0
    %1252 = vmatprep.subr.bf16.mxu0 0
    %1253 = vmatpush1.bf16.msra.mxu0 0
    %1254 = vmatprep.mubr.bf16.mxu0 0
    %1255 = vmatmul.mubr.bf16.gmra.mrb[0].mxu0 %v1013
    %v1256 = vpop.f32.mrb[0].mxu0
    %v1257 = vadd.f32 0.0, %v1256
    %v1258 = vpop.f32.mrb[0].mxu0
    %v1259 = vadd.f32 0.0, %v1258
    %v1260 = vpop.f32.mrb[0].mxu0
    %v1261 = vadd.f32 0.0, %v1260
    %v1262 = vpop.f32.mrb[0].mxu0
    %v1263 = vadd.f32 0.0, %v1262
    %1264 = vdwg.mxu0
    %1265 = vmatprep.subr.bf16.mxu0 %v1161
    %1266 = vmatpush1.bf16.msra.mxu0 %v1160
    %1267 = vmatprep.subr.bf16.mxu0 %v1165
    %1268 = vmatpush1.bf16.msra.mxu0 %v1164
    %1269 = vmatprep.subr.bf16.mxu0 %v1169
    %1270 = vmatpush1.bf16.msra.mxu0 %v1168
    %1271 = vmatprep.subr.bf16.mxu0 %v1173
    %1272 = vmatpush1.bf16.msra.mxu0 %v1172
    %1273 = vmatprep.subr.bf16.mxu0 %v1177
    %1274 = vmatpush1.bf16.msra.mxu0 %v1176
    %1275 = vmatprep.subr.bf16.mxu0 %v1181
    %1276 = vmatpush1.bf16.msra.mxu0 %v1180
    %1277 = vmatprep.subr.bf16.mxu0 %v1185
    %1278 = vmatpush1.bf16.msra.mxu0 %v1184
    %1279 = vmatprep.subr.bf16.mxu0 %v1189
    %1280 = vmatpush1.bf16.msra.mxu0 %v1188
    %1281 = vmatprep.subr.bf16.mxu0 0
    %1282 = vmatpush1.bf16.msra.mxu0 0
    %1283 = vmatprep.subr.bf16.mxu0 0
    %1284 = vmatpush1.bf16.msra.mxu0 0
    %1285 = vmatprep.subr.bf16.mxu0 0
    %1286 = vmatpush1.bf16.msra.mxu0 0
    %1287 = vmatprep.subr.bf16.mxu0 0
    %1288 = vmatpush1.bf16.msra.mxu0 0
    %1289 = vmatprep.subr.bf16.mxu0 0
    %1290 = vmatpush1.bf16.msra.mxu0 0
    %1291 = vmatprep.subr.bf16.mxu0 0
    %1292 = vmatpush1.bf16.msra.mxu0 0
    %1293 = vmatprep.subr.bf16.mxu0 0
    %1294 = vmatpush1.bf16.msra.mxu0 0
    %1295 = vmatprep.subr.bf16.mxu0 0
    %1296 = vmatpush1.bf16.msra.mxu0 0
    %1297 = vmatprep.mubr.bf16.mxu0 0
    %1298 = vmatmul.mubr.bf16.gmra.mrb[0].mxu0 %v1013
    %v1299 = vpop.f32.mrb[0].mxu0
    %v1300 = vadd.f32 0.0, %v1299
    %v1301 = vpop.f32.mrb[0].mxu0
    %v1302 = vadd.f32 0.0, %v1301
    %v1303 = vpop.f32.mrb[0].mxu0
    %v1304 = vadd.f32 0.0, %v1303
    %v1305 = vpop.f32.mrb[0].mxu0
    %v1306 = vadd.f32 0.0, %v1305
    %1307 = vdwg.mxu0
    %v1308 = vadd.f32 %v1022, %v1257
    %v1309 = vadd.f32 %v1023, %v1259
    %v1310 = vadd.f32 %v1024, %v1300
    %v1311 = vadd.f32 %v1025, %v1302
    %v1312 = vadd.f32 %v1026, %v1261
    %v1313 = vadd.f32 %v1027, %v1263
    %v1314 = vadd.f32 %v1028, %v1304
    %v1315 = vadd.f32 %v1029, %v1306
    %v1316 = vxor.u32 %v1308, 2147483648
    %v1317 = vxor.u32 %v1312, 2147483648
    %v1318 = vmul.f32 %v1316, 1.442695
    %v1319 = vpow.pop %v1318
    %v1320 = vmul.f32 %v1317, 1.442695
    %v1321 = vpow.pop %v1320
    %v1322 = vadd.f32 %v1319, 1.0
    %v1323 = vadd.f32 %v1321, 1.0
    %v1324 = vrcp.pop %v1322
    %v1325 = vmul.f32 1.0, %v1324
    %v1326 = vrcp.pop %v1323
    %v1327 = vmul.f32 1.0, %v1326
    %v1328 = vxor.u32 %v1309, 2147483648
    %v1329 = vxor.u32 %v1313, 2147483648
    %v1330 = vmul.f32 %v1328, 1.442695
    %v1331 = vpow.pop %v1330
    %v1332 = vmul.f32 %v1329, 1.442695
    %v1333 = vpow.pop %v1332
    %v1334 = vadd.f32 %v1331, 1.0
    %v1335 = vadd.f32 %v1333, 1.0
    %v1336 = vrcp.pop %v1334
    %v1337 = vmul.f32 1.0, %v1336
    %v1338 = vrcp.pop %v1335
    %v1339 = vmul.f32 1.0, %v1338
    %v1340 = vtanh.pop %v1310
    %v1341 = vtanh.pop %v1314
    %v1342 = vxor.u32 %v1311, 2147483648
    %v1343 = vxor.u32 %v1315, 2147483648
    %v1344 = vmul.f32 %v1342, 1.442695
    %v1345 = vpow.pop %v1344
    %v1346 = vmul.f32 %v1343, 1.442695
    %v1347 = vpow.pop %v1346
    %v1348 = vadd.f32 %v1345, 1.0
    %v1349 = vadd.f32 %v1347, 1.0
    %v1350 = vrcp.pop %v1348
    %v1351 = vmul.f32 1.0, %v1350
    %v1352 = vrcp.pop %v1349
    %v1353 = vmul.f32 1.0, %v1352
    %v1354 = vmul.f32 %v1337, %v1007
    %v1355 = vmul.f32 %v1339, %v1008
    %v1356 = vmul.f32 %v1325, %v1340
    %v1357 = vmul.f32 %v1327, %v1341
    %v1358 = vadd.f32 %v1354, %v1356
    %v1359 = vadd.f32 %v1355, %v1357
    %v1360 = vtanh.pop %v1358
    %v1361 = vtanh.pop %v1359
    %v1362 = vmul.f32 %v1351, %v1360
    %v1363 = vmul.f32 %v1353, %v1361
    %v1364 = vpack.c.bf16 %v1363, %v1362
    %s1365 = scalar_lea.vmem [#allocation2], 8
    %1366 = vst [vmem:[%s1365] sm:$0xff] %v1364
    %s1367 = smul.u32 2, 4
    %s1368 = smul.addr %s1367, 8
    %s1369 = scalar_lea.vmem [#allocation4], %s1368
    %v1370 = vld [vmem:[%s1369] sm:$0xff]
    %v1371 = vld [vmem:[%s1369 + $0x8] sm:$0xff]
    %v1372 = vld [vmem:[%s1369 + $0x10] sm:$0xff]
    %v1373 = vld [vmem:[%s1369 + $0x18] sm:$0xff]
    %v1374 = vunpack.c.l.bf16 %v1370
    %v1375 = vunpack.c.l.bf16 %v1371
    %v1376 = vunpack.c.l.bf16 %v1372
    %v1377 = vunpack.c.l.bf16 %v1373
    %v1378 = vunpack.c.h.bf16 %v1370
    %v1379 = vunpack.c.h.bf16 %v1371
    %v1380 = vunpack.c.h.bf16 %v1372
    %v1381 = vunpack.c.h.bf16 %v1373
    %v1382 = vld [vmem:[#allocation10] sm:$0xff]
    %v1383 = vld [vmem:[#allocation10 + $0x8] sm:$0xff]
    %v1384 = vld [vmem:[#allocation10 + $0x10] sm:$0xff]
    %v1385 = vld [vmem:[#allocation10 + $0x18] sm:$0xff]
    %v1386 = vld [vmem:[#allocation10 + $0x20] sm:$0xff]
    %v1387 = vld [vmem:[#allocation10 + $0x28] sm:$0xff]
    %v1388 = vld [vmem:[#allocation10 + $0x30] sm:$0xff]
    %v1389 = vld [vmem:[#allocation10 + $0x38] sm:$0xff]
    %v1390 = vld [vmem:[#allocation10 + $0x40] sm:$0xff]
    %v1391 = vld [vmem:[#allocation10 + $0x48] sm:$0xff]
    %v1392 = vld [vmem:[#allocation10 + $0x50] sm:$0xff]
    %v1393 = vld [vmem:[#allocation10 + $0x58] sm:$0xff]
    %v1394 = vld [vmem:[#allocation10 + $0x60] sm:$0xff]
    %v1395 = vld [vmem:[#allocation10 + $0x68] sm:$0xff]
    %v1396 = vld [vmem:[#allocation10 + $0x70] sm:$0xff]
    %v1397 = vld [vmem:[#allocation10 + $0x78] sm:$0xff]
    %v1398 = vld [vmem:[#allocation10 + $0x80] sm:$0xff]
    %v1399 = vld [vmem:[#allocation10 + $0x88] sm:$0xff]
    %v1400 = vld [vmem:[#allocation10 + $0x90] sm:$0xff]
    %v1401 = vld [vmem:[#allocation10 + $0x98] sm:$0xff]
    %v1402 = vld [vmem:[#allocation10 + $0xa0] sm:$0xff]
    %v1403 = vld [vmem:[#allocation10 + $0xa8] sm:$0xff]
    %v1404 = vld [vmem:[#allocation10 + $0xb0] sm:$0xff]
    %v1405 = vld [vmem:[#allocation10 + $0xb8] sm:$0xff]
    %v1406 = vld [vmem:[#allocation10 + $0xc0] sm:$0xff]
    %v1407 = vld [vmem:[#allocation10 + $0xc8] sm:$0xff]
    %v1408 = vld [vmem:[#allocation10 + $0xd0] sm:$0xff]
    %v1409 = vld [vmem:[#allocation10 + $0xd8] sm:$0xff]
    %v1410 = vld [vmem:[#allocation10 + $0xe0] sm:$0xff]
    %v1411 = vld [vmem:[#allocation10 + $0xe8] sm:$0xff]
    %v1412 = vld [vmem:[#allocation10 + $0xf0] sm:$0xff]
    %v1413 = vld [vmem:[#allocation10 + $0xf8] sm:$0xff]
    %v1446 = vunpack.c.l.b16 %v1382
    %v1447 = vunpack.c.h.b16 %v1382
    %v1448 = vunpack.c.l.b16 %v1383
    %v1449 = vunpack.c.h.b16 %v1383
    %v1450 = vunpack.c.l.b16 %v1384
    %v1451 = vunpack.c.h.b16 %v1384
    %v1452 = vunpack.c.l.b16 %v1385
    %v1453 = vunpack.c.h.b16 %v1385
    %v1454 = vunpack.c.l.b16 %v1386
    %v1455 = vunpack.c.h.b16 %v1386
    %v1456 = vunpack.c.l.b16 %v1387
    %v1457 = vunpack.c.h.b16 %v1387
    %v1458 = vunpack.c.l.b16 %v1388
    %v1459 = vunpack.c.h.b16 %v1388
    %v1460 = vunpack.c.l.b16 %v1389
    %v1461 = vunpack.c.h.b16 %v1389
    %v1462 = vunpack.c.l.b16 %v1390
    %v1463 = vunpack.c.h.b16 %v1390
    %v1464 = vunpack.c.l.b16 %v1391
    %v1465 = vunpack.c.h.b16 %v1391
    %v1466 = vunpack.c.l.b16 %v1392
    %v1467 = vunpack.c.h.b16 %v1392
    %v1468 = vunpack.c.l.b16 %v1393
    %v1469 = vunpack.c.h.b16 %v1393
    %v1470 = vunpack.c.l.b16 %v1394
    %v1471 = vunpack.c.h.b16 %v1394
    %v1472 = vunpack.c.l.b16 %v1395
    %v1473 = vunpack.c.h.b16 %v1395
    %v1474 = vunpack.c.l.b16 %v1396
    %v1475 = vunpack.c.h.b16 %v1396
    %v1476 = vunpack.c.l.b16 %v1397
    %v1477 = vunpack.c.h.b16 %v1397
    %v1478 = vunpack.c.l.b16 %v1398
    %v1479 = vunpack.c.h.b16 %v1398
    %v1480 = vunpack.c.l.b16 %v1399
    %v1481 = vunpack.c.h.b16 %v1399
    %v1482 = vunpack.c.l.b16 %v1400
    %v1483 = vunpack.c.h.b16 %v1400
    %v1484 = vunpack.c.l.b16 %v1401
    %v1485 = vunpack.c.h.b16 %v1401
    %v1486 = vunpack.c.l.b16 %v1402
    %v1487 = vunpack.c.h.b16 %v1402
    %v1488 = vunpack.c.l.b16 %v1403
    %v1489 = vunpack.c.h.b16 %v1403
    %v1490 = vunpack.c.l.b16 %v1404
    %v1491 = vunpack.c.h.b16 %v1404
    %v1492 = vunpack.c.l.b16 %v1405
    %v1493 = vunpack.c.h.b16 %v1405
    %v1494 = vunpack.c.l.b16 %v1406
    %v1495 = vunpack.c.h.b16 %v1406
    %v1496 = vunpack.c.l.b16 %v1407
    %v1497 = vunpack.c.h.b16 %v1407
    %v1498 = vunpack.c.l.b16 %v1408
    %v1499 = vunpack.c.h.b16 %v1408
    %v1500 = vunpack.c.l.b16 %v1409
    %v1501 = vunpack.c.h.b16 %v1409
    %v1502 = vunpack.c.l.b16 %v1410
    %v1503 = vunpack.c.h.b16 %v1410
    %v1504 = vunpack.c.l.b16 %v1411
    %v1505 = vunpack.c.h.b16 %v1411
    %v1506 = vunpack.c.l.b16 %v1412
    %v1507 = vunpack.c.h.b16 %v1412
    %v1508 = vunpack.c.l.b16 %v1413
    %v1509 = vunpack.c.h.b16 %v1413
    %v1510 = vpack.c.b16 %v1450, %v1446
    %v1511 = vpack.c.b16 %v1451, %v1447
    %v1512 = vpack.c.b16 %v1452, %v1448
    %v1513 = vpack.c.b16 %v1453, %v1449
    %v1514 = vpack.c.b16 %v1458, %v1454
    %v1515 = vpack.c.b16 %v1459, %v1455
    %v1516 = vpack.c.b16 %v1460, %v1456
    %v1517 = vpack.c.b16 %v1461, %v1457
    %v1518 = vpack.c.b16 %v1466, %v1462
    %v1519 = vpack.c.b16 %v1467, %v1463
    %v1520 = vpack.c.b16 %v1468, %v1464
    %v1521 = vpack.c.b16 %v1469, %v1465
    %v1522 = vpack.c.b16 %v1474, %v1470
    %v1523 = vpack.c.b16 %v1475, %v1471
    %v1524 = vpack.c.b16 %v1476, %v1472
    %v1525 = vpack.c.b16 %v1477, %v1473
    %v1526 = vpack.c.b16 %v1482, %v1478
    %v1527 = vpack.c.b16 %v1483, %v1479
    %v1528 = vpack.c.b16 %v1484, %v1480
    %v1529 = vpack.c.b16 %v1485, %v1481
    %v1530 = vpack.c.b16 %v1490, %v1486
    %v1531 = vpack.c.b16 %v1491, %v1487
    %v1532 = vpack.c.b16 %v1492, %v1488
    %v1533 = vpack.c.b16 %v1493, %v1489
    %v1534 = vpack.c.b16 %v1498, %v1494
    %v1535 = vpack.c.b16 %v1499, %v1495
    %v1536 = vpack.c.b16 %v1500, %v1496
    %v1537 = vpack.c.b16 %v1501, %v1497
    %v1538 = vpack.c.b16 %v1506, %v1502
    %v1539 = vpack.c.b16 %v1507, %v1503
    %v1540 = vpack.c.b16 %v1508, %v1504
    %v1541 = vpack.c.b16 %v1509, %v1505
    %1574 = vmatprep.subr.bf16.mxu0 %v1511
    %1575 = vmatpush1.bf16.msra.mxu0 %v1510
    %1576 = vmatprep.subr.bf16.mxu0 %v1515
    %1577 = vmatpush1.bf16.msra.mxu0 %v1514
    %1578 = vmatprep.subr.bf16.mxu0 %v1519
    %1579 = vmatpush1.bf16.msra.mxu0 %v1518
    %1580 = vmatprep.subr.bf16.mxu0 %v1523
    %1581 = vmatpush1.bf16.msra.mxu0 %v1522
    %1582 = vmatprep.subr.bf16.mxu0 %v1527
    %1583 = vmatpush1.bf16.msra.mxu0 %v1526
    %1584 = vmatprep.subr.bf16.mxu0 %v1531
    %1585 = vmatpush1.bf16.msra.mxu0 %v1530
    %1586 = vmatprep.subr.bf16.mxu0 %v1535
    %1587 = vmatpush1.bf16.msra.mxu0 %v1534
    %1588 = vmatprep.subr.bf16.mxu0 %v1539
    %1589 = vmatpush1.bf16.msra.mxu0 %v1538
    %1590 = vmatprep.subr.bf16.mxu0 0
    %1591 = vmatpush1.bf16.msra.mxu0 0
    %1592 = vmatprep.subr.bf16.mxu0 0
    %1593 = vmatpush1.bf16.msra.mxu0 0
    %1594 = vmatprep.subr.bf16.mxu0 0
    %1595 = vmatpush1.bf16.msra.mxu0 0
    %1596 = vmatprep.subr.bf16.mxu0 0
    %1597 = vmatpush1.bf16.msra.mxu0 0
    %1598 = vmatprep.subr.bf16.mxu0 0
    %1599 = vmatpush1.bf16.msra.mxu0 0
    %1600 = vmatprep.subr.bf16.mxu0 0
    %1601 = vmatpush1.bf16.msra.mxu0 0
    %1602 = vmatprep.subr.bf16.mxu0 0
    %1603 = vmatpush1.bf16.msra.mxu0 0
    %1604 = vmatprep.subr.bf16.mxu0 0
    %1605 = vmatpush1.bf16.msra.mxu0 0
    %1606 = vmatprep.mubr.bf16.mxu0 0
    %1607 = vmatmul.mubr.bf16.gmra.mrb[0].mxu0 %v1364
    %v1608 = vpop.f32.mrb[0].mxu0
    %v1609 = vadd.f32 0.0, %v1608
    %v1610 = vpop.f32.mrb[0].mxu0
    %v1611 = vadd.f32 0.0, %v1610
    %v1612 = vpop.f32.mrb[0].mxu0
    %v1613 = vadd.f32 0.0, %v1612
    %v1614 = vpop.f32.mrb[0].mxu0
    %v1615 = vadd.f32 0.0, %v1614
    %1616 = vdwg.mxu0
    %1617 = vmatprep.subr.bf16.mxu0 %v1513
    %1618 = vmatpush1.bf16.msra.mxu0 %v1512
    %1619 = vmatprep.subr.bf16.mxu0 %v1517
    %1620 = vmatpush1.bf16.msra.mxu0 %v1516
    %1621 = vmatprep.subr.bf16.mxu0 %v1521
    %1622 = vmatpush1.bf16.msra.mxu0 %v1520
    %1623 = vmatprep.subr.bf16.mxu0 %v1525
    %1624 = vmatpush1.bf16.msra.mxu0 %v1524
    %1625 = vmatprep.subr.bf16.mxu0 %v1529
    %1626 = vmatpush1.bf16.msra.mxu0 %v1528
    %1627 = vmatprep.subr.bf16.mxu0 %v1533
    %1628 = vmatpush1.bf16.msra.mxu0 %v1532
    %1629 = vmatprep.subr.bf16.mxu0 %v1537
    %1630 = vmatpush1.bf16.msra.mxu0 %v1536
    %1631 = vmatprep.subr.bf16.mxu0 %v1541
    %1632 = vmatpush1.bf16.msra.mxu0 %v1540
    %1633 = vmatprep.subr.bf16.mxu0 0
    %1634 = vmatpush1.bf16.msra.mxu0 0
    %1635 = vmatprep.subr.bf16.mxu0 0
    %1636 = vmatpush1.bf16.msra.mxu0 0
    %1637 = vmatprep.subr.bf16.mxu0 0
    %1638 = vmatpush1.bf16.msra.mxu0 0
    %1639 = vmatprep.subr.bf16.mxu0 0
    %1640 = vmatpush1.bf16.msra.mxu0 0
    %1641 = vmatprep.subr.bf16.mxu0 0
    %1642 = vmatpush1.bf16.msra.mxu0 0
    %1643 = vmatprep.subr.bf16.mxu0 0
    %1644 = vmatpush1.bf16.msra.mxu0 0
    %1645 = vmatprep.subr.bf16.mxu0 0
    %1646 = vmatpush1.bf16.msra.mxu0 0
    %1647 = vmatprep.subr.bf16.mxu0 0
    %1648 = vmatpush1.bf16.msra.mxu0 0
    %1649 = vmatprep.mubr.bf16.mxu0 0
    %1650 = vmatmul.mubr.bf16.gmra.mrb[0].mxu0 %v1364
    %v1651 = vpop.f32.mrb[0].mxu0
    %v1652 = vadd.f32 0.0, %v1651
    %v1653 = vpop.f32.mrb[0].mxu0
    %v1654 = vadd.f32 0.0, %v1653
    %v1655 = vpop.f32.mrb[0].mxu0
    %v1656 = vadd.f32 0.0, %v1655
    %v1657 = vpop.f32.mrb[0].mxu0
    %v1658 = vadd.f32 0.0, %v1657
    %1659 = vdwg.mxu0
    %v1660 = vadd.f32 %v1374, %v1609
    %v1661 = vadd.f32 %v1375, %v1611
    %v1662 = vadd.f32 %v1376, %v1652
    %v1663 = vadd.f32 %v1377, %v1654
    %v1664 = vadd.f32 %v1378, %v1613
    %v1665 = vadd.f32 %v1379, %v1615
    %v1666 = vadd.f32 %v1380, %v1656
    %v1667 = vadd.f32 %v1381, %v1658
    %v1668 = vxor.u32 %v1660, 2147483648
    %v1669 = vxor.u32 %v1664, 2147483648
    %v1670 = vmul.f32 %v1668, 1.442695
    %v1671 = vpow.pop %v1670
    %v1672 = vmul.f32 %v1669, 1.442695
    %v1673 = vpow.pop %v1672
    %v1674 = vadd.f32 %v1671, 1.0
    %v1675 = vadd.f32 %v1673, 1.0
    %v1676 = vrcp.pop %v1674
    %v1677 = vmul.f32 1.0, %v1676
    %v1678 = vrcp.pop %v1675
    %v1679 = vmul.f32 1.0, %v1678
    %v1680 = vxor.u32 %v1661, 2147483648
    %v1681 = vxor.u32 %v1665, 2147483648
    %v1682 = vmul.f32 %v1680, 1.442695
    %v1683 = vpow.pop %v1682
    %v1684 = vmul.f32 %v1681, 1.442695
    %v1685 = vpow.pop %v1684
    %v1686 = vadd.f32 %v1683, 1.0
    %v1687 = vadd.f32 %v1685, 1.0
    %v1688 = vrcp.pop %v1686
    %v1689 = vmul.f32 1.0, %v1688
    %v1690 = vrcp.pop %v1687
    %v1691 = vmul.f32 1.0, %v1690
    %v1692 = vtanh.pop %v1662
    %v1693 = vtanh.pop %v1666
    %v1694 = vxor.u32 %v1663, 2147483648
    %v1695 = vxor.u32 %v1667, 2147483648
    %v1696 = vmul.f32 %v1694, 1.442695
    %v1697 = vpow.pop %v1696
    %v1698 = vmul.f32 %v1695, 1.442695
    %v1699 = vpow.pop %v1698
    %v1700 = vadd.f32 %v1697, 1.0
    %v1701 = vadd.f32 %v1699, 1.0
    %v1702 = vrcp.pop %v1700
    %v1703 = vmul.f32 1.0, %v1702
    %v1704 = vrcp.pop %v1701
    %v1705 = vmul.f32 1.0, %v1704
    %v1706 = vmul.f32 %v1689, %v1358
    %v1707 = vmul.f32 %v1691, %v1359
    %v1708 = vmul.f32 %v1677, %v1692
    %v1709 = vmul.f32 %v1679, %v1693
    %v1710 = vadd.f32 %v1706, %v1708
    %v1711 = vadd.f32 %v1707, %v1709
    %v1712 = vtanh.pop %v1710
    %v1713 = vtanh.pop %v1711
    %v1714 = vmul.f32 %v1703, %v1712
    %v1715 = vmul.f32 %v1705, %v1713
    %v1716 = vpack.c.bf16 %v1715, %v1714
    %s1717 = scalar_lea.vmem [#allocation2], 16
    %1718 = vst [vmem:[%s1717] sm:$0xff] %v1716
    %s1719 = smul.u32 3, 4
    %s1720 = smul.addr %s1719, 8
    %s1721 = scalar_lea.vmem [#allocation4], %s1720
    %v1722 = vld [vmem:[%s1721] sm:$0xff]
    %v1723 = vld [vmem:[%s1721 + $0x8] sm:$0xff]
    %v1724 = vld [vmem:[%s1721 + $0x10] sm:$0xff]
    %v1725 = vld [vmem:[%s1721 + $0x18] sm:$0xff]
    %v1726 = vunpack.c.l.bf16 %v1722
    %v1727 = vunpack.c.l.bf16 %v1723
    %v1728 = vunpack.c.l.bf16 %v1724
    %v1729 = vunpack.c.l.bf16 %v1725
    %v1730 = vunpack.c.h.bf16 %v1722
    %v1731 = vunpack.c.h.bf16 %v1723
    %v1732 = vunpack.c.h.bf16 %v1724
    %v1733 = vunpack.c.h.bf16 %v1725
    %v1734 = vld [vmem:[#allocation10] sm:$0xff]
    %v1735 = vld [vmem:[#allocation10 + $0x8] sm:$0xff]
    %v1736 = vld [vmem:[#allocation10 + $0x10] sm:$0xff]
    %v1737 = vld [vmem:[#allocation10 + $0x18] sm:$0xff]
    %v1738 = vld [vmem:[#allocation10 + $0x20] sm:$0xff]
    %v1739 = vld [vmem:[#allocation10 + $0x28] sm:$0xff]
    %v1740 = vld [vmem:[#allocation10 + $0x30] sm:$0xff]
    %v1741 = vld [vmem:[#allocation10 + $0x38] sm:$0xff]
    %v1742 = vld [vmem:[#allocation10 + $0x40] sm:$0xff]
    %v1743 = vld [vmem:[#allocation10 + $0x48] sm:$0xff]
    %v1744 = vld [vmem:[#allocation10 + $0x50] sm:$0xff]
    %v1745 = vld [vmem:[#allocation10 + $0x58] sm:$0xff]
    %v1746 = vld [vmem:[#allocation10 + $0x60] sm:$0xff]
    %v1747 = vld [vmem:[#allocation10 + $0x68] sm:$0xff]
    %v1748 = vld [vmem:[#allocation10 + $0x70] sm:$0xff]
    %v1749 = vld [vmem:[#allocation10 + $0x78] sm:$0xff]
    %v1750 = vld [vmem:[#allocation10 + $0x80] sm:$0xff]
    %v1751 = vld [vmem:[#allocation10 + $0x88] sm:$0xff]
    %v1752 = vld [vmem:[#allocation10 + $0x90] sm:$0xff]
    %v1753 = vld [vmem:[#allocation10 + $0x98] sm:$0xff]
    %v1754 = vld [vmem:[#allocation10 + $0xa0] sm:$0xff]
    %v1755 = vld [vmem:[#allocation10 + $0xa8] sm:$0xff]
    %v1756 = vld [vmem:[#allocation10 + $0xb0] sm:$0xff]
    %v1757 = vld [vmem:[#allocation10 + $0xb8] sm:$0xff]
    %v1758 = vld [vmem:[#allocation10 + $0xc0] sm:$0xff]
    %v1759 = vld [vmem:[#allocation10 + $0xc8] sm:$0xff]
    %v1760 = vld [vmem:[#allocation10 + $0xd0] sm:$0xff]
    %v1761 = vld [vmem:[#allocation10 + $0xd8] sm:$0xff]
    %v1762 = vld [vmem:[#allocation10 + $0xe0] sm:$0xff]
    %v1763 = vld [vmem:[#allocation10 + $0xe8] sm:$0xff]
    %v1764 = vld [vmem:[#allocation10 + $0xf0] sm:$0xff]
    %v1765 = vld [vmem:[#allocation10 + $0xf8] sm:$0xff]
    %v1798 = vunpack.c.l.b16 %v1734
    %v1799 = vunpack.c.h.b16 %v1734
    %v1800 = vunpack.c.l.b16 %v1735
    %v1801 = vunpack.c.h.b16 %v1735
    %v1802 = vunpack.c.l.b16 %v1736
    %v1803 = vunpack.c.h.b16 %v1736
    %v1804 = vunpack.c.l.b16 %v1737
    %v1805 = vunpack.c.h.b16 %v1737
    %v1806 = vunpack.c.l.b16 %v1738
    %v1807 = vunpack.c.h.b16 %v1738
    %v1808 = vunpack.c.l.b16 %v1739
    %v1809 = vunpack.c.h.b16 %v1739
    %v1810 = vunpack.c.l.b16 %v1740
    %v1811 = vunpack.c.h.b16 %v1740
    %v1812 = vunpack.c.l.b16 %v1741
    %v1813 = vunpack.c.h.b16 %v1741
    %v1814 = vunpack.c.l.b16 %v1742
    %v1815 = vunpack.c.h.b16 %v1742
    %v1816 = vunpack.c.l.b16 %v1743
    %v1817 = vunpack.c.h.b16 %v1743
    %v1818 = vunpack.c.l.b16 %v1744
    %v1819 = vunpack.c.h.b16 %v1744
    %v1820 = vunpack.c.l.b16 %v1745
    %v1821 = vunpack.c.h.b16 %v1745
    %v1822 = vunpack.c.l.b16 %v1746
    %v1823 = vunpack.c.h.b16 %v1746
    %v1824 = vunpack.c.l.b16 %v1747
    %v1825 = vunpack.c.h.b16 %v1747
    %v1826 = vunpack.c.l.b16 %v1748
    %v1827 = vunpack.c.h.b16 %v1748
    %v1828 = vunpack.c.l.b16 %v1749
    %v1829 = vunpack.c.h.b16 %v1749
    %v1830 = vunpack.c.l.b16 %v1750
    %v1831 = vunpack.c.h.b16 %v1750
    %v1832 = vunpack.c.l.b16 %v1751
    %v1833 = vunpack.c.h.b16 %v1751
    %v1834 = vunpack.c.l.b16 %v1752
    %v1835 = vunpack.c.h.b16 %v1752
    %v1836 = vunpack.c.l.b16 %v1753
    %v1837 = vunpack.c.h.b16 %v1753
    %v1838 = vunpack.c.l.b16 %v1754
    %v1839 = vunpack.c.h.b16 %v1754
    %v1840 = vunpack.c.l.b16 %v1755
    %v1841 = vunpack.c.h.b16 %v1755
    %v1842 = vunpack.c.l.b16 %v1756
    %v1843 = vunpack.c.h.b16 %v1756
    %v1844 = vunpack.c.l.b16 %v1757
    %v1845 = vunpack.c.h.b16 %v1757
    %v1846 = vunpack.c.l.b16 %v1758
    %v1847 = vunpack.c.h.b16 %v1758
    %v1848 = vunpack.c.l.b16 %v1759
    %v1849 = vunpack.c.h.b16 %v1759
    %v1850 = vunpack.c.l.b16 %v1760
    %v1851 = vunpack.c.h.b16 %v1760
    %v1852 = vunpack.c.l.b16 %v1761
    %v1853 = vunpack.c.h.b16 %v1761
    %v1854 = vunpack.c.l.b16 %v1762
    %v1855 = vunpack.c.h.b16 %v1762
    %v1856 = vunpack.c.l.b16 %v1763
    %v1857 = vunpack.c.h.b16 %v1763
    %v1858 = vunpack.c.l.b16 %v1764
    %v1859 = vunpack.c.h.b16 %v1764
    %v1860 = vunpack.c.l.b16 %v1765
    %v1861 = vunpack.c.h.b16 %v1765
    %v1862 = vpack.c.b16 %v1802, %v1798
    %v1863 = vpack.c.b16 %v1803, %v1799
    %v1864 = vpack.c.b16 %v1804, %v1800
    %v1865 = vpack.c.b16 %v1805, %v1801
    %v1866 = vpack.c.b16 %v1810, %v1806
    %v1867 = vpack.c.b16 %v1811, %v1807
    %v1868 = vpack.c.b16 %v1812, %v1808
    %v1869 = vpack.c.b16 %v1813, %v1809
    %v1870 = vpack.c.b16 %v1818, %v1814
    %v1871 = vpack.c.b16 %v1819, %v1815
    %v1872 = vpack.c.b16 %v1820, %v1816
    %v1873 = vpack.c.b16 %v1821, %v1817
    %v1874 = vpack.c.b16 %v1826, %v1822
    %v1875 = vpack.c.b16 %v1827, %v1823
    %v1876 = vpack.c.b16 %v1828, %v1824
    %v1877 = vpack.c.b16 %v1829, %v1825
    %v1878 = vpack.c.b16 %v1834, %v1830
    %v1879 = vpack.c.b16 %v1835, %v1831
    %v1880 = vpack.c.b16 %v1836, %v1832
    %v1881 = vpack.c.b16 %v1837, %v1833
    %v1882 = vpack.c.b16 %v1842, %v1838
    %v1883 = vpack.c.b16 %v1843, %v1839
    %v1884 = vpack.c.b16 %v1844, %v1840
    %v1885 = vpack.c.b16 %v1845, %v1841
    %v1886 = vpack.c.b16 %v1850, %v1846
    %v1887 = vpack.c.b16 %v1851, %v1847
    %v1888 = vpack.c.b16 %v1852, %v1848
    %v1889 = vpack.c.b16 %v1853, %v1849
    %v1890 = vpack.c.b16 %v1858, %v1854
    %v1891 = vpack.c.b16 %v1859, %v1855
    %v1892 = vpack.c.b16 %v1860, %v1856
    %v1893 = vpack.c.b16 %v1861, %v1857
    %1926 = vmatprep.subr.bf16.mxu0 %v1863
    %1927 = vmatpush1.bf16.msra.mxu0 %v1862
    %1928 = vmatprep.subr.bf16.mxu0 %v1867
    %1929 = vmatpush1.bf16.msra.mxu0 %v1866
    %1930 = vmatprep.subr.bf16.mxu0 %v1871
    %1931 = vmatpush1.bf16.msra.mxu0 %v1870
    %1932 = vmatprep.subr.bf16.mxu0 %v1875
    %1933 = vmatpush1.bf16.msra.mxu0 %v1874
    %1934 = vmatprep.subr.bf16.mxu0 %v1879
    %1935 = vmatpush1.bf16.msra.mxu0 %v1878
    %1936 = vmatprep.subr.bf16.mxu0 %v1883
    %1937 = vmatpush1.bf16.msra.mxu0 %v1882
    %1938 = vmatprep.subr.bf16.mxu0 %v1887
    %1939 = vmatpush1.bf16.msra.mxu0 %v1886
    %1940 = vmatprep.subr.bf16.mxu0 %v1891
    %1941 = vmatpush1.bf16.msra.mxu0 %v1890
    %1942 = vmatprep.subr.bf16.mxu0 0
    %1943 = vmatpush1.bf16.msra.mxu0 0
    %1944 = vmatprep.subr.bf16.mxu0 0
    %1945 = vmatpush1.bf16.msra.mxu0 0
    %1946 = vmatprep.subr.bf16.mxu0 0
    %1947 = vmatpush1.bf16.msra.mxu0 0
    %1948 = vmatprep.subr.bf16.mxu0 0
    %1949 = vmatpush1.bf16.msra.mxu0 0
    %1950 = vmatprep.subr.bf16.mxu0 0
    %1951 = vmatpush1.bf16.msra.mxu0 0
    %1952 = vmatprep.subr.bf16.mxu0 0
    %1953 = vmatpush1.bf16.msra.mxu0 0
    %1954 = vmatprep.subr.bf16.mxu0 0
    %1955 = vmatpush1.bf16.msra.mxu0 0
    %1956 = vmatprep.subr.bf16.mxu0 0
    %1957 = vmatpush1.bf16.msra.mxu0 0
    %1958 = vmatprep.mubr.bf16.mxu0 0
    %1959 = vmatmul.mubr.bf16.gmra.mrb[0].mxu0 %v1716
    %v1960 = vpop.f32.mrb[0].mxu0
    %v1961 = vadd.f32 0.0, %v1960
    %v1962 = vpop.f32.mrb[0].mxu0
    %v1963 = vadd.f32 0.0, %v1962
    %v1964 = vpop.f32.mrb[0].mxu0
    %v1965 = vadd.f32 0.0, %v1964
    %v1966 = vpop.f32.mrb[0].mxu0
    %v1967 = vadd.f32 0.0, %v1966
    %1968 = vdwg.mxu0
    %1969 = vmatprep.subr.bf16.mxu0 %v1865
    %1970 = vmatpush1.bf16.msra.mxu0 %v1864
    %1971 = vmatprep.subr.bf16.mxu0 %v1869
    %1972 = vmatpush1.bf16.msra.mxu0 %v1868
    %1973 = vmatprep.subr.bf16.mxu0 %v1873
    %1974 = vmatpush1.bf16.msra.mxu0 %v1872
    %1975 = vmatprep.subr.bf16.mxu0 %v1877
    %1976 = vmatpush1.bf16.msra.mxu0 %v1876
    %1977 = vmatprep.subr.bf16.mxu0 %v1881
    %1978 = vmatpush1.bf16.msra.mxu0 %v1880
    %1979 = vmatprep.subr.bf16.mxu0 %v1885
    %1980 = vmatpush1.bf16.msra.mxu0 %v1884
    %1981 = vmatprep.subr.bf16.mxu0 %v1889
    %1982 = vmatpush1.bf16.msra.mxu0 %v1888
    %1983 = vmatprep.subr.bf16.mxu0 %v1893
    %1984 = vmatpush1.bf16.msra.mxu0 %v1892
    %1985 = vmatprep.subr.bf16.mxu0 0
    %1986 = vmatpush1.bf16.msra.mxu0 0
    %1987 = vmatprep.subr.bf16.mxu0 0
    %1988 = vmatpush1.bf16.msra.mxu0 0
    %1989 = vmatprep.subr.bf16.mxu0 0
    %1990 = vmatpush1.bf16.msra.mxu0 0
    %1991 = vmatprep.subr.bf16.mxu0 0
    %1992 = vmatpush1.bf16.msra.mxu0 0
    %1993 = vmatprep.subr.bf16.mxu0 0
    %1994 = vmatpush1.bf16.msra.mxu0 0
    %1995 = vmatprep.subr.bf16.mxu0 0
    %1996 = vmatpush1.bf16.msra.mxu0 0
    %1997 = vmatprep.subr.bf16.mxu0 0
    %1998 = vmatpush1.bf16.msra.mxu0 0
    %1999 = vmatprep.subr.bf16.mxu0 0
    %2000 = vmatpush1.bf16.msra.mxu0 0
    %2001 = vmatprep.mubr.bf16.mxu0 0
    %2002 = vmatmul.mubr.bf16.gmra.mrb[0].mxu0 %v1716
    %v2003 = vpop.f32.mrb[0].mxu0
    %v2004 = vadd.f32 0.0, %v2003
    %v2005 = vpop.f32.mrb[0].mxu0
    %v2006 = vadd.f32 0.0, %v2005
    %v2007 = vpop.f32.mrb[0].mxu0
    %v2008 = vadd.f32 0.0, %v2007
    %v2009 = vpop.f32.mrb[0].mxu0
    %v2010 = vadd.f32 0.0, %v2009
    %2011 = vdwg.mxu0
    %v2012 = vadd.f32 %v1726, %v1961
    %v2013 = vadd.f32 %v1727, %v1963
    %v2014 = vadd.f32 %v1728, %v2004
    %v2015 = vadd.f32 %v1729, %v2006
    %v2016 = vadd.f32 %v1730, %v1965
    %v2017 = vadd.f32 %v1731, %v1967
    %v2018 = vadd.f32 %v1732, %v2008
    %v2019 = vadd.f32 %v1733, %v2010
    %v2020 = vxor.u32 %v2012, 2147483648
    %v2021 = vxor.u32 %v2016, 2147483648
    %v2022 = vmul.f32 %v2020, 1.442695
    %v2023 = vpow.pop %v2022
    %v2024 = vmul.f32 %v2021, 1.442695
    %v2025 = vpow.pop %v2024
    %v2026 = vadd.f32 %v2023, 1.0
    %v2027 = vadd.f32 %v2025, 1.0
    %v2028 = vrcp.pop %v2026
    %v2029 = vmul.f32 1.0, %v2028
    %v2030 = vrcp.pop %v2027
    %v2031 = vmul.f32 1.0, %v2030
    %v2032 = vxor.u32 %v2013, 2147483648
    %v2033 = vxor.u32 %v2017, 2147483648
    %v2034 = vmul.f32 %v2032, 1.442695
    %v2035 = vpow.pop %v2034
    %v2036 = vmul.f32 %v2033, 1.442695
    %v2037 = vpow.pop %v2036
    %v2038 = vadd.f32 %v2035, 1.0
    %v2039 = vadd.f32 %v2037, 1.0
    %v2040 = vrcp.pop %v2038
    %v2041 = vmul.f32 1.0, %v2040
    %v2042 = vrcp.pop %v2039
    %v2043 = vmul.f32 1.0, %v2042
    %v2044 = vtanh.pop %v2014
    %v2045 = vtanh.pop %v2018
    %v2046 = vxor.u32 %v2015, 2147483648
    %v2047 = vxor.u32 %v2019, 2147483648
    %v2048 = vmul.f32 %v2046, 1.442695
    %v2049 = vpow.pop %v2048
    %v2050 = vmul.f32 %v2047, 1.442695
    %v2051 = vpow.pop %v2050
    %v2052 = vadd.f32 %v2049, 1.0
    %v2053 = vadd.f32 %v2051, 1.0
    %v2054 = vrcp.pop %v2052
    %v2055 = vmul.f32 1.0, %v2054
    %v2056 = vrcp.pop %v2053
    %v2057 = vmul.f32 1.0, %v2056
    %v2058 = vmul.f32 %v2041, %v1710
    %v2059 = vmul.f32 %v2043, %v1711
    %v2060 = vmul.f32 %v2029, %v2044
    %v2061 = vmul.f32 %v2031, %v2045
    %v2062 = vadd.f32 %v2058, %v2060
    %v2063 = vadd.f32 %v2059, %v2061
    %v2064 = vtanh.pop %v2062
    %v2065 = vtanh.pop %v2063
    %v2066 = vmul.f32 %v2055, %v2064
    %v2067 = vmul.f32 %v2057, %v2065
    %v2068 = vpack.c.bf16 %v2067, %v2066
    %s2069 = scalar_lea.vmem [#allocation2], 24
    %2070 = vst [vmem:[%s2069] sm:$0xff] %v2068
    %s2071 = smul.u32 4, 4
    %s2072 = smul.addr %s2071, 8
    %s2073 = scalar_lea.vmem [#allocation4], %s2072
    %v2074 = vld [vmem:[%s2073] sm:$0xff]
    %v2075 = vld [vmem:[%s2073 + $0x8] sm:$0xff]
    %v2076 = vld [vmem:[%s2073 + $0x10] sm:$0xff]
    %v2077 = vld [vmem:[%s2073 + $0x18] sm:$0xff]
    %v2078 = vunpack.c.l.bf16 %v2074
    %v2079 = vunpack.c.l.bf16 %v2075
    %v2080 = vunpack.c.l.bf16 %v2076
    %v2081 = vunpack.c.l.bf16 %v2077
    %v2082 = vunpack.c.h.bf16 %v2074
    %v2083 = vunpack.c.h.bf16 %v2075
    %v2084 = vunpack.c.h.bf16 %v2076
    %v2085 = vunpack.c.h.bf16 %v2077
    %v2086 = vld [vmem:[#allocation10] sm:$0xff]
    %v2087 = vld [vmem:[#allocation10 + $0x8] sm:$0xff]
    %v2088 = vld [vmem:[#allocation10 + $0x10] sm:$0xff]
    %v2089 = vld [vmem:[#allocation10 + $0x18] sm:$0xff]
    %v2090 = vld [vmem:[#allocation10 + $0x20] sm:$0xff]
    %v2091 = vld [vmem:[#allocation10 + $0x28] sm:$0xff]
    %v2092 = vld [vmem:[#allocation10 + $0x30] sm:$0xff]
    %v2093 = vld [vmem:[#allocation10 + $0x38] sm:$0xff]
    %v2094 = vld [vmem:[#allocation10 + $0x40] sm:$0xff]
    %v2095 = vld [vmem:[#allocation10 + $0x48] sm:$0xff]
    %v2096 = vld [vmem:[#allocation10 + $0x50] sm:$0xff]
    %v2097 = vld [vmem:[#allocation10 + $0x58] sm:$0xff]
    %v2098 = vld [vmem:[#allocation10 + $0x60] sm:$0xff]
    %v2099 = vld [vmem:[#allocation10 + $0x68] sm:$0xff]
    %v2100 = vld [vmem:[#allocation10 + $0x70] sm:$0xff]
    %v2101 = vld [vmem:[#allocation10 + $0x78] sm:$0xff]
    %v2102 = vld [vmem:[#allocation10 + $0x80] sm:$0xff]
    %v2103 = vld [vmem:[#allocation10 + $0x88] sm:$0xff]
    %v2104 = vld [vmem:[#allocation10 + $0x90] sm:$0xff]
    %v2105 = vld [vmem:[#allocation10 + $0x98] sm:$0xff]
    %v2106 = vld [vmem:[#allocation10 + $0xa0] sm:$0xff]
    %v2107 = vld [vmem:[#allocation10 + $0xa8] sm:$0xff]
    %v2108 = vld [vmem:[#allocation10 + $0xb0] sm:$0xff]
    %v2109 = vld [vmem:[#allocation10 + $0xb8] sm:$0xff]
    %v2110 = vld [vmem:[#allocation10 + $0xc0] sm:$0xff]
    %v2111 = vld [vmem:[#allocation10 + $0xc8] sm:$0xff]
    %v2112 = vld [vmem:[#allocation10 + $0xd0] sm:$0xff]
    %v2113 = vld [vmem:[#allocation10 + $0xd8] sm:$0xff]
    %v2114 = vld [vmem:[#allocation10 + $0xe0] sm:$0xff]
    %v2115 = vld [vmem:[#allocation10 + $0xe8] sm:$0xff]
    %v2116 = vld [vmem:[#allocation10 + $0xf0] sm:$0xff]
    %v2117 = vld [vmem:[#allocation10 + $0xf8] sm:$0xff]
    %v2150 = vunpack.c.l.b16 %v2086
    %v2151 = vunpack.c.h.b16 %v2086
    %v2152 = vunpack.c.l.b16 %v2087
    %v2153 = vunpack.c.h.b16 %v2087
    %v2154 = vunpack.c.l.b16 %v2088
    %v2155 = vunpack.c.h.b16 %v2088
    %v2156 = vunpack.c.l.b16 %v2089
    %v2157 = vunpack.c.h.b16 %v2089
    %v2158 = vunpack.c.l.b16 %v2090
    %v2159 = vunpack.c.h.b16 %v2090
    %v2160 = vunpack.c.l.b16 %v2091
    %v2161 = vunpack.c.h.b16 %v2091
    %v2162 = vunpack.c.l.b16 %v2092
    %v2163 = vunpack.c.h.b16 %v2092
    %v2164 = vunpack.c.l.b16 %v2093
    %v2165 = vunpack.c.h.b16 %v2093
    %v2166 = vunpack.c.l.b16 %v2094
    %v2167 = vunpack.c.h.b16 %v2094
    %v2168 = vunpack.c.l.b16 %v2095
    %v2169 = vunpack.c.h.b16 %v2095
    %v2170 = vunpack.c.l.b16 %v2096
    %v2171 = vunpack.c.h.b16 %v2096
    %v2172 = vunpack.c.l.b16 %v2097
    %v2173 = vunpack.c.h.b16 %v2097
    %v2174 = vunpack.c.l.b16 %v2098
    %v2175 = vunpack.c.h.b16 %v2098
    %v2176 = vunpack.c.l.b16 %v2099
    %v2177 = vunpack.c.h.b16 %v2099
    %v2178 = vunpack.c.l.b16 %v2100
    %v2179 = vunpack.c.h.b16 %v2100
    %v2180 = vunpack.c.l.b16 %v2101
    %v2181 = vunpack.c.h.b16 %v2101
    %v2182 = vunpack.c.l.b16 %v2102
    %v2183 = vunpack.c.h.b16 %v2102
    %v2184 = vunpack.c.l.b16 %v2103
    %v2185 = vunpack.c.h.b16 %v2103
    %v2186 = vunpack.c.l.b16 %v2104
    %v2187 = vunpack.c.h.b16 %v2104
    %v2188 = vunpack.c.l.b16 %v2105
    %v2189 = vunpack.c.h.b16 %v2105
    %v2190 = vunpack.c.l.b16 %v2106
    %v2191 = vunpack.c.h.b16 %v2106
    %v2192 = vunpack.c.l.b16 %v2107
    %v2193 = vunpack.c.h.b16 %v2107
    %v2194 = vunpack.c.l.b16 %v2108
    %v2195 = vunpack.c.h.b16 %v2108
    %v2196 = vunpack.c.l.b16 %v2109
    %v2197 = vunpack.c.h.b16 %v2109
    %v2198 = vunpack.c.l.b16 %v2110
    %v2199 = vunpack.c.h.b16 %v2110
    %v2200 = vunpack.c.l.b16 %v2111
    %v2201 = vunpack.c.h.b16 %v2111
    %v2202 = vunpack.c.l.b16 %v2112
    %v2203 = vunpack.c.h.b16 %v2112
    %v2204 = vunpack.c.l.b16 %v2113
    %v2205 = vunpack.c.h.b16 %v2113
    %v2206 = vunpack.c.l.b16 %v2114
    %v2207 = vunpack.c.h.b16 %v2114
    %v2208 = vunpack.c.l.b16 %v2115
    %v2209 = vunpack.c.h.b16 %v2115
    %v2210 = vunpack.c.l.b16 %v2116
    %v2211 = vunpack.c.h.b16 %v2116
    %v2212 = vunpack.c.l.b16 %v2117
    %v2213 = vunpack.c.h.b16 %v2117
    %v2214 = vpack.c.b16 %v2154, %v2150
    %v2215 = vpack.c.b16 %v2155, %v2151
    %v2216 = vpack.c.b16 %v2156, %v2152
    %v2217 = vpack.c.b16 %v2157, %v2153
    %v2218 = vpack.c.b16 %v2162, %v2158
    %v2219 = vpack.c.b16 %v2163, %v2159
    %v2220 = vpack.c.b16 %v2164, %v2160
    %v2221 = vpack.c.b16 %v2165, %v2161
    %v2222 = vpack.c.b16 %v2170, %v2166
    %v2223 = vpack.c.b16 %v2171, %v2167
    %v2224 = vpack.c.b16 %v2172, %v2168
    %v2225 = vpack.c.b16 %v2173, %v2169
    %v2226 = vpack.c.b16 %v2178, %v2174
    %v2227 = vpack.c.b16 %v2179, %v2175
    %v2228 = vpack.c.b16 %v2180, %v2176
    %v2229 = vpack.c.b16 %v2181, %v2177
    %v2230 = vpack.c.b16 %v2186, %v2182
    %v2231 = vpack.c.b16 %v2187, %v2183
    %v2232 = vpack.c.b16 %v2188, %v2184
    %v2233 = vpack.c.b16 %v2189, %v2185
    %v2234 = vpack.c.b16 %v2194, %v2190
    %v2235 = vpack.c.b16 %v2195, %v2191
    %v2236 = vpack.c.b16 %v2196, %v2192
    %v2237 = vpack.c.b16 %v2197, %v2193
    %v2238 = vpack.c.b16 %v2202, %v2198
    %v2239 = vpack.c.b16 %v2203, %v2199
    %v2240 = vpack.c.b16 %v2204, %v2200
    %v2241 = vpack.c.b16 %v2205, %v2201
    %v2242 = vpack.c.b16 %v2210, %v2206
    %v2243 = vpack.c.b16 %v2211, %v2207
    %v2244 = vpack.c.b16 %v2212, %v2208
    %v2245 = vpack.c.b16 %v2213, %v2209
    %2278 = vmatprep.subr.bf16.mxu0 %v2215
    %2279 = vmatpush1.bf16.msra.mxu0 %v2214
    %2280 = vmatprep.subr.bf16.mxu0 %v2219
    %2281 = vmatpush1.bf16.msra.mxu0 %v2218
    %2282 = vmatprep.subr.bf16.mxu0 %v2223
    %2283 = vmatpush1.bf16.msra.mxu0 %v2222
    %2284 = vmatprep.subr.bf16.mxu0 %v2227
    %2285 = vmatpush1.bf16.msra.mxu0 %v2226
    %2286 = vmatprep.subr.bf16.mxu0 %v2231
    %2287 = vmatpush1.bf16.msra.mxu0 %v2230
    %2288 = vmatprep.subr.bf16.mxu0 %v2235
    %2289 = vmatpush1.bf16.msra.mxu0 %v2234
    %2290 = vmatprep.subr.bf16.mxu0 %v2239
    %2291 = vmatpush1.bf16.msra.mxu0 %v2238
    %2292 = vmatprep.subr.bf16.mxu0 %v2243
    %2293 = vmatpush1.bf16.msra.mxu0 %v2242
    %2294 = vmatprep.subr.bf16.mxu0 0
    %2295 = vmatpush1.bf16.msra.mxu0 0
    %2296 = vmatprep.subr.bf16.mxu0 0
    %2297 = vmatpush1.bf16.msra.mxu0 0
    %2298 = vmatprep.subr.bf16.mxu0 0
    %2299 = vmatpush1.bf16.msra.mxu0 0
    %2300 = vmatprep.subr.bf16.mxu0 0
    %2301 = vmatpush1.bf16.msra.mxu0 0
    %2302 = vmatprep.subr.bf16.mxu0 0
    %2303 = vmatpush1.bf16.msra.mxu0 0
    %2304 = vmatprep.subr.bf16.mxu0 0
    %2305 = vmatpush1.bf16.msra.mxu0 0
    %2306 = vmatprep.subr.bf16.mxu0 0
    %2307 = vmatpush1.bf16.msra.mxu0 0
    %2308 = vmatprep.subr.bf16.mxu0 0
    %2309 = vmatpush1.bf16.msra.mxu0 0
    %2310 = vmatprep.mubr.bf16.mxu0 0
    %2311 = vmatmul.mubr.bf16.gmra.mrb[0].mxu0 %v2068
    %v2312 = vpop.f32.mrb[0].mxu0
    %v2313 = vadd.f32 0.0, %v2312
    %v2314 = vpop.f32.mrb[0].mxu0
    %v2315 = vadd.f32 0.0, %v2314
    %v2316 = vpop.f32.mrb[0].mxu0
    %v2317 = vadd.f32 0.0, %v2316
    %v2318 = vpop.f32.mrb[0].mxu0
    %v2319 = vadd.f32 0.0, %v2318
    %2320 = vdwg.mxu0
    %2321 = vmatprep.subr.bf16.mxu0 %v2217
    %2322 = vmatpush1.bf16.msra.mxu0 %v2216
    %2323 = vmatprep.subr.bf16.mxu0 %v2221
    %2324 = vmatpush1.bf16.msra.mxu0 %v2220
    %2325 = vmatprep.subr.bf16.mxu0 %v2225
    %2326 = vmatpush1.bf16.msra.mxu0 %v2224
    %2327 = vmatprep.subr.bf16.mxu0 %v2229
    %2328 = vmatpush1.bf16.msra.mxu0 %v2228
    %2329 = vmatprep.subr.bf16.mxu0 %v2233
    %2330 = vmatpush1.bf16.msra.mxu0 %v2232
    %2331 = vmatprep.subr.bf16.mxu0 %v2237
    %2332 = vmatpush1.bf16.msra.mxu0 %v2236
    %2333 = vmatprep.subr.bf16.mxu0 %v2241
    %2334 = vmatpush1.bf16.msra.mxu0 %v2240
    %2335 = vmatprep.subr.bf16.mxu0 %v2245
    %2336 = vmatpush1.bf16.msra.mxu0 %v2244
    %2337 = vmatprep.subr.bf16.mxu0 0
    %2338 = vmatpush1.bf16.msra.mxu0 0
    %2339 = vmatprep.subr.bf16.mxu0 0
    %2340 = vmatpush1.bf16.msra.mxu0 0
    %2341 = vmatprep.subr.bf16.mxu0 0
    %2342 = vmatpush1.bf16.msra.mxu0 0
    %2343 = vmatprep.subr.bf16.mxu0 0
    %2344 = vmatpush1.bf16.msra.mxu0 0
    %2345 = vmatprep.subr.bf16.mxu0 0
    %2346 = vmatpush1.bf16.msra.mxu0 0
    %2347 = vmatprep.subr.bf16.mxu0 0
    %2348 = vmatpush1.bf16.msra.mxu0 0
    %2349 = vmatprep.subr.bf16.mxu0 0
    %2350 = vmatpush1.bf16.msra.mxu0 0
    %2351 = vmatprep.subr.bf16.mxu0 0
    %2352 = vmatpush1.bf16.msra.mxu0 0
    %2353 = vmatprep.mubr.bf16.mxu0 0
    %2354 = vmatmul.mubr.bf16.gmra.mrb[0].mxu0 %v2068
    %v2355 = vpop.f32.mrb[0].mxu0
    %v2356 = vadd.f32 0.0, %v2355
    %v2357 = vpop.f32.mrb[0].mxu0
    %v2358 = vadd.f32 0.0, %v2357
    %v2359 = vpop.f32.mrb[0].mxu0
    %v2360 = vadd.f32 0.0, %v2359
    %v2361 = vpop.f32.mrb[0].mxu0
    %v2362 = vadd.f32 0.0, %v2361
    %2363 = vdwg.mxu0
    %v2364 = vadd.f32 %v2078, %v2313
    %v2365 = vadd.f32 %v2079, %v2315
    %v2366 = vadd.f32 %v2080, %v2356
    %v2367 = vadd.f32 %v2081, %v2358
    %v2368 = vadd.f32 %v2082, %v2317
    %v2369 = vadd.f32 %v2083, %v2319
    %v2370 = vadd.f32 %v2084, %v2360
    %v2371 = vadd.f32 %v2085, %v2362
    %v2372 = vxor.u32 %v2364, 2147483648
    %v2373 = vxor.u32 %v2368, 2147483648
    %v2374 = vmul.f32 %v2372, 1.442695
    %v2375 = vpow.pop %v2374
    %v2376 = vmul.f32 %v2373, 1.442695
    %v2377 = vpow.pop %v2376
    %v2378 = vadd.f32 %v2375, 1.0
    %v2379 = vadd.f32 %v2377, 1.0
    %v2380 = vrcp.pop %v2378
    %v2381 = vmul.f32 1.0, %v2380
    %v2382 = vrcp.pop %v2379
    %v2383 = vmul.f32 1.0, %v2382
    %v2384 = vxor.u32 %v2365, 2147483648
    %v2385 = vxor.u32 %v2369, 2147483648
    %v2386 = vmul.f32 %v2384, 1.442695
    %v2387 = vpow.pop %v2386
    %v2388 = vmul.f32 %v2385, 1.442695
    %v2389 = vpow.pop %v2388
    %v2390 = vadd.f32 %v2387, 1.0
    %v2391 = vadd.f32 %v2389, 1.0
    %v2392 = vrcp.pop %v2390
    %v2393 = vmul.f32 1.0, %v2392
    %v2394 = vrcp.pop %v2391
    %v2395 = vmul.f32 1.0, %v2394
    %v2396 = vtanh.pop %v2366
    %v2397 = vtanh.pop %v2370
    %v2398 = vxor.u32 %v2367, 2147483648
    %v2399 = vxor.u32 %v2371, 2147483648
    %v2400 = vmul.f32 %v2398, 1.442695
    %v2401 = vpow.pop %v2400
    %v2402 = vmul.f32 %v2399, 1.442695
    %v2403 = vpow.pop %v2402
    %v2404 = vadd.f32 %v2401, 1.0
    %v2405 = vadd.f32 %v2403, 1.0
    %v2406 = vrcp.pop %v2404
    %v2407 = vmul.f32 1.0, %v2406
    %v2408 = vrcp.pop %v2405
    %v2409 = vmul.f32 1.0, %v2408
    %v2410 = vmul.f32 %v2393, %v2062
    %v2411 = vmul.f32 %v2395, %v2063
    %v2412 = vmul.f32 %v2381, %v2396
    %v2413 = vmul.f32 %v2383, %v2397
    %v2414 = vadd.f32 %v2410, %v2412
    %v2415 = vadd.f32 %v2411, %v2413
    %v2416 = vtanh.pop %v2414
    %v2417 = vtanh.pop %v2415
    %v2418 = vmul.f32 %v2407, %v2416
    %v2419 = vmul.f32 %v2409, %v2417
    %v2420 = vpack.c.bf16 %v2419, %v2418
    %s2421 = scalar_lea.vmem [#allocation2], 32
    %2422 = vst [vmem:[%s2421] sm:$0xff] %v2420
    %s2423 = smul.u32 5, 4
    %s2424 = smul.addr %s2423, 8
    %s2425 = scalar_lea.vmem [#allocation4], %s2424
    %v2426 = vld [vmem:[%s2425] sm:$0xff]
    %v2427 = vld [vmem:[%s2425 + $0x8] sm:$0xff]
    %v2428 = vld [vmem:[%s2425 + $0x10] sm:$0xff]
    %v2429 = vld [vmem:[%s2425 + $0x18] sm:$0xff]
    %v2430 = vunpack.c.l.bf16 %v2426
    %v2431 = vunpack.c.l.bf16 %v2427
    %v2432 = vunpack.c.l.bf16 %v2428
    %v2433 = vunpack.c.l.bf16 %v2429
    %v2434 = vunpack.c.h.bf16 %v2426
    %v2435 = vunpack.c.h.bf16 %v2427
    %v2436 = vunpack.c.h.bf16 %v2428
    %v2437 = vunpack.c.h.bf16 %v2429
    %v2438 = vld [vmem:[#allocation10] sm:$0xff]
    %v2439 = vld [vmem:[#allocation10 + $0x8] sm:$0xff]
    %v2440 = vld [vmem:[#allocation10 + $0x10] sm:$0xff]
    %v2441 = vld [vmem:[#allocation10 + $0x18] sm:$0xff]
    %v2442 = vld [vmem:[#allocation10 + $0x20] sm:$0xff]
    %v2443 = vld [vmem:[#allocation10 + $0x28] sm:$0xff]
    %v2444 = vld [vmem:[#allocation10 + $0x30] sm:$0xff]
    %v2445 = vld [vmem:[#allocation10 + $0x38] sm:$0xff]
    %v2446 = vld [vmem:[#allocation10 + $0x40] sm:$0xff]
    %v2447 = vld [vmem:[#allocation10 + $0x48] sm:$0xff]
    %v2448 = vld [vmem:[#allocation10 + $0x50] sm:$0xff]
    %v2449 = vld [vmem:[#allocation10 + $0x58] sm:$0xff]
    %v2450 = vld [vmem:[#allocation10 + $0x60] sm:$0xff]
    %v2451 = vld [vmem:[#allocation10 + $0x68] sm:$0xff]
    %v2452 = vld [vmem:[#allocation10 + $0x70] sm:$0xff]
    %v2453 = vld [vmem:[#allocation10 + $0x78] sm:$0xff]
    %v2454 = vld [vmem:[#allocation10 + $0x80] sm:$0xff]
    %v2455 = vld [vmem:[#allocation10 + $0x88] sm:$0xff]
    %v2456 = vld [vmem:[#allocation10 + $0x90] sm:$0xff]
    %v2457 = vld [vmem:[#allocation10 + $0x98] sm:$0xff]
    %v2458 = vld [vmem:[#allocation10 + $0xa0] sm:$0xff]
    %v2459 = vld [vmem:[#allocation10 + $0xa8] sm:$0xff]
    %v2460 = vld [vmem:[#allocation10 + $0xb0] sm:$0xff]
    %v2461 = vld [vmem:[#allocation10 + $0xb8] sm:$0xff]
    %v2462 = vld [vmem:[#allocation10 + $0xc0] sm:$0xff]
    %v2463 = vld [vmem:[#allocation10 + $0xc8] sm:$0xff]
    %v2464 = vld [vmem:[#allocation10 + $0xd0] sm:$0xff]
    %v2465 = vld [vmem:[#allocation10 + $0xd8] sm:$0xff]
    %v2466 = vld [vmem:[#allocation10 + $0xe0] sm:$0xff]
    %v2467 = vld [vmem:[#allocation10 + $0xe8] sm:$0xff]
    %v2468 = vld [vmem:[#allocation10 + $0xf0] sm:$0xff]
    %v2469 = vld [vmem:[#allocation10 + $0xf8] sm:$0xff]
    %v2502 = vunpack.c.l.b16 %v2438
    %v2503 = vunpack.c.h.b16 %v2438
    %v2504 = vunpack.c.l.b16 %v2439
    %v2505 = vunpack.c.h.b16 %v2439
    %v2506 = vunpack.c.l.b16 %v2440
    %v2507 = vunpack.c.h.b16 %v2440
    %v2508 = vunpack.c.l.b16 %v2441
    %v2509 = vunpack.c.h.b16 %v2441
    %v2510 = vunpack.c.l.b16 %v2442
    %v2511 = vunpack.c.h.b16 %v2442
    %v2512 = vunpack.c.l.b16 %v2443
    %v2513 = vunpack.c.h.b16 %v2443
    %v2514 = vunpack.c.l.b16 %v2444
    %v2515 = vunpack.c.h.b16 %v2444
    %v2516 = vunpack.c.l.b16 %v2445
    %v2517 = vunpack.c.h.b16 %v2445
    %v2518 = vunpack.c.l.b16 %v2446
    %v2519 = vunpack.c.h.b16 %v2446
    %v2520 = vunpack.c.l.b16 %v2447
    %v2521 = vunpack.c.h.b16 %v2447
    %v2522 = vunpack.c.l.b16 %v2448
    %v2523 = vunpack.c.h.b16 %v2448
    %v2524 = vunpack.c.l.b16 %v2449
    %v2525 = vunpack.c.h.b16 %v2449
    %v2526 = vunpack.c.l.b16 %v2450
    %v2527 = vunpack.c.h.b16 %v2450
    %v2528 = vunpack.c.l.b16 %v2451
    %v2529 = vunpack.c.h.b16 %v2451
    %v2530 = vunpack.c.l.b16 %v2452
    %v2531 = vunpack.c.h.b16 %v2452
    %v2532 = vunpack.c.l.b16 %v2453
    %v2533 = vunpack.c.h.b16 %v2453
    %v2534 = vunpack.c.l.b16 %v2454
    %v2535 = vunpack.c.h.b16 %v2454
    %v2536 = vunpack.c.l.b16 %v2455
    %v2537 = vunpack.c.h.b16 %v2455
    %v2538 = vunpack.c.l.b16 %v2456
    %v2539 = vunpack.c.h.b16 %v2456
    %v2540 = vunpack.c.l.b16 %v2457
    %v2541 = vunpack.c.h.b16 %v2457
    %v2542 = vunpack.c.l.b16 %v2458
    %v2543 = vunpack.c.h.b16 %v2458
    %v2544 = vunpack.c.l.b16 %v2459
    %v2545 = vunpack.c.h.b16 %v2459
    %v2546 = vunpack.c.l.b16 %v2460
    %v2547 = vunpack.c.h.b16 %v2460
    %v2548 = vunpack.c.l.b16 %v2461
    %v2549 = vunpack.c.h.b16 %v2461
    %v2550 = vunpack.c.l.b16 %v2462
    %v2551 = vunpack.c.h.b16 %v2462
    %v2552 = vunpack.c.l.b16 %v2463
    %v2553 = vunpack.c.h.b16 %v2463
    %v2554 = vunpack.c.l.b16 %v2464
    %v2555 = vunpack.c.h.b16 %v2464
    %v2556 = vunpack.c.l.b16 %v2465
    %v2557 = vunpack.c.h.b16 %v2465
    %v2558 = vunpack.c.l.b16 %v2466
    %v2559 = vunpack.c.h.b16 %v2466
    %v2560 = vunpack.c.l.b16 %v2467
    %v2561 = vunpack.c.h.b16 %v2467
    %v2562 = vunpack.c.l.b16 %v2468
    %v2563 = vunpack.c.h.b16 %v2468
    %v2564 = vunpack.c.l.b16 %v2469
    %v2565 = vunpack.c.h.b16 %v2469
    %v2566 = vpack.c.b16 %v2506, %v2502
    %v2567 = vpack.c.b16 %v2507, %v2503
    %v2568 = vpack.c.b16 %v2508, %v2504
    %v2569 = vpack.c.b16 %v2509, %v2505
    %v2570 = vpack.c.b16 %v2514, %v2510
    %v2571 = vpack.c.b16 %v2515, %v2511
    %v2572 = vpack.c.b16 %v2516, %v2512
    %v2573 = vpack.c.b16 %v2517, %v2513
    %v2574 = vpack.c.b16 %v2522, %v2518
    %v2575 = vpack.c.b16 %v2523, %v2519
    %v2576 = vpack.c.b16 %v2524, %v2520
    %v2577 = vpack.c.b16 %v2525, %v2521
    %v2578 = vpack.c.b16 %v2530, %v2526
    %v2579 = vpack.c.b16 %v2531, %v2527
    %v2580 = vpack.c.b16 %v2532, %v2528
    %v2581 = vpack.c.b16 %v2533, %v2529
    %v2582 = vpack.c.b16 %v2538, %v2534
    %v2583 = vpack.c.b16 %v2539, %v2535
    %v2584 = vpack.c.b16 %v2540, %v2536
    %v2585 = vpack.c.b16 %v2541, %v2537
    %v2586 = vpack.c.b16 %v2546, %v2542
    %v2587 = vpack.c.b16 %v2547, %v2543
    %v2588 = vpack.c.b16 %v2548, %v2544
    %v2589 = vpack.c.b16 %v2549, %v2545
    %v2590 = vpack.c.b16 %v2554, %v2550
    %v2591 = vpack.c.b16 %v2555, %v2551
    %v2592 = vpack.c.b16 %v2556, %v2552
    %v2593 = vpack.c.b16 %v2557, %v2553
    %v2594 = vpack.c.b16 %v2562, %v2558
    %v2595 = vpack.c.b16 %v2563, %v2559
    %v2596 = vpack.c.b16 %v2564, %v2560
    %v2597 = vpack.c.b16 %v2565, %v2561
    %2630 = vmatprep.subr.bf16.mxu0 %v2567
    %2631 = vmatpush1.bf16.msra.mxu0 %v2566
    %2632 = vmatprep.subr.bf16.mxu0 %v2571
    %2633 = vmatpush1.bf16.msra.mxu0 %v2570
    %2634 = vmatprep.subr.bf16.mxu0 %v2575
    %2635 = vmatpush1.bf16.msra.mxu0 %v2574
    %2636 = vmatprep.subr.bf16.mxu0 %v2579
    %2637 = vmatpush1.bf16.msra.mxu0 %v2578
    %2638 = vmatprep.subr.bf16.mxu0 %v2583
    %2639 = vmatpush1.bf16.msra.mxu0 %v2582
    %2640 = vmatprep.subr.bf16.mxu0 %v2587
    %2641 = vmatpush1.bf16.msra.mxu0 %v2586
    %2642 = vmatprep.subr.bf16.mxu0 %v2591
    %2643 = vmatpush1.bf16.msra.mxu0 %v2590
    %2644 = vmatprep.subr.bf16.mxu0 %v2595
    %2645 = vmatpush1.bf16.msra.mxu0 %v2594
    %2646 = vmatprep.subr.bf16.mxu0 0
    %2647 = vmatpush1.bf16.msra.mxu0 0
    %2648 = vmatprep.subr.bf16.mxu0 0
    %2649 = vmatpush1.bf16.msra.mxu0 0
    %2650 = vmatprep.subr.bf16.mxu0 0
    %2651 = vmatpush1.bf16.msra.mxu0 0
    %2652 = vmatprep.subr.bf16.mxu0 0
    %2653 = vmatpush1.bf16.msra.mxu0 0
    %2654 = vmatprep.subr.bf16.mxu0 0
    %2655 = vmatpush1.bf16.msra.mxu0 0
    %2656 = vmatprep.subr.bf16.mxu0 0
    %2657 = vmatpush1.bf16.msra.mxu0 0
    %2658 = vmatprep.subr.bf16.mxu0 0
    %2659 = vmatpush1.bf16.msra.mxu0 0
    %2660 = vmatprep.subr.bf16.mxu0 0
    %2661 = vmatpush1.bf16.msra.mxu0 0
    %2662 = vmatprep.mubr.bf16.mxu0 0
    %2663 = vmatmul.mubr.bf16.gmra.mrb[0].mxu0 %v2420
    %v2664 = vpop.f32.mrb[0].mxu0
    %v2665 = vadd.f32 0.0, %v2664
    %v2666 = vpop.f32.mrb[0].mxu0
    %v2667 = vadd.f32 0.0, %v2666
    %v2668 = vpop.f32.mrb[0].mxu0
    %v2669 = vadd.f32 0.0, %v2668
    %v2670 = vpop.f32.mrb[0].mxu0
    %v2671 = vadd.f32 0.0, %v2670
    %2672 = vdwg.mxu0
    %2673 = vmatprep.subr.bf16.mxu0 %v2569
    %2674 = vmatpush1.bf16.msra.mxu0 %v2568
    %2675 = vmatprep.subr.bf16.mxu0 %v2573
    %2676 = vmatpush1.bf16.msra.mxu0 %v2572
    %2677 = vmatprep.subr.bf16.mxu0 %v2577
    %2678 = vmatpush1.bf16.msra.mxu0 %v2576
    %2679 = vmatprep.subr.bf16.mxu0 %v2581
    %2680 = vmatpush1.bf16.msra.mxu0 %v2580
    %2681 = vmatprep.subr.bf16.mxu0 %v2585
    %2682 = vmatpush1.bf16.msra.mxu0 %v2584
    %2683 = vmatprep.subr.bf16.mxu0 %v2589
    %2684 = vmatpush1.bf16.msra.mxu0 %v2588
    %2685 = vmatprep.subr.bf16.mxu0 %v2593
    %2686 = vmatpush1.bf16.msra.mxu0 %v2592
    %2687 = vmatprep.subr.bf16.mxu0 %v2597
    %2688 = vmatpush1.bf16.msra.mxu0 %v2596
    %2689 = vmatprep.subr.bf16.mxu0 0
    %2690 = vmatpush1.bf16.msra.mxu0 0
    %2691 = vmatprep.subr.bf16.mxu0 0
    %2692 = vmatpush1.bf16.msra.mxu0 0
    %2693 = vmatprep.subr.bf16.mxu0 0
    %2694 = vmatpush1.bf16.msra.mxu0 0
    %2695 = vmatprep.subr.bf16.mxu0 0
    %2696 = vmatpush1.bf16.msra.mxu0 0
    %2697 = vmatprep.subr.bf16.mxu0 0
    %2698 = vmatpush1.bf16.msra.mxu0 0
    %2699 = vmatprep.subr.bf16.mxu0 0
    %2700 = vmatpush1.bf16.msra.mxu0 0
    %2701 = vmatprep.subr.bf16.mxu0 0
    %2702 = vmatpush1.bf16.msra.mxu0 0
    %2703 = vmatprep.subr.bf16.mxu0 0
    %2704 = vmatpush1.bf16.msra.mxu0 0
    %2705 = vmatprep.mubr.bf16.mxu0 0
    %2706 = vmatmul.mubr.bf16.gmra.mrb[0].mxu0 %v2420
    %v2707 = vpop.f32.mrb[0].mxu0
    %v2708 = vadd.f32 0.0, %v2707
    %v2709 = vpop.f32.mrb[0].mxu0
    %v2710 = vadd.f32 0.0, %v2709
    %v2711 = vpop.f32.mrb[0].mxu0
    %v2712 = vadd.f32 0.0, %v2711
    %v2713 = vpop.f32.mrb[0].mxu0
    %v2714 = vadd.f32 0.0, %v2713
    %2715 = vdwg.mxu0
    %v2716 = vadd.f32 %v2430, %v2665
    %v2717 = vadd.f32 %v2431, %v2667
    %v2718 = vadd.f32 %v2432, %v2708
    %v2719 = vadd.f32 %v2433, %v2710
    %v2720 = vadd.f32 %v2434, %v2669
    %v2721 = vadd.f32 %v2435, %v2671
    %v2722 = vadd.f32 %v2436, %v2712
    %v2723 = vadd.f32 %v2437, %v2714
    %v2724 = vxor.u32 %v2716, 2147483648
    %v2725 = vxor.u32 %v2720, 2147483648
    %v2726 = vmul.f32 %v2724, 1.442695
    %v2727 = vpow.pop %v2726
    %v2728 = vmul.f32 %v2725, 1.442695
    %v2729 = vpow.pop %v2728
    %v2730 = vadd.f32 %v2727, 1.0
    %v2731 = vadd.f32 %v2729, 1.0
    %v2732 = vrcp.pop %v2730
    %v2733 = vmul.f32 1.0, %v2732
    %v2734 = vrcp.pop %v2731
    %v2735 = vmul.f32 1.0, %v2734
    %v2736 = vxor.u32 %v2717, 2147483648
    %v2737 = vxor.u32 %v2721, 2147483648
    %v2738 = vmul.f32 %v2736, 1.442695
    %v2739 = vpow.pop %v2738
    %v2740 = vmul.f32 %v2737, 1.442695
    %v2741 = vpow.pop %v2740
    %v2742 = vadd.f32 %v2739, 1.0
    %v2743 = vadd.f32 %v2741, 1.0
    %v2744 = vrcp.pop %v2742
    %v2745 = vmul.f32 1.0, %v2744
    %v2746 = vrcp.pop %v2743
    %v2747 = vmul.f32 1.0, %v2746
    %v2748 = vtanh.pop %v2718
    %v2749 = vtanh.pop %v2722
    %v2750 = vxor.u32 %v2719, 2147483648
    %v2751 = vxor.u32 %v2723, 2147483648
    %v2752 = vmul.f32 %v2750, 1.442695
    %v2753 = vpow.pop %v2752
    %v2754 = vmul.f32 %v2751, 1.442695
    %v2755 = vpow.pop %v2754
    %v2756 = vadd.f32 %v2753, 1.0
    %v2757 = vadd.f32 %v2755, 1.0
    %v2758 = vrcp.pop %v2756
    %v2759 = vmul.f32 1.0, %v2758
    %v2760 = vrcp.pop %v2757
    %v2761 = vmul.f32 1.0, %v2760
    %v2762 = vmul.f32 %v2745, %v2414
    %v2763 = vmul.f32 %v2747, %v2415
    %v2764 = vmul.f32 %v2733, %v2748
    %v2765 = vmul.f32 %v2735, %v2749
    %v2766 = vadd.f32 %v2762, %v2764
    %v2767 = vadd.f32 %v2763, %v2765
    %v2768 = vtanh.pop %v2766
    %v2769 = vtanh.pop %v2767
    %v2770 = vmul.f32 %v2759, %v2768
    %v2771 = vmul.f32 %v2761, %v2769
    %v2772 = vpack.c.bf16 %v2771, %v2770
    %s2773 = scalar_lea.vmem [#allocation2], 40
    %2774 = vst [vmem:[%s2773] sm:$0xff] %v2772
    %s2775 = smul.u32 6, 4
    %s2776 = smul.addr %s2775, 8
    %s2777 = scalar_lea.vmem [#allocation4], %s2776
    %v2778 = vld [vmem:[%s2777] sm:$0xff]
    %v2779 = vld [vmem:[%s2777 + $0x8] sm:$0xff]
    %v2780 = vld [vmem:[%s2777 + $0x10] sm:$0xff]
    %v2781 = vld [vmem:[%s2777 + $0x18] sm:$0xff]
    %v2782 = vunpack.c.l.bf16 %v2778
    %v2783 = vunpack.c.l.bf16 %v2779
    %v2784 = vunpack.c.l.bf16 %v2780
    %v2785 = vunpack.c.l.bf16 %v2781
    %v2786 = vunpack.c.h.bf16 %v2778
    %v2787 = vunpack.c.h.bf16 %v2779
    %v2788 = vunpack.c.h.bf16 %v2780
    %v2789 = vunpack.c.h.bf16 %v2781
    %v2790 = vld [vmem:[#allocation10] sm:$0xff]
    %v2791 = vld [vmem:[#allocation10 + $0x8] sm:$0xff]
    %v2792 = vld [vmem:[#allocation10 + $0x10] sm:$0xff]
    %v2793 = vld [vmem:[#allocation10 + $0x18] sm:$0xff]
    %v2794 = vld [vmem:[#allocation10 + $0x20] sm:$0xff]
    %v2795 = vld [vmem:[#allocation10 + $0x28] sm:$0xff]
    %v2796 = vld [vmem:[#allocation10 + $0x30] sm:$0xff]
    %v2797 = vld [vmem:[#allocation10 + $0x38] sm:$0xff]
    %v2798 = vld [vmem:[#allocation10 + $0x40] sm:$0xff]
    %v2799 = vld [vmem:[#allocation10 + $0x48] sm:$0xff]
    %v2800 = vld [vmem:[#allocation10 + $0x50] sm:$0xff]
    %v2801 = vld [vmem:[#allocation10 + $0x58] sm:$0xff]
    %v2802 = vld [vmem:[#allocation10 + $0x60] sm:$0xff]
    %v2803 = vld [vmem:[#allocation10 + $0x68] sm:$0xff]
    %v2804 = vld [vmem:[#allocation10 + $0x70] sm:$0xff]
    %v2805 = vld [vmem:[#allocation10 + $0x78] sm:$0xff]
    %v2806 = vld [vmem:[#allocation10 + $0x80] sm:$0xff]
    %v2807 = vld [vmem:[#allocation10 + $0x88] sm:$0xff]
    %v2808 = vld [vmem:[#allocation10 + $0x90] sm:$0xff]
    %v2809 = vld [vmem:[#allocation10 + $0x98] sm:$0xff]
    %v2810 = vld [vmem:[#allocation10 + $0xa0] sm:$0xff]
    %v2811 = vld [vmem:[#allocation10 + $0xa8] sm:$0xff]
    %v2812 = vld [vmem:[#allocation10 + $0xb0] sm:$0xff]
    %v2813 = vld [vmem:[#allocation10 + $0xb8] sm:$0xff]
    %v2814 = vld [vmem:[#allocation10 + $0xc0] sm:$0xff]
    %v2815 = vld [vmem:[#allocation10 + $0xc8] sm:$0xff]
    %v2816 = vld [vmem:[#allocation10 + $0xd0] sm:$0xff]
    %v2817 = vld [vmem:[#allocation10 + $0xd8] sm:$0xff]
    %v2818 = vld [vmem:[#allocation10 + $0xe0] sm:$0xff]
    %v2819 = vld [vmem:[#allocation10 + $0xe8] sm:$0xff]
    %v2820 = vld [vmem:[#allocation10 + $0xf0] sm:$0xff]
    %v2821 = vld [vmem:[#allocation10 + $0xf8] sm:$0xff]
    %v2854 = vunpack.c.l.b16 %v2790
    %v2855 = vunpack.c.h.b16 %v2790
    %v2856 = vunpack.c.l.b16 %v2791
    %v2857 = vunpack.c.h.b16 %v2791
    %v2858 = vunpack.c.l.b16 %v2792
    %v2859 = vunpack.c.h.b16 %v2792
    %v2860 = vunpack.c.l.b16 %v2793
    %v2861 = vunpack.c.h.b16 %v2793
    %v2862 = vunpack.c.l.b16 %v2794
    %v2863 = vunpack.c.h.b16 %v2794
    %v2864 = vunpack.c.l.b16 %v2795
    %v2865 = vunpack.c.h.b16 %v2795
    %v2866 = vunpack.c.l.b16 %v2796
    %v2867 = vunpack.c.h.b16 %v2796
    %v2868 = vunpack.c.l.b16 %v2797
    %v2869 = vunpack.c.h.b16 %v2797
    %v2870 = vunpack.c.l.b16 %v2798
    %v2871 = vunpack.c.h.b16 %v2798
    %v2872 = vunpack.c.l.b16 %v2799
    %v2873 = vunpack.c.h.b16 %v2799
    %v2874 = vunpack.c.l.b16 %v2800
    %v2875 = vunpack.c.h.b16 %v2800
    %v2876 = vunpack.c.l.b16 %v2801
    %v2877 = vunpack.c.h.b16 %v2801
    %v2878 = vunpack.c.l.b16 %v2802
    %v2879 = vunpack.c.h.b16 %v2802
    %v2880 = vunpack.c.l.b16 %v2803
    %v2881 = vunpack.c.h.b16 %v2803
    %v2882 = vunpack.c.l.b16 %v2804
    %v2883 = vunpack.c.h.b16 %v2804
    %v2884 = vunpack.c.l.b16 %v2805
    %v2885 = vunpack.c.h.b16 %v2805
    %v2886 = vunpack.c.l.b16 %v2806
    %v2887 = vunpack.c.h.b16 %v2806
    %v2888 = vunpack.c.l.b16 %v2807
    %v2889 = vunpack.c.h.b16 %v2807
    %v2890 = vunpack.c.l.b16 %v2808
    %v2891 = vunpack.c.h.b16 %v2808
    %v2892 = vunpack.c.l.b16 %v2809
    %v2893 = vunpack.c.h.b16 %v2809
    %v2894 = vunpack.c.l.b16 %v2810
    %v2895 = vunpack.c.h.b16 %v2810
    %v2896 = vunpack.c.l.b16 %v2811
    %v2897 = vunpack.c.h.b16 %v2811
    %v2898 = vunpack.c.l.b16 %v2812
    %v2899 = vunpack.c.h.b16 %v2812
    %v2900 = vunpack.c.l.b16 %v2813
    %v2901 = vunpack.c.h.b16 %v2813
    %v2902 = vunpack.c.l.b16 %v2814
    %v2903 = vunpack.c.h.b16 %v2814
    %v2904 = vunpack.c.l.b16 %v2815
    %v2905 = vunpack.c.h.b16 %v2815
    %v2906 = vunpack.c.l.b16 %v2816
    %v2907 = vunpack.c.h.b16 %v2816
    %v2908 = vunpack.c.l.b16 %v2817
    %v2909 = vunpack.c.h.b16 %v2817
    %v2910 = vunpack.c.l.b16 %v2818
    %v2911 = vunpack.c.h.b16 %v2818
    %v2912 = vunpack.c.l.b16 %v2819
    %v2913 = vunpack.c.h.b16 %v2819
    %v2914 = vunpack.c.l.b16 %v2820
    %v2915 = vunpack.c.h.b16 %v2820
    %v2916 = vunpack.c.l.b16 %v2821
    %v2917 = vunpack.c.h.b16 %v2821
    %v2918 = vpack.c.b16 %v2858, %v2854
    %v2919 = vpack.c.b16 %v2859, %v2855
    %v2920 = vpack.c.b16 %v2860, %v2856
    %v2921 = vpack.c.b16 %v2861, %v2857
    %v2922 = vpack.c.b16 %v2866, %v2862
    %v2923 = vpack.c.b16 %v2867, %v2863
    %v2924 = vpack.c.b16 %v2868, %v2864
    %v2925 = vpack.c.b16 %v2869, %v2865
    %v2926 = vpack.c.b16 %v2874, %v2870
    %v2927 = vpack.c.b16 %v2875, %v2871
    %v2928 = vpack.c.b16 %v2876, %v2872
    %v2929 = vpack.c.b16 %v2877, %v2873
    %v2930 = vpack.c.b16 %v2882, %v2878
    %v2931 = vpack.c.b16 %v2883, %v2879
    %v2932 = vpack.c.b16 %v2884, %v2880
    %v2933 = vpack.c.b16 %v2885, %v2881
    %v2934 = vpack.c.b16 %v2890, %v2886
    %v2935 = vpack.c.b16 %v2891, %v2887
    %v2936 = vpack.c.b16 %v2892, %v2888
    %v2937 = vpack.c.b16 %v2893, %v2889
    %v2938 = vpack.c.b16 %v2898, %v2894
    %v2939 = vpack.c.b16 %v2899, %v2895
    %v2940 = vpack.c.b16 %v2900, %v2896
    %v2941 = vpack.c.b16 %v2901, %v2897
    %v2942 = vpack.c.b16 %v2906, %v2902
    %v2943 = vpack.c.b16 %v2907, %v2903
    %v2944 = vpack.c.b16 %v2908, %v2904
    %v2945 = vpack.c.b16 %v2909, %v2905
    %v2946 = vpack.c.b16 %v2914, %v2910
    %v2947 = vpack.c.b16 %v2915, %v2911
    %v2948 = vpack.c.b16 %v2916, %v2912
    %v2949 = vpack.c.b16 %v2917, %v2913
    %2982 = vmatprep.subr.bf16.mxu0 %v2919
    %2983 = vmatpush1.bf16.msra.mxu0 %v2918
    %2984 = vmatprep.subr.bf16.mxu0 %v2923
    %2985 = vmatpush1.bf16.msra.mxu0 %v2922
    %2986 = vmatprep.subr.bf16.mxu0 %v2927
    %2987 = vmatpush1.bf16.msra.mxu0 %v2926
    %2988 = vmatprep.subr.bf16.mxu0 %v2931
    %2989 = vmatpush1.bf16.msra.mxu0 %v2930
    %2990 = vmatprep.subr.bf16.mxu0 %v2935
    %2991 = vmatpush1.bf16.msra.mxu0 %v2934
    %2992 = vmatprep.subr.bf16.mxu0 %v2939
    %2993 = vmatpush1.bf16.msra.mxu0 %v2938
    %2994 = vmatprep.subr.bf16.mxu0 %v2943
    %2995 = vmatpush1.bf16.msra.mxu0 %v2942
    %2996 = vmatprep.subr.bf16.mxu0 %v2947
    %2997 = vmatpush1.bf16.msra.mxu0 %v2946
    %2998 = vmatprep.subr.bf16.mxu0 0
    %2999 = vmatpush1.bf16.msra.mxu0 0
    %3000 = vmatprep.subr.bf16.mxu0 0
    %3001 = vmatpush1.bf16.msra.mxu0 0
    %3002 = vmatprep.subr.bf16.mxu0 0
    %3003 = vmatpush1.bf16.msra.mxu0 0
    %3004 = vmatprep.subr.bf16.mxu0 0
    %3005 = vmatpush1.bf16.msra.mxu0 0
    %3006 = vmatprep.subr.bf16.mxu0 0
    %3007 = vmatpush1.bf16.msra.mxu0 0
    %3008 = vmatprep.subr.bf16.mxu0 0
    %3009 = vmatpush1.bf16.msra.mxu0 0
    %3010 = vmatprep.subr.bf16.mxu0 0
    %3011 = vmatpush1.bf16.msra.mxu0 0
    %3012 = vmatprep.subr.bf16.mxu0 0
    %3013 = vmatpush1.bf16.msra.mxu0 0
    %3014 = vmatprep.mubr.bf16.mxu0 0
    %3015 = vmatmul.mubr.bf16.gmra.mrb[0].mxu0 %v2772
    %v3016 = vpop.f32.mrb[0].mxu0
    %v3017 = vadd.f32 0.0, %v3016
    %v3018 = vpop.f32.mrb[0].mxu0
    %v3019 = vadd.f32 0.0, %v3018
    %v3020 = vpop.f32.mrb[0].mxu0
    %v3021 = vadd.f32 0.0, %v3020
    %v3022 = vpop.f32.mrb[0].mxu0
    %v3023 = vadd.f32 0.0, %v3022
    %3024 = vdwg.mxu0
    %3025 = vmatprep.subr.bf16.mxu0 %v2921
    %3026 = vmatpush1.bf16.msra.mxu0 %v2920
    %3027 = vmatprep.subr.bf16.mxu0 %v2925
    %3028 = vmatpush1.bf16.msra.mxu0 %v2924
    %3029 = vmatprep.subr.bf16.mxu0 %v2929
    %3030 = vmatpush1.bf16.msra.mxu0 %v2928
    %3031 = vmatprep.subr.bf16.mxu0 %v2933
    %3032 = vmatpush1.bf16.msra.mxu0 %v2932
    %3033 = vmatprep.subr.bf16.mxu0 %v2937
    %3034 = vmatpush1.bf16.msra.mxu0 %v2936
    %3035 = vmatprep.subr.bf16.mxu0 %v2941
    %3036 = vmatpush1.bf16.msra.mxu0 %v2940
    %3037 = vmatprep.subr.bf16.mxu0 %v2945
    %3038 = vmatpush1.bf16.msra.mxu0 %v2944
    %3039 = vmatprep.subr.bf16.mxu0 %v2949
    %3040 = vmatpush1.bf16.msra.mxu0 %v2948
    %3041 = vmatprep.subr.bf16.mxu0 0
    %3042 = vmatpush1.bf16.msra.mxu0 0
    %3043 = vmatprep.subr.bf16.mxu0 0
    %3044 = vmatpush1.bf16.msra.mxu0 0
    %3045 = vmatprep.subr.bf16.mxu0 0
    %3046 = vmatpush1.bf16.msra.mxu0 0
    %3047 = vmatprep.subr.bf16.mxu0 0
    %3048 = vmatpush1.bf16.msra.mxu0 0
    %3049 = vmatprep.subr.bf16.mxu0 0
    %3050 = vmatpush1.bf16.msra.mxu0 0
    %3051 = vmatprep.subr.bf16.mxu0 0
    %3052 = vmatpush1.bf16.msra.mxu0 0
    %3053 = vmatprep.subr.bf16.mxu0 0
    %3054 = vmatpush1.bf16.msra.mxu0 0
    %3055 = vmatprep.subr.bf16.mxu0 0
    %3056 = vmatpush1.bf16.msra.mxu0 0
    %3057 = vmatprep.mubr.bf16.mxu0 0
    %3058 = vmatmul.mubr.bf16.gmra.mrb[0].mxu0 %v2772
    %v3059 = vpop.f32.mrb[0].mxu0
    %v3060 = vadd.f32 0.0, %v3059
    %v3061 = vpop.f32.mrb[0].mxu0
    %v3062 = vadd.f32 0.0, %v3061
    %v3063 = vpop.f32.mrb[0].mxu0
    %v3064 = vadd.f32 0.0, %v3063
    %v3065 = vpop.f32.mrb[0].mxu0
    %v3066 = vadd.f32 0.0, %v3065
    %3067 = vdwg.mxu0
    %v3068 = vadd.f32 %v2782, %v3017
    %v3069 = vadd.f32 %v2783, %v3019
    %v3070 = vadd.f32 %v2784, %v3060
    %v3071 = vadd.f32 %v2785, %v3062
    %v3072 = vadd.f32 %v2786, %v3021
    %v3073 = vadd.f32 %v2787, %v3023
    %v3074 = vadd.f32 %v2788, %v3064
    %v3075 = vadd.f32 %v2789, %v3066
    %v3076 = vxor.u32 %v3068, 2147483648
    %v3077 = vxor.u32 %v3072, 2147483648
    %v3078 = vmul.f32 %v3076, 1.442695
    %v3079 = vpow.pop %v3078
    %v3080 = vmul.f32 %v3077, 1.442695
    %v3081 = vpow.pop %v3080
    %v3082 = vadd.f32 %v3079, 1.0
    %v3083 = vadd.f32 %v3081, 1.0
    %v3084 = vrcp.pop %v3082
    %v3085 = vmul.f32 1.0, %v3084
    %v3086 = vrcp.pop %v3083
    %v3087 = vmul.f32 1.0, %v3086
    %v3088 = vxor.u32 %v3069, 2147483648
    %v3089 = vxor.u32 %v3073, 2147483648
    %v3090 = vmul.f32 %v3088, 1.442695
    %v3091 = vpow.pop %v3090
    %v3092 = vmul.f32 %v3089, 1.442695
    %v3093 = vpow.pop %v3092
    %v3094 = vadd.f32 %v3091, 1.0
    %v3095 = vadd.f32 %v3093, 1.0
    %v3096 = vrcp.pop %v3094
    %v3097 = vmul.f32 1.0, %v3096
    %v3098 = vrcp.pop %v3095
    %v3099 = vmul.f32 1.0, %v3098
    %v3100 = vtanh.pop %v3070
    %v3101 = vtanh.pop %v3074
    %v3102 = vxor.u32 %v3071, 2147483648
    %v3103 = vxor.u32 %v3075, 2147483648
    %v3104 = vmul.f32 %v3102, 1.442695
    %v3105 = vpow.pop %v3104
    %v3106 = vmul.f32 %v3103, 1.442695
    %v3107 = vpow.pop %v3106
    %v3108 = vadd.f32 %v3105, 1.0
    %v3109 = vadd.f32 %v3107, 1.0
    %v3110 = vrcp.pop %v3108
    %v3111 = vmul.f32 1.0, %v3110
    %v3112 = vrcp.pop %v3109
    %v3113 = vmul.f32 1.0, %v3112
    %v3114 = vmul.f32 %v3097, %v2766
    %v3115 = vmul.f32 %v3099, %v2767
    %v3116 = vmul.f32 %v3085, %v3100
    %v3117 = vmul.f32 %v3087, %v3101
    %v3118 = vadd.f32 %v3114, %v3116
    %v3119 = vadd.f32 %v3115, %v3117
    %v3120 = vtanh.pop %v3118
    %v3121 = vtanh.pop %v3119
    %v3122 = vmul.f32 %v3111, %v3120
    %v3123 = vmul.f32 %v3113, %v3121
    %v3124 = vpack.c.bf16 %v3123, %v3122
    %s3125 = scalar_lea.vmem [#allocation2], 48
    %3126 = vst [vmem:[%s3125] sm:$0xff] %v3124
    %s3127 = smul.u32 7, 4
    %s3128 = smul.addr %s3127, 8
    %s3129 = scalar_lea.vmem [#allocation4], %s3128
    %v3130 = vld [vmem:[%s3129] sm:$0xff]
    %v3131 = vld [vmem:[%s3129 + $0x8] sm:$0xff]
    %v3132 = vld [vmem:[%s3129 + $0x10] sm:$0xff]
    %v3133 = vld [vmem:[%s3129 + $0x18] sm:$0xff]
    %v3134 = vunpack.c.l.bf16 %v3130
    %v3135 = vunpack.c.l.bf16 %v3131
    %v3136 = vunpack.c.l.bf16 %v3132
    %v3137 = vunpack.c.l.bf16 %v3133
    %v3138 = vunpack.c.h.bf16 %v3130
    %v3139 = vunpack.c.h.bf16 %v3131
    %v3140 = vunpack.c.h.bf16 %v3132
    %v3141 = vunpack.c.h.bf16 %v3133
    %v3142 = vld [vmem:[#allocation10] sm:$0xff]
    %v3143 = vld [vmem:[#allocation10 + $0x8] sm:$0xff]
    %v3144 = vld [vmem:[#allocation10 + $0x10] sm:$0xff]
    %v3145 = vld [vmem:[#allocation10 + $0x18] sm:$0xff]
    %v3146 = vld [vmem:[#allocation10 + $0x20] sm:$0xff]
    %v3147 = vld [vmem:[#allocation10 + $0x28] sm:$0xff]
    %v3148 = vld [vmem:[#allocation10 + $0x30] sm:$0xff]
    %v3149 = vld [vmem:[#allocation10 + $0x38] sm:$0xff]
    %v3150 = vld [vmem:[#allocation10 + $0x40] sm:$0xff]
    %v3151 = vld [vmem:[#allocation10 + $0x48] sm:$0xff]
    %v3152 = vld [vmem:[#allocation10 + $0x50] sm:$0xff]
    %v3153 = vld [vmem:[#allocation10 + $0x58] sm:$0xff]
    %v3154 = vld [vmem:[#allocation10 + $0x60] sm:$0xff]
    %v3155 = vld [vmem:[#allocation10 + $0x68] sm:$0xff]
    %v3156 = vld [vmem:[#allocation10 + $0x70] sm:$0xff]
    %v3157 = vld [vmem:[#allocation10 + $0x78] sm:$0xff]
    %v3158 = vld [vmem:[#allocation10 + $0x80] sm:$0xff]
    %v3159 = vld [vmem:[#allocation10 + $0x88] sm:$0xff]
    %v3160 = vld [vmem:[#allocation10 + $0x90] sm:$0xff]
    %v3161 = vld [vmem:[#allocation10 + $0x98] sm:$0xff]
    %v3162 = vld [vmem:[#allocation10 + $0xa0] sm:$0xff]
    %v3163 = vld [vmem:[#allocation10 + $0xa8] sm:$0xff]
    %v3164 = vld [vmem:[#allocation10 + $0xb0] sm:$0xff]
    %v3165 = vld [vmem:[#allocation10 + $0xb8] sm:$0xff]
    %v3166 = vld [vmem:[#allocation10 + $0xc0] sm:$0xff]
    %v3167 = vld [vmem:[#allocation10 + $0xc8] sm:$0xff]
    %v3168 = vld [vmem:[#allocation10 + $0xd0] sm:$0xff]
    %v3169 = vld [vmem:[#allocation10 + $0xd8] sm:$0xff]
    %v3170 = vld [vmem:[#allocation10 + $0xe0] sm:$0xff]
    %v3171 = vld [vmem:[#allocation10 + $0xe8] sm:$0xff]
    %v3172 = vld [vmem:[#allocation10 + $0xf0] sm:$0xff]
    %v3173 = vld [vmem:[#allocation10 + $0xf8] sm:$0xff]
    %v3206 = vunpack.c.l.b16 %v3142
    %v3207 = vunpack.c.h.b16 %v3142
    %v3208 = vunpack.c.l.b16 %v3143
    %v3209 = vunpack.c.h.b16 %v3143
    %v3210 = vunpack.c.l.b16 %v3144
    %v3211 = vunpack.c.h.b16 %v3144
    %v3212 = vunpack.c.l.b16 %v3145
    %v3213 = vunpack.c.h.b16 %v3145
    %v3214 = vunpack.c.l.b16 %v3146
    %v3215 = vunpack.c.h.b16 %v3146
    %v3216 = vunpack.c.l.b16 %v3147
    %v3217 = vunpack.c.h.b16 %v3147
    %v3218 = vunpack.c.l.b16 %v3148
    %v3219 = vunpack.c.h.b16 %v3148
    %v3220 = vunpack.c.l.b16 %v3149
    %v3221 = vunpack.c.h.b16 %v3149
    %v3222 = vunpack.c.l.b16 %v3150
    %v3223 = vunpack.c.h.b16 %v3150
    %v3224 = vunpack.c.l.b16 %v3151
    %v3225 = vunpack.c.h.b16 %v3151
    %v3226 = vunpack.c.l.b16 %v3152
    %v3227 = vunpack.c.h.b16 %v3152
    %v3228 = vunpack.c.l.b16 %v3153
    %v3229 = vunpack.c.h.b16 %v3153
    %v3230 = vunpack.c.l.b16 %v3154
    %v3231 = vunpack.c.h.b16 %v3154
    %v3232 = vunpack.c.l.b16 %v3155
    %v3233 = vunpack.c.h.b16 %v3155
    %v3234 = vunpack.c.l.b16 %v3156
    %v3235 = vunpack.c.h.b16 %v3156
    %v3236 = vunpack.c.l.b16 %v3157
    %v3237 = vunpack.c.h.b16 %v3157
    %v3238 = vunpack.c.l.b16 %v3158
    %v3239 = vunpack.c.h.b16 %v3158
    %v3240 = vunpack.c.l.b16 %v3159
    %v3241 = vunpack.c.h.b16 %v3159
    %v3242 = vunpack.c.l.b16 %v3160
    %v3243 = vunpack.c.h.b16 %v3160
    %v3244 = vunpack.c.l.b16 %v3161
    %v3245 = vunpack.c.h.b16 %v3161
    %v3246 = vunpack.c.l.b16 %v3162
    %v3247 = vunpack.c.h.b16 %v3162
    %v3248 = vunpack.c.l.b16 %v3163
    %v3249 = vunpack.c.h.b16 %v3163
    %v3250 = vunpack.c.l.b16 %v3164
    %v3251 = vunpack.c.h.b16 %v3164
    %v3252 = vunpack.c.l.b16 %v3165
    %v3253 = vunpack.c.h.b16 %v3165
    %v3254 = vunpack.c.l.b16 %v3166
    %v3255 = vunpack.c.h.b16 %v3166
    %v3256 = vunpack.c.l.b16 %v3167
    %v3257 = vunpack.c.h.b16 %v3167
    %v3258 = vunpack.c.l.b16 %v3168
    %v3259 = vunpack.c.h.b16 %v3168
    %v3260 = vunpack.c.l.b16 %v3169
    %v3261 = vunpack.c.h.b16 %v3169
    %v3262 = vunpack.c.l.b16 %v3170
    %v3263 = vunpack.c.h.b16 %v3170
    %v3264 = vunpack.c.l.b16 %v3171
    %v3265 = vunpack.c.h.b16 %v3171
    %v3266 = vunpack.c.l.b16 %v3172
    %v3267 = vunpack.c.h.b16 %v3172
    %v3268 = vunpack.c.l.b16 %v3173
    %v3269 = vunpack.c.h.b16 %v3173
    %v3270 = vpack.c.b16 %v3210, %v3206
    %v3271 = vpack.c.b16 %v3211, %v3207
    %v3272 = vpack.c.b16 %v3212, %v3208
    %v3273 = vpack.c.b16 %v3213, %v3209
    %v3274 = vpack.c.b16 %v3218, %v3214
    %v3275 = vpack.c.b16 %v3219, %v3215
    %v3276 = vpack.c.b16 %v3220, %v3216
    %v3277 = vpack.c.b16 %v3221, %v3217
    %v3278 = vpack.c.b16 %v3226, %v3222
    %v3279 = vpack.c.b16 %v3227, %v3223
    %v3280 = vpack.c.b16 %v3228, %v3224
    %v3281 = vpack.c.b16 %v3229, %v3225
    %v3282 = vpack.c.b16 %v3234, %v3230
    %v3283 = vpack.c.b16 %v3235, %v3231
    %v3284 = vpack.c.b16 %v3236, %v3232
    %v3285 = vpack.c.b16 %v3237, %v3233
    %v3286 = vpack.c.b16 %v3242, %v3238
    %v3287 = vpack.c.b16 %v3243, %v3239
    %v3288 = vpack.c.b16 %v3244, %v3240
    %v3289 = vpack.c.b16 %v3245, %v3241
    %v3290 = vpack.c.b16 %v3250, %v3246
    %v3291 = vpack.c.b16 %v3251, %v3247
    %v3292 = vpack.c.b16 %v3252, %v3248
    %v3293 = vpack.c.b16 %v3253, %v3249
    %v3294 = vpack.c.b16 %v3258, %v3254
    %v3295 = vpack.c.b16 %v3259, %v3255
    %v3296 = vpack.c.b16 %v3260, %v3256
    %v3297 = vpack.c.b16 %v3261, %v3257
    %v3298 = vpack.c.b16 %v3266, %v3262
    %v3299 = vpack.c.b16 %v3267, %v3263
    %v3300 = vpack.c.b16 %v3268, %v3264
    %v3301 = vpack.c.b16 %v3269, %v3265
    %3334 = vmatprep.subr.bf16.mxu0 %v3271
    %3335 = vmatpush1.bf16.msra.mxu0 %v3270
    %3336 = vmatprep.subr.bf16.mxu0 %v3275
    %3337 = vmatpush1.bf16.msra.mxu0 %v3274
    %3338 = vmatprep.subr.bf16.mxu0 %v3279
    %3339 = vmatpush1.bf16.msra.mxu0 %v3278
    %3340 = vmatprep.subr.bf16.mxu0 %v3283
    %3341 = vmatpush1.bf16.msra.mxu0 %v3282
    %3342 = vmatprep.subr.bf16.mxu0 %v3287
    %3343 = vmatpush1.bf16.msra.mxu0 %v3286
    %3344 = vmatprep.subr.bf16.mxu0 %v3291
    %3345 = vmatpush1.bf16.msra.mxu0 %v3290
    %3346 = vmatprep.subr.bf16.mxu0 %v3295
    %3347 = vmatpush1.bf16.msra.mxu0 %v3294
    %3348 = vmatprep.subr.bf16.mxu0 %v3299
    %3349 = vmatpush1.bf16.msra.mxu0 %v3298
    %3350 = vmatprep.subr.bf16.mxu0 0
    %3351 = vmatpush1.bf16.msra.mxu0 0
    %3352 = vmatprep.subr.bf16.mxu0 0
    %3353 = vmatpush1.bf16.msra.mxu0 0
    %3354 = vmatprep.subr.bf16.mxu0 0
    %3355 = vmatpush1.bf16.msra.mxu0 0
    %3356 = vmatprep.subr.bf16.mxu0 0
    %3357 = vmatpush1.bf16.msra.mxu0 0
    %3358 = vmatprep.subr.bf16.mxu0 0
    %3359 = vmatpush1.bf16.msra.mxu0 0
    %3360 = vmatprep.subr.bf16.mxu0 0
    %3361 = vmatpush1.bf16.msra.mxu0 0
    %3362 = vmatprep.subr.bf16.mxu0 0
    %3363 = vmatpush1.bf16.msra.mxu0 0
    %3364 = vmatprep.subr.bf16.mxu0 0
    %3365 = vmatpush1.bf16.msra.mxu0 0
    %3366 = vmatprep.mubr.bf16.mxu0 0
    %3367 = vmatmul.mubr.bf16.gmra.mrb[0].mxu0 %v3124
    %v3368 = vpop.f32.mrb[0].mxu0
    %v3369 = vadd.f32 0.0, %v3368
    %v3370 = vpop.f32.mrb[0].mxu0
    %v3371 = vadd.f32 0.0, %v3370
    %v3372 = vpop.f32.mrb[0].mxu0
    %v3373 = vadd.f32 0.0, %v3372
    %v3374 = vpop.f32.mrb[0].mxu0
    %v3375 = vadd.f32 0.0, %v3374
    %3376 = vdwg.mxu0
    %3377 = vmatprep.subr.bf16.mxu0 %v3273
    %3378 = vmatpush1.bf16.msra.mxu0 %v3272
    %3379 = vmatprep.subr.bf16.mxu0 %v3277
    %3380 = vmatpush1.bf16.msra.mxu0 %v3276
    %3381 = vmatprep.subr.bf16.mxu0 %v3281
    %3382 = vmatpush1.bf16.msra.mxu0 %v3280
    %3383 = vmatprep.subr.bf16.mxu0 %v3285
    %3384 = vmatpush1.bf16.msra.mxu0 %v3284
    %3385 = vmatprep.subr.bf16.mxu0 %v3289
    %3386 = vmatpush1.bf16.msra.mxu0 %v3288
    %3387 = vmatprep.subr.bf16.mxu0 %v3293
    %3388 = vmatpush1.bf16.msra.mxu0 %v3292
    %3389 = vmatprep.subr.bf16.mxu0 %v3297
    %3390 = vmatpush1.bf16.msra.mxu0 %v3296
    %3391 = vmatprep.subr.bf16.mxu0 %v3301
    %3392 = vmatpush1.bf16.msra.mxu0 %v3300
    %3393 = vmatprep.subr.bf16.mxu0 0
    %3394 = vmatpush1.bf16.msra.mxu0 0
    %3395 = vmatprep.subr.bf16.mxu0 0
    %3396 = vmatpush1.bf16.msra.mxu0 0
    %3397 = vmatprep.subr.bf16.mxu0 0
    %3398 = vmatpush1.bf16.msra.mxu0 0
    %3399 = vmatprep.subr.bf16.mxu0 0
    %3400 = vmatpush1.bf16.msra.mxu0 0
    %3401 = vmatprep.subr.bf16.mxu0 0
    %3402 = vmatpush1.bf16.msra.mxu0 0
    %3403 = vmatprep.subr.bf16.mxu0 0
    %3404 = vmatpush1.bf16.msra.mxu0 0
    %3405 = vmatprep.subr.bf16.mxu0 0
    %3406 = vmatpush1.bf16.msra.mxu0 0
    %3407 = vmatprep.subr.bf16.mxu0 0
    %3408 = vmatpush1.bf16.msra.mxu0 0
    %3409 = vmatprep.mubr.bf16.mxu0 0
    %3410 = vmatmul.mubr.bf16.gmra.mrb[0].mxu0 %v3124
    %v3411 = vpop.f32.mrb[0].mxu0
    %v3412 = vadd.f32 0.0, %v3411
    %v3413 = vpop.f32.mrb[0].mxu0
    %v3414 = vadd.f32 0.0, %v3413
    %v3415 = vpop.f32.mrb[0].mxu0
    %v3416 = vadd.f32 0.0, %v3415
    %v3417 = vpop.f32.mrb[0].mxu0
    %v3418 = vadd.f32 0.0, %v3417
    %3419 = vdwg.mxu0
    %v3420 = vadd.f32 %v3134, %v3369
    %v3421 = vadd.f32 %v3135, %v3371
    %v3422 = vadd.f32 %v3136, %v3412
    %v3423 = vadd.f32 %v3137, %v3414
    %v3424 = vadd.f32 %v3138, %v3373
    %v3425 = vadd.f32 %v3139, %v3375
    %v3426 = vadd.f32 %v3140, %v3416
    %v3427 = vadd.f32 %v3141, %v3418
    %v3428 = vxor.u32 %v3420, 2147483648
    %v3429 = vxor.u32 %v3424, 2147483648
    %v3430 = vmul.f32 %v3428, 1.442695
    %v3431 = vpow.pop %v3430
    %v3432 = vmul.f32 %v3429, 1.442695
    %v3433 = vpow.pop %v3432
    %v3434 = vadd.f32 %v3431, 1.0
    %v3435 = vadd.f32 %v3433, 1.0
    %v3436 = vrcp.pop %v3434
    %v3437 = vmul.f32 1.0, %v3436
    %v3438 = vrcp.pop %v3435
    %v3439 = vmul.f32 1.0, %v3438
    %v3440 = vxor.u32 %v3421, 2147483648
    %v3441 = vxor.u32 %v3425, 2147483648
    %v3442 = vmul.f32 %v3440, 1.442695
    %v3443 = vpow.pop %v3442
    %v3444 = vmul.f32 %v3441, 1.442695
    %v3445 = vpow.pop %v3444
    %v3446 = vadd.f32 %v3443, 1.0
    %v3447 = vadd.f32 %v3445, 1.0
    %v3448 = vrcp.pop %v3446
    %v3449 = vmul.f32 1.0, %v3448
    %v3450 = vrcp.pop %v3447
    %v3451 = vmul.f32 1.0, %v3450
    %v3452 = vtanh.pop %v3422
    %v3453 = vtanh.pop %v3426
    %v3454 = vxor.u32 %v3423, 2147483648
    %v3455 = vxor.u32 %v3427, 2147483648
    %v3456 = vmul.f32 %v3454, 1.442695
    %v3457 = vpow.pop %v3456
    %v3458 = vmul.f32 %v3455, 1.442695
    %v3459 = vpow.pop %v3458
    %v3460 = vadd.f32 %v3457, 1.0
    %v3461 = vadd.f32 %v3459, 1.0
    %v3462 = vrcp.pop %v3460
    %v3463 = vmul.f32 1.0, %v3462
    %v3464 = vrcp.pop %v3461
    %v3465 = vmul.f32 1.0, %v3464
    %v3466 = vmul.f32 %v3449, %v3118
    %v3467 = vmul.f32 %v3451, %v3119
    %v3468 = vmul.f32 %v3437, %v3452
    %v3469 = vmul.f32 %v3439, %v3453
    %v3470 = vadd.f32 %v3466, %v3468
    %v3471 = vadd.f32 %v3467, %v3469
    %v3472 = vtanh.pop %v3470
    %v3473 = vtanh.pop %v3471
    %v3474 = vmul.f32 %v3463, %v3472
    %v3475 = vmul.f32 %v3465, %v3473
    %v3476 = vpack.c.bf16 %v3475, %v3474
    %s3477 = scalar_lea.vmem [#allocation2], 56
    %3478 = vst [vmem:[%s3477] sm:$0xff] %v3476
    %v3479 = vld [vmem:[#allocation2] sm:$0xff]
    %v3480 = vld [vmem:[#allocation2 + $0x8] sm:$0xff]
    %v3481 = vld [vmem:[#allocation2 + $0x10] sm:$0xff]
    %v3482 = vld [vmem:[#allocation2 + $0x18] sm:$0xff]
    %v3483 = vld [vmem:[#allocation2 + $0x20] sm:$0xff]
    %v3484 = vld [vmem:[#allocation2 + $0x28] sm:$0xff]
    %v3485 = vld [vmem:[#allocation2 + $0x30] sm:$0xff]
    %v3486 = vld [vmem:[#allocation2 + $0x38] sm:$0xff]
    %v3487 = vld [vmem:[#allocation11] sm:$0xff]
    %v3488 = vld [vmem:[#allocation11 + $0x8] sm:$0xff]
    %v3489 = vld [vmem:[#allocation11 + $0x10] sm:$0xff]
    %v3490 = vld [vmem:[#allocation11 + $0x18] sm:$0xff]
    %v3491 = vld [vmem:[#allocation11 + $0x20] sm:$0xff]
    %v3492 = vld [vmem:[#allocation11 + $0x28] sm:$0xff]
    %v3493 = vld [vmem:[#allocation11 + $0x30] sm:$0xff]
    %v3494 = vld [vmem:[#allocation11 + $0x38] sm:$0xff]
    %v3495 = vld [vmem:[#allocation11 + $0x40] sm:$0xff]
    %v3496 = vld [vmem:[#allocation11 + $0x48] sm:$0xff]
    %v3497 = vld [vmem:[#allocation11 + $0x50] sm:$0xff]
    %v3498 = vld [vmem:[#allocation11 + $0x58] sm:$0xff]
    %v3499 = vld [vmem:[#allocation11 + $0x60] sm:$0xff]
    %v3500 = vld [vmem:[#allocation11 + $0x68] sm:$0xff]
    %v3501 = vld [vmem:[#allocation11 + $0x70] sm:$0xff]
    %v3502 = vld [vmem:[#allocation11 + $0x78] sm:$0xff]
    %v3503 = vld [vmem:[#allocation11 + $0x80] sm:$0xff]
    %v3504 = vld [vmem:[#allocation11 + $0x88] sm:$0xff]
    %v3505 = vld [vmem:[#allocation11 + $0x90] sm:$0xff]
    %v3506 = vld [vmem:[#allocation11 + $0x98] sm:$0xff]
    %v3507 = vld [vmem:[#allocation11 + $0xa0] sm:$0xff]
    %v3508 = vld [vmem:[#allocation11 + $0xa8] sm:$0xff]
    %v3509 = vld [vmem:[#allocation11 + $0xb0] sm:$0xff]
    %v3510 = vld [vmem:[#allocation11 + $0xb8] sm:$0xff]
    %v3511 = vld [vmem:[#allocation11 + $0xc0] sm:$0xff]
    %v3512 = vld [vmem:[#allocation11 + $0xc8] sm:$0xff]
    %v3513 = vld [vmem:[#allocation11 + $0xd0] sm:$0xff]
    %v3514 = vld [vmem:[#allocation11 + $0xd8] sm:$0xff]
    %v3515 = vld [vmem:[#allocation11 + $0xe0] sm:$0xff]
    %v3516 = vld [vmem:[#allocation11 + $0xe8] sm:$0xff]
    %v3517 = vld [vmem:[#allocation11 + $0xf0] sm:$0xff]
    %v3518 = vld [vmem:[#allocation11 + $0xf8] sm:$0xff]
    %v3519 = vld [vmem:[%s6] sm:$0xf]
    %v3521 = vlaneseq
    %v3522 = vshrl.u32 %v3521, 7
    %v3523 = vsub.s32 0, %v3522
    %v3524 = vrot.slane %v3519, %v3523
    %v3525 = vlaneseq
    %v3526 = vshrl.u32 %v3525, 7
    %v3527 = vsub.s32 1, %v3526
    %v3528 = vrot.slane %v3519, %v3527
    %v3529 = vlaneseq
    %v3530 = vshrl.u32 %v3529, 7
    %v3531 = vsub.s32 2, %v3530
    %v3532 = vrot.slane %v3519, %v3531
    %v3533 = vlaneseq
    %v3534 = vshrl.u32 %v3533, 7
    %v3535 = vsub.s32 3, %v3534
    %v3536 = vrot.slane %v3519, %v3535
    %v3573 = vunpack.c.l.b16 %v3487
    %v3574 = vunpack.c.h.b16 %v3487
    %v3575 = vunpack.c.l.b16 %v3488
    %v3576 = vunpack.c.h.b16 %v3488
    %v3577 = vunpack.c.l.b16 %v3489
    %v3578 = vunpack.c.h.b16 %v3489
    %v3579 = vunpack.c.l.b16 %v3490
    %v3580 = vunpack.c.h.b16 %v3490
    %v3581 = vunpack.c.l.b16 %v3491
    %v3582 = vunpack.c.h.b16 %v3491
    %v3583 = vunpack.c.l.b16 %v3492
    %v3584 = vunpack.c.h.b16 %v3492
    %v3585 = vunpack.c.l.b16 %v3493
    %v3586 = vunpack.c.h.b16 %v3493
    %v3587 = vunpack.c.l.b16 %v3494
    %v3588 = vunpack.c.h.b16 %v3494
    %v3589 = vunpack.c.l.b16 %v3495
    %v3590 = vunpack.c.h.b16 %v3495
    %v3591 = vunpack.c.l.b16 %v3496
    %v3592 = vunpack.c.h.b16 %v3496
    %v3593 = vunpack.c.l.b16 %v3497
    %v3594 = vunpack.c.h.b16 %v3497
    %v3595 = vunpack.c.l.b16 %v3498
    %v3596 = vunpack.c.h.b16 %v3498
    %v3597 = vunpack.c.l.b16 %v3499
    %v3598 = vunpack.c.h.b16 %v3499
    %v3599 = vunpack.c.l.b16 %v3500
    %v3600 = vunpack.c.h.b16 %v3500
    %v3601 = vunpack.c.l.b16 %v3501
    %v3602 = vunpack.c.h.b16 %v3501
    %v3603 = vunpack.c.l.b16 %v3502
    %v3604 = vunpack.c.h.b16 %v3502
    %v3605 = vunpack.c.l.b16 %v3503
    %v3606 = vunpack.c.h.b16 %v3503
    %v3607 = vunpack.c.l.b16 %v3504
    %v3608 = vunpack.c.h.b16 %v3504
    %v3609 = vunpack.c.l.b16 %v3505
    %v3610 = vunpack.c.h.b16 %v3505
    %v3611 = vunpack.c.l.b16 %v3506
    %v3612 = vunpack.c.h.b16 %v3506
    %v3613 = vunpack.c.l.b16 %v3507
    %v3614 = vunpack.c.h.b16 %v3507
    %v3615 = vunpack.c.l.b16 %v3508
    %v3616 = vunpack.c.h.b16 %v3508
    %v3617 = vunpack.c.l.b16 %v3509
    %v3618 = vunpack.c.h.b16 %v3509
    %v3619 = vunpack.c.l.b16 %v3510
    %v3620 = vunpack.c.h.b16 %v3510
    %v3621 = vunpack.c.l.b16 %v3511
    %v3622 = vunpack.c.h.b16 %v3511
    %v3623 = vunpack.c.l.b16 %v3512
    %v3624 = vunpack.c.h.b16 %v3512
    %v3625 = vunpack.c.l.b16 %v3513
    %v3626 = vunpack.c.h.b16 %v3513
    %v3627 = vunpack.c.l.b16 %v3514
    %v3628 = vunpack.c.h.b16 %v3514
    %v3629 = vunpack.c.l.b16 %v3515
    %v3630 = vunpack.c.h.b16 %v3515
    %v3631 = vunpack.c.l.b16 %v3516
    %v3632 = vunpack.c.h.b16 %v3516
    %v3633 = vunpack.c.l.b16 %v3517
    %v3634 = vunpack.c.h.b16 %v3517
    %v3635 = vunpack.c.l.b16 %v3518
    %v3636 = vunpack.c.h.b16 %v3518
    %v3637 = vpack.c.b16 %v3577, %v3573
    %v3638 = vpack.c.b16 %v3578, %v3574
    %v3639 = vpack.c.b16 %v3579, %v3575
    %v3640 = vpack.c.b16 %v3580, %v3576
    %v3641 = vpack.c.b16 %v3585, %v3581
    %v3642 = vpack.c.b16 %v3586, %v3582
    %v3643 = vpack.c.b16 %v3587, %v3583
    %v3644 = vpack.c.b16 %v3588, %v3584
    %v3645 = vpack.c.b16 %v3593, %v3589
    %v3646 = vpack.c.b16 %v3594, %v3590
    %v3647 = vpack.c.b16 %v3595, %v3591
    %v3648 = vpack.c.b16 %v3596, %v3592
    %v3649 = vpack.c.b16 %v3601, %v3597
    %v3650 = vpack.c.b16 %v3602, %v3598
    %v3651 = vpack.c.b16 %v3603, %v3599
    %v3652 = vpack.c.b16 %v3604, %v3600
    %v3653 = vpack.c.b16 %v3609, %v3605
    %v3654 = vpack.c.b16 %v3610, %v3606
    %v3655 = vpack.c.b16 %v3611, %v3607
    %v3656 = vpack.c.b16 %v3612, %v3608
    %v3657 = vpack.c.b16 %v3617, %v3613
    %v3658 = vpack.c.b16 %v3618, %v3614
    %v3659 = vpack.c.b16 %v3619, %v3615
    %v3660 = vpack.c.b16 %v3620, %v3616
    %v3661 = vpack.c.b16 %v3625, %v3621
    %v3662 = vpack.c.b16 %v3626, %v3622
    %v3663 = vpack.c.b16 %v3627, %v3623
    %v3664 = vpack.c.b16 %v3628, %v3624
    %v3665 = vpack.c.b16 %v3633, %v3629
    %v3666 = vpack.c.b16 %v3634, %v3630
    %v3667 = vpack.c.b16 %v3635, %v3631
    %v3668 = vpack.c.b16 %v3636, %v3632
    %3701 = vmatprep.subr.bf16.mxu0 %v3638
    %3702 = vmatpush1.bf16.msra.mxu0 %v3637
    %3703 = vmatprep.subr.bf16.mxu0 %v3642
    %3704 = vmatpush1.bf16.msra.mxu0 %v3641
    %3705 = vmatprep.subr.bf16.mxu0 %v3646
    %3706 = vmatpush1.bf16.msra.mxu0 %v3645
    %3707 = vmatprep.subr.bf16.mxu0 %v3650
    %3708 = vmatpush1.bf16.msra.mxu0 %v3649
    %3709 = vmatprep.subr.bf16.mxu0 %v3654
    %3710 = vmatpush1.bf16.msra.mxu0 %v3653
    %3711 = vmatprep.subr.bf16.mxu0 %v3658
    %3712 = vmatpush1.bf16.msra.mxu0 %v3657
    %3713 = vmatprep.subr.bf16.mxu0 %v3662
    %3714 = vmatpush1.bf16.msra.mxu0 %v3661
    %3715 = vmatprep.subr.bf16.mxu0 %v3666
    %3716 = vmatpush1.bf16.msra.mxu0 %v3665
    %3717 = vmatprep.subr.bf16.mxu0 0
    %3718 = vmatpush1.bf16.msra.mxu0 0
    %3719 = vmatprep.subr.bf16.mxu0 0
    %3720 = vmatpush1.bf16.msra.mxu0 0
    %3721 = vmatprep.subr.bf16.mxu0 0
    %3722 = vmatpush1.bf16.msra.mxu0 0
    %3723 = vmatprep.subr.bf16.mxu0 0
    %3724 = vmatpush1.bf16.msra.mxu0 0
    %3725 = vmatprep.subr.bf16.mxu0 0
    %3726 = vmatpush1.bf16.msra.mxu0 0
    %3727 = vmatprep.subr.bf16.mxu0 0
    %3728 = vmatpush1.bf16.msra.mxu0 0
    %3729 = vmatprep.subr.bf16.mxu0 0
    %3730 = vmatpush1.bf16.msra.mxu0 0
    %3731 = vmatprep.subr.bf16.mxu0 0
    %3732 = vmatpush1.bf16.msra.mxu0 0
    %3733 = vmatprep.mubr.bf16.mxu0 0
    %3734 = vmatmul.mubr.bf16.gmra.mrb[0].mxu0 %v3479
    %v3735 = vpop.f32.mrb[0].mxu0
    %v3736 = vadd.f32 %v3524, %v3735
    %v3737 = vpop.f32.mrb[0].mxu0
    %v3738 = vadd.f32 %v3528, %v3737
    %v3739 = vpop.f32.mrb[0].mxu0
    %v3740 = vadd.f32 %v3524, %v3739
    %v3741 = vpop.f32.mrb[0].mxu0
    %v3742 = vadd.f32 %v3528, %v3741
    %3743 = vmatprep.mubr.bf16.mxu0 0
    %3744 = vmatmul.mubr.bf16.gmra.mrb[0].mxu0 %v3480
    %v3745 = vpop.f32.mrb[0].mxu0
    %v3746 = vadd.f32 %v3524, %v3745
    %v3747 = vpop.f32.mrb[0].mxu0
    %v3748 = vadd.f32 %v3528, %v3747
    %v3749 = vpop.f32.mrb[0].mxu0
    %v3750 = vadd.f32 %v3524, %v3749
    %v3751 = vpop.f32.mrb[0].mxu0
    %v3752 = vadd.f32 %v3528, %v3751
    %3753 = vmatprep.mubr.bf16.mxu0 0
    %3754 = vmatmul.mubr.bf16.gmra.mrb[0].mxu0 %v3481
    %v3755 = vpop.f32.mrb[0].mxu0
    %v3756 = vadd.f32 %v3524, %v3755
    %v3757 = vpop.f32.mrb[0].mxu0
    %v3758 = vadd.f32 %v3528, %v3757
    %v3759 = vpop.f32.mrb[0].mxu0
    %v3760 = vadd.f32 %v3524, %v3759
    %v3761 = vpop.f32.mrb[0].mxu0
    %v3762 = vadd.f32 %v3528, %v3761
    %3763 = vmatprep.mubr.bf16.mxu0 0
    %3764 = vmatmul.mubr.bf16.gmra.mrb[0].mxu0 %v3482
    %v3765 = vpop.f32.mrb[0].mxu0
    %v3766 = vadd.f32 %v3524, %v3765
    %v3767 = vpop.f32.mrb[0].mxu0
    %v3768 = vadd.f32 %v3528, %v3767
    %v3769 = vpop.f32.mrb[0].mxu0
    %v3770 = vadd.f32 %v3524, %v3769
    %v3771 = vpop.f32.mrb[0].mxu0
    %v3772 = vadd.f32 %v3528, %v3771
    %3773 = vmatprep.mubr.bf16.mxu0 0
    %3774 = vmatmul.mubr.bf16.gmra.mrb[0].mxu0 %v3483
    %v3775 = vpop.f32.mrb[0].mxu0
    %v3776 = vadd.f32 %v3524, %v3775
    %v3777 = vpop.f32.mrb[0].mxu0
    %v3778 = vadd.f32 %v3528, %v3777
    %v3779 = vpop.f32.mrb[0].mxu0
    %v3780 = vadd.f32 %v3524, %v3779
    %v3781 = vpop.f32.mrb[0].mxu0
    %v3782 = vadd.f32 %v3528, %v3781
    %3783 = vmatprep.mubr.bf16.mxu0 0
    %3784 = vmatmul.mubr.bf16.gmra.mrb[0].mxu0 %v3484
    %v3785 = vpop.f32.mrb[0].mxu0
    %v3786 = vadd.f32 %v3524, %v3785
    %v3787 = vpop.f32.mrb[0].mxu0
    %v3788 = vadd.f32 %v3528, %v3787
    %v3789 = vpop.f32.mrb[0].mxu0
    %v3790 = vadd.f32 %v3524, %v3789
    %v3791 = vpop.f32.mrb[0].mxu0
    %v3792 = vadd.f32 %v3528, %v3791
    %3793 = vmatprep.mubr.bf16.mxu0 0
    %3794 = vmatmul.mubr.bf16.gmra.mrb[0].mxu0 %v3485
    %v3795 = vpop.f32.mrb[0].mxu0
    %v3796 = vadd.f32 %v3524, %v3795
    %v3797 = vpop.f32.mrb[0].mxu0
    %v3798 = vadd.f32 %v3528, %v3797
    %v3799 = vpop.f32.mrb[0].mxu0
    %v3800 = vadd.f32 %v3524, %v3799
    %v3801 = vpop.f32.mrb[0].mxu0
    %v3802 = vadd.f32 %v3528, %v3801
    %3803 = vmatprep.mubr.bf16.mxu0 0
    %3804 = vmatmul.mubr.bf16.gmra.mrb[0].mxu0 %v3486
    %v3805 = vpop.f32.mrb[0].mxu0
    %v3806 = vadd.f32 %v3524, %v3805
    %v3807 = vpop.f32.mrb[0].mxu0
    %v3808 = vadd.f32 %v3528, %v3807
    %v3809 = vpop.f32.mrb[0].mxu0
    %v3810 = vadd.f32 %v3524, %v3809
    %v3811 = vpop.f32.mrb[0].mxu0
    %v3812 = vadd.f32 %v3528, %v3811
    %3813 = vdwg.mxu0
    %3814 = vmatprep.subr.bf16.mxu0 %v3640
    %3815 = vmatpush1.bf16.msra.mxu0 %v3639
    %3816 = vmatprep.subr.bf16.mxu0 %v3644
    %3817 = vmatpush1.bf16.msra.mxu0 %v3643
    %3818 = vmatprep.subr.bf16.mxu0 %v3648
    %3819 = vmatpush1.bf16.msra.mxu0 %v3647
    %3820 = vmatprep.subr.bf16.mxu0 %v3652
    %3821 = vmatpush1.bf16.msra.mxu0 %v3651
    %3822 = vmatprep.subr.bf16.mxu0 %v3656
    %3823 = vmatpush1.bf16.msra.mxu0 %v3655
    %3824 = vmatprep.subr.bf16.mxu0 %v3660
    %3825 = vmatpush1.bf16.msra.mxu0 %v3659
    %3826 = vmatprep.subr.bf16.mxu0 %v3664
    %3827 = vmatpush1.bf16.msra.mxu0 %v3663
    %3828 = vmatprep.subr.bf16.mxu0 %v3668
    %3829 = vmatpush1.bf16.msra.mxu0 %v3667
    %3830 = vmatprep.subr.bf16.mxu0 0
    %3831 = vmatpush1.bf16.msra.mxu0 0
    %3832 = vmatprep.subr.bf16.mxu0 0
    %3833 = vmatpush1.bf16.msra.mxu0 0
    %3834 = vmatprep.subr.bf16.mxu0 0
    %3835 = vmatpush1.bf16.msra.mxu0 0
    %3836 = vmatprep.subr.bf16.mxu0 0
    %3837 = vmatpush1.bf16.msra.mxu0 0
    %3838 = vmatprep.subr.bf16.mxu0 0
    %3839 = vmatpush1.bf16.msra.mxu0 0
    %3840 = vmatprep.subr.bf16.mxu0 0
    %3841 = vmatpush1.bf16.msra.mxu0 0
    %3842 = vmatprep.subr.bf16.mxu0 0
    %3843 = vmatpush1.bf16.msra.mxu0 0
    %3844 = vmatprep.subr.bf16.mxu0 0
    %3845 = vmatpush1.bf16.msra.mxu0 0
    %3846 = vmatprep.mubr.bf16.mxu0 0
    %3847 = vmatmul.mubr.bf16.gmra.mrb[0].mxu0 %v3479
    %v3848 = vpop.f32.mrb[0].mxu0
    %v3849 = vadd.f32 %v3532, %v3848
    %v3850 = vpop.f32.mrb[0].mxu0
    %v3851 = vadd.f32 %v3536, %v3850
    %v3852 = vpop.f32.mrb[0].mxu0
    %v3853 = vadd.f32 %v3532, %v3852
    %v3854 = vpop.f32.mrb[0].mxu0
    %v3855 = vadd.f32 %v3536, %v3854
    %3856 = vmatprep.mubr.bf16.mxu0 0
    %3857 = vmatmul.mubr.bf16.gmra.mrb[0].mxu0 %v3480
    %v3858 = vpop.f32.mrb[0].mxu0
    %v3859 = vadd.f32 %v3532, %v3858
    %v3860 = vpop.f32.mrb[0].mxu0
    %v3861 = vadd.f32 %v3536, %v3860
    %v3862 = vpop.f32.mrb[0].mxu0
    %v3863 = vadd.f32 %v3532, %v3862
    %v3864 = vpop.f32.mrb[0].mxu0
    %v3865 = vadd.f32 %v3536, %v3864
    %3866 = vmatprep.mubr.bf16.mxu0 0
    %3867 = vmatmul.mubr.bf16.gmra.mrb[0].mxu0 %v3481
    %v3868 = vpop.f32.mrb[0].mxu0
    %v3869 = vadd.f32 %v3532, %v3868
    %v3870 = vpop.f32.mrb[0].mxu0
    %v3871 = vadd.f32 %v3536, %v3870
    %v3872 = vpop.f32.mrb[0].mxu0
    %v3873 = vadd.f32 %v3532, %v3872
    %v3874 = vpop.f32.mrb[0].mxu0
    %v3875 = vadd.f32 %v3536, %v3874
    %3876 = vmatprep.mubr.bf16.mxu0 0
    %3877 = vmatmul.mubr.bf16.gmra.mrb[0].mxu0 %v3482
    %v3878 = vpop.f32.mrb[0].mxu0
    %v3879 = vadd.f32 %v3532, %v3878
    %v3880 = vpop.f32.mrb[0].mxu0
    %v3881 = vadd.f32 %v3536, %v3880
    %v3882 = vpop.f32.mrb[0].mxu0
    %v3883 = vadd.f32 %v3532, %v3882
    %v3884 = vpop.f32.mrb[0].mxu0
    %v3885 = vadd.f32 %v3536, %v3884
    %3886 = vmatprep.mubr.bf16.mxu0 0
    %3887 = vmatmul.mubr.bf16.gmra.mrb[0].mxu0 %v3483
    %v3888 = vpop.f32.mrb[0].mxu0
    %v3889 = vadd.f32 %v3532, %v3888
    %v3890 = vpop.f32.mrb[0].mxu0
    %v3891 = vadd.f32 %v3536, %v3890
    %v3892 = vpop.f32.mrb[0].mxu0
    %v3893 = vadd.f32 %v3532, %v3892
    %v3894 = vpop.f32.mrb[0].mxu0
    %v3895 = vadd.f32 %v3536, %v3894
    %3896 = vmatprep.mubr.bf16.mxu0 0
    %3897 = vmatmul.mubr.bf16.gmra.mrb[0].mxu0 %v3484
    %v3898 = vpop.f32.mrb[0].mxu0
    %v3899 = vadd.f32 %v3532, %v3898
    %v3900 = vpop.f32.mrb[0].mxu0
    %v3901 = vadd.f32 %v3536, %v3900
    %v3902 = vpop.f32.mrb[0].mxu0
    %v3903 = vadd.f32 %v3532, %v3902
    %v3904 = vpop.f32.mrb[0].mxu0
    %v3905 = vadd.f32 %v3536, %v3904
    %3906 = vmatprep.mubr.bf16.mxu0 0
    %3907 = vmatmul.mubr.bf16.gmra.mrb[0].mxu0 %v3485
    %v3908 = vpop.f32.mrb[0].mxu0
    %v3909 = vadd.f32 %v3532, %v3908
    %v3910 = vpop.f32.mrb[0].mxu0
    %v3911 = vadd.f32 %v3536, %v3910
    %v3912 = vpop.f32.mrb[0].mxu0
    %v3913 = vadd.f32 %v3532, %v3912
    %v3914 = vpop.f32.mrb[0].mxu0
    %v3915 = vadd.f32 %v3536, %v3914
    %3916 = vmatprep.mubr.bf16.mxu0 0
    %3917 = vmatmul.mubr.bf16.gmra.mrb[0].mxu0 %v3486
    %v3918 = vpop.f32.mrb[0].mxu0
    %v3919 = vadd.f32 %v3532, %v3918
    %v3920 = vpop.f32.mrb[0].mxu0
    %v3921 = vadd.f32 %v3536, %v3920
    %v3922 = vpop.f32.mrb[0].mxu0
    %v3923 = vadd.f32 %v3532, %v3922
    %v3924 = vpop.f32.mrb[0].mxu0
    %v3925 = vadd.f32 %v3536, %v3924
    %3926 = vdwg.mxu0
    %v3927 = vpack.c.bf16 %v3740, %v3736
    %v3928 = vpack.c.bf16 %v3742, %v3738
    %v3929 = vpack.c.bf16 %v3853, %v3849
    %v3930 = vpack.c.bf16 %v3855, %v3851
    %v3931 = vpack.c.bf16 %v3750, %v3746
    %v3932 = vpack.c.bf16 %v3752, %v3748
    %v3933 = vpack.c.bf16 %v3863, %v3859
    %v3934 = vpack.c.bf16 %v3865, %v3861
    %v3935 = vpack.c.bf16 %v3760, %v3756
    %v3936 = vpack.c.bf16 %v3762, %v3758
    %v3937 = vpack.c.bf16 %v3873, %v3869
    %v3938 = vpack.c.bf16 %v3875, %v3871
    %v3939 = vpack.c.bf16 %v3770, %v3766
    %v3940 = vpack.c.bf16 %v3772, %v3768
    %v3941 = vpack.c.bf16 %v3883, %v3879
    %v3942 = vpack.c.bf16 %v3885, %v3881
    %v3943 = vpack.c.bf16 %v3780, %v3776
    %v3944 = vpack.c.bf16 %v3782, %v3778
    %v3945 = vpack.c.bf16 %v3893, %v3889
    %v3946 = vpack.c.bf16 %v3895, %v3891
    %v3947 = vpack.c.bf16 %v3790, %v3786
    %v3948 = vpack.c.bf16 %v3792, %v3788
    %v3949 = vpack.c.bf16 %v3903, %v3899
    %v3950 = vpack.c.bf16 %v3905, %v3901
    %v3951 = vpack.c.bf16 %v3800, %v3796
    %v3952 = vpack.c.bf16 %v3802, %v3798
    %v3953 = vpack.c.bf16 %v3913, %v3909
    %v3954 = vpack.c.bf16 %v3915, %v3911
    %v3955 = vpack.c.bf16 %v3810, %v3806
    %v3956 = vpack.c.bf16 %v3812, %v3808
    %v3957 = vpack.c.bf16 %v3923, %v3919
    %v3958 = vpack.c.bf16 %v3925, %v3921
    %3959 = vst [vmem:[#allocation4] sm:$0xff] %v3927
    %3960 = vst [vmem:[#allocation4 + $0x8] sm:$0xff] %v3928
    %3961 = vst [vmem:[#allocation4 + $0x10] sm:$0xff] %v3929
    %3962 = vst [vmem:[#allocation4 + $0x18] sm:$0xff] %v3930
    %3963 = vst [vmem:[#allocation4 + $0x20] sm:$0xff] %v3931
    %3964 = vst [vmem:[#allocation4 + $0x28] sm:$0xff] %v3932
    %3965 = vst [vmem:[#allocation4 + $0x30] sm:$0xff] %v3933
    %3966 = vst [vmem:[#allocation4 + $0x38] sm:$0xff] %v3934
    %3967 = vst [vmem:[#allocation4 + $0x40] sm:$0xff] %v3935
    %3968 = vst [vmem:[#allocation4 + $0x48] sm:$0xff] %v3936
    %3969 = vst [vmem:[#allocation4 + $0x50] sm:$0xff] %v3937
    %3970 = vst [vmem:[#allocation4 + $0x58] sm:$0xff] %v3938
    %3971 = vst [vmem:[#allocation4 + $0x60] sm:$0xff] %v3939
    %3972 = vst [vmem:[#allocation4 + $0x68] sm:$0xff] %v3940
    %3973 = vst [vmem:[#allocation4 + $0x70] sm:$0xff] %v3941
    %3974 = vst [vmem:[#allocation4 + $0x78] sm:$0xff] %v3942
    %3975 = vst [vmem:[#allocation4 + $0x80] sm:$0xff] %v3943
    %3976 = vst [vmem:[#allocation4 + $0x88] sm:$0xff] %v3944
    %3977 = vst [vmem:[#allocation4 + $0x90] sm:$0xff] %v3945
    %3978 = vst [vmem:[#allocation4 + $0x98] sm:$0xff] %v3946
    %3979 = vst [vmem:[#allocation4 + $0xa0] sm:$0xff] %v3947
    %3980 = vst [vmem:[#allocation4 + $0xa8] sm:$0xff] %v3948
    %3981 = vst [vmem:[#allocation4 + $0xb0] sm:$0xff] %v3949
    %3982 = vst [vmem:[#allocation4 + $0xb8] sm:$0xff] %v3950
    %3983 = vst [vmem:[#allocation4 + $0xc0] sm:$0xff] %v3951
    %3984 = vst [vmem:[#allocation4 + $0xc8] sm:$0xff] %v3952
    %3985 = vst [vmem:[#allocation4 + $0xd0] sm:$0xff] %v3953
    %3986 = vst [vmem:[#allocation4 + $0xd8] sm:$0xff] %v3954
    %3987 = vst [vmem:[#allocation4 + $0xe0] sm:$0xff] %v3955
    %3988 = vst [vmem:[#allocation4 + $0xe8] sm:$0xff] %v3956
    %3989 = vst [vmem:[#allocation4 + $0xf0] sm:$0xff] %v3957
    %3990 = vst [vmem:[#allocation4 + $0xf8] sm:$0xff] %v3958
    %v3991 = vld [vmem:[%s666] sm:$0xff]
    %v3992 = vld [vmem:[%s666 + $0x8] sm:$0xff]
    %v3993 = vld [vmem:[%s666 + $0x10] sm:$0xff]
    %v3994 = vld [vmem:[%s666 + $0x18] sm:$0xff]
    %v3995 = vunpack.c.l.bf16 %v3991
    %v3996 = vunpack.c.l.bf16 %v3992
    %v3997 = vunpack.c.l.bf16 %v3993
    %v3998 = vunpack.c.l.bf16 %v3994
    %v3999 = vunpack.c.h.bf16 %v3991
    %v4000 = vunpack.c.h.bf16 %v3992
    %v4001 = vunpack.c.h.bf16 %v3993
    %v4002 = vunpack.c.h.bf16 %v3994
    %v4003 = vld [vmem:[#allocation13] sm:$0xff]
    %v4004 = vld [vmem:[#allocation13 + $0x8] sm:$0xff]
    %v4005 = vld [vmem:[#allocation13 + $0x10] sm:$0xff]
    %v4006 = vld [vmem:[#allocation13 + $0x18] sm:$0xff]
    %v4007 = vld [vmem:[#allocation13 + $0x20] sm:$0xff]
    %v4008 = vld [vmem:[#allocation13 + $0x28] sm:$0xff]
    %v4009 = vld [vmem:[#allocation13 + $0x30] sm:$0xff]
    %v4010 = vld [vmem:[#allocation13 + $0x38] sm:$0xff]
    %v4011 = vld [vmem:[#allocation13 + $0x40] sm:$0xff]
    %v4012 = vld [vmem:[#allocation13 + $0x48] sm:$0xff]
    %v4013 = vld [vmem:[#allocation13 + $0x50] sm:$0xff]
    %v4014 = vld [vmem:[#allocation13 + $0x58] sm:$0xff]
    %v4015 = vld [vmem:[#allocation13 + $0x60] sm:$0xff]
    %v4016 = vld [vmem:[#allocation13 + $0x68] sm:$0xff]
    %v4017 = vld [vmem:[#allocation13 + $0x70] sm:$0xff]
    %v4018 = vld [vmem:[#allocation13 + $0x78] sm:$0xff]
    %v4019 = vld [vmem:[#allocation13 + $0x80] sm:$0xff]
    %v4020 = vld [vmem:[#allocation13 + $0x88] sm:$0xff]
    %v4021 = vld [vmem:[#allocation13 + $0x90] sm:$0xff]
    %v4022 = vld [vmem:[#allocation13 + $0x98] sm:$0xff]
    %v4023 = vld [vmem:[#allocation13 + $0xa0] sm:$0xff]
    %v4024 = vld [vmem:[#allocation13 + $0xa8] sm:$0xff]
    %v4025 = vld [vmem:[#allocation13 + $0xb0] sm:$0xff]
    %v4026 = vld [vmem:[#allocation13 + $0xb8] sm:$0xff]
    %v4027 = vld [vmem:[#allocation13 + $0xc0] sm:$0xff]
    %v4028 = vld [vmem:[#allocation13 + $0xc8] sm:$0xff]
    %v4029 = vld [vmem:[#allocation13 + $0xd0] sm:$0xff]
    %v4030 = vld [vmem:[#allocation13 + $0xd8] sm:$0xff]
    %v4031 = vld [vmem:[#allocation13 + $0xe0] sm:$0xff]
    %v4032 = vld [vmem:[#allocation13 + $0xe8] sm:$0xff]
    %v4033 = vld [vmem:[#allocation13 + $0xf0] sm:$0xff]
    %v4034 = vld [vmem:[#allocation13 + $0xf8] sm:$0xff]
    %v4067 = vunpack.c.l.b16 %v4003
    %v4068 = vunpack.c.h.b16 %v4003
    %v4069 = vunpack.c.l.b16 %v4004
    %v4070 = vunpack.c.h.b16 %v4004
    %v4071 = vunpack.c.l.b16 %v4005
    %v4072 = vunpack.c.h.b16 %v4005
    %v4073 = vunpack.c.l.b16 %v4006
    %v4074 = vunpack.c.h.b16 %v4006
    %v4075 = vunpack.c.l.b16 %v4007
    %v4076 = vunpack.c.h.b16 %v4007
    %v4077 = vunpack.c.l.b16 %v4008
    %v4078 = vunpack.c.h.b16 %v4008
    %v4079 = vunpack.c.l.b16 %v4009
    %v4080 = vunpack.c.h.b16 %v4009
    %v4081 = vunpack.c.l.b16 %v4010
    %v4082 = vunpack.c.h.b16 %v4010
    %v4083 = vunpack.c.l.b16 %v4011
    %v4084 = vunpack.c.h.b16 %v4011
    %v4085 = vunpack.c.l.b16 %v4012
    %v4086 = vunpack.c.h.b16 %v4012
    %v4087 = vunpack.c.l.b16 %v4013
    %v4088 = vunpack.c.h.b16 %v4013
    %v4089 = vunpack.c.l.b16 %v4014
    %v4090 = vunpack.c.h.b16 %v4014
    %v4091 = vunpack.c.l.b16 %v4015
    %v4092 = vunpack.c.h.b16 %v4015
    %v4093 = vunpack.c.l.b16 %v4016
    %v4094 = vunpack.c.h.b16 %v4016
    %v4095 = vunpack.c.l.b16 %v4017
    %v4096 = vunpack.c.h.b16 %v4017
    %v4097 = vunpack.c.l.b16 %v4018
    %v4098 = vunpack.c.h.b16 %v4018
    %v4099 = vunpack.c.l.b16 %v4019
    %v4100 = vunpack.c.h.b16 %v4019
    %v4101 = vunpack.c.l.b16 %v4020
    %v4102 = vunpack.c.h.b16 %v4020
    %v4103 = vunpack.c.l.b16 %v4021
    %v4104 = vunpack.c.h.b16 %v4021
    %v4105 = vunpack.c.l.b16 %v4022
    %v4106 = vunpack.c.h.b16 %v4022
    %v4107 = vunpack.c.l.b16 %v4023
    %v4108 = vunpack.c.h.b16 %v4023
    %v4109 = vunpack.c.l.b16 %v4024
    %v4110 = vunpack.c.h.b16 %v4024
    %v4111 = vunpack.c.l.b16 %v4025
    %v4112 = vunpack.c.h.b16 %v4025
    %v4113 = vunpack.c.l.b16 %v4026
    %v4114 = vunpack.c.h.b16 %v4026
    %v4115 = vunpack.c.l.b16 %v4027
    %v4116 = vunpack.c.h.b16 %v4027
    %v4117 = vunpack.c.l.b16 %v4028
    %v4118 = vunpack.c.h.b16 %v4028
    %v4119 = vunpack.c.l.b16 %v4029
    %v4120 = vunpack.c.h.b16 %v4029
    %v4121 = vunpack.c.l.b16 %v4030
    %v4122 = vunpack.c.h.b16 %v4030
    %v4123 = vunpack.c.l.b16 %v4031
    %v4124 = vunpack.c.h.b16 %v4031
    %v4125 = vunpack.c.l.b16 %v4032
    %v4126 = vunpack.c.h.b16 %v4032
    %v4127 = vunpack.c.l.b16 %v4033
    %v4128 = vunpack.c.h.b16 %v4033
    %v4129 = vunpack.c.l.b16 %v4034
    %v4130 = vunpack.c.h.b16 %v4034
    %v4131 = vpack.c.b16 %v4071, %v4067
    %v4132 = vpack.c.b16 %v4072, %v4068
    %v4133 = vpack.c.b16 %v4073, %v4069
    %v4134 = vpack.c.b16 %v4074, %v4070
    %v4135 = vpack.c.b16 %v4079, %v4075
    %v4136 = vpack.c.b16 %v4080, %v4076
    %v4137 = vpack.c.b16 %v4081, %v4077
    %v4138 = vpack.c.b16 %v4082, %v4078
    %v4139 = vpack.c.b16 %v4087, %v4083
    %v4140 = vpack.c.b16 %v4088, %v4084
    %v4141 = vpack.c.b16 %v4089, %v4085
    %v4142 = vpack.c.b16 %v4090, %v4086
    %v4143 = vpack.c.b16 %v4095, %v4091
    %v4144 = vpack.c.b16 %v4096, %v4092
    %v4145 = vpack.c.b16 %v4097, %v4093
    %v4146 = vpack.c.b16 %v4098, %v4094
    %v4147 = vpack.c.b16 %v4103, %v4099
    %v4148 = vpack.c.b16 %v4104, %v4100
    %v4149 = vpack.c.b16 %v4105, %v4101
    %v4150 = vpack.c.b16 %v4106, %v4102
    %v4151 = vpack.c.b16 %v4111, %v4107
    %v4152 = vpack.c.b16 %v4112, %v4108
    %v4153 = vpack.c.b16 %v4113, %v4109
    %v4154 = vpack.c.b16 %v4114, %v4110
    %v4155 = vpack.c.b16 %v4119, %v4115
    %v4156 = vpack.c.b16 %v4120, %v4116
    %v4157 = vpack.c.b16 %v4121, %v4117
    %v4158 = vpack.c.b16 %v4122, %v4118
    %v4159 = vpack.c.b16 %v4127, %v4123
    %v4160 = vpack.c.b16 %v4128, %v4124
    %v4161 = vpack.c.b16 %v4129, %v4125
    %v4162 = vpack.c.b16 %v4130, %v4126
    %4195 = vmatprep.subr.bf16.mxu0 %v4132
    %4196 = vmatpush1.bf16.msra.mxu0 %v4131
    %4197 = vmatprep.subr.bf16.mxu0 %v4136
    %4198 = vmatpush1.bf16.msra.mxu0 %v4135
    %4199 = vmatprep.subr.bf16.mxu0 %v4140
    %4200 = vmatpush1.bf16.msra.mxu0 %v4139
    %4201 = vmatprep.subr.bf16.mxu0 %v4144
    %4202 = vmatpush1.bf16.msra.mxu0 %v4143
    %4203 = vmatprep.subr.bf16.mxu0 %v4148
    %4204 = vmatpush1.bf16.msra.mxu0 %v4147
    %4205 = vmatprep.subr.bf16.mxu0 %v4152
    %4206 = vmatpush1.bf16.msra.mxu0 %v4151
    %4207 = vmatprep.subr.bf16.mxu0 %v4156
    %4208 = vmatpush1.bf16.msra.mxu0 %v4155
    %4209 = vmatprep.subr.bf16.mxu0 %v4160
    %4210 = vmatpush1.bf16.msra.mxu0 %v4159
    %4211 = vmatprep.subr.bf16.mxu0 0
    %4212 = vmatpush1.bf16.msra.mxu0 0
    %4213 = vmatprep.subr.bf16.mxu0 0
    %4214 = vmatpush1.bf16.msra.mxu0 0
    %4215 = vmatprep.subr.bf16.mxu0 0
    %4216 = vmatpush1.bf16.msra.mxu0 0
    %4217 = vmatprep.subr.bf16.mxu0 0
    %4218 = vmatpush1.bf16.msra.mxu0 0
    %4219 = vmatprep.subr.bf16.mxu0 0
    %4220 = vmatpush1.bf16.msra.mxu0 0
    %4221 = vmatprep.subr.bf16.mxu0 0
    %4222 = vmatpush1.bf16.msra.mxu0 0
    %4223 = vmatprep.subr.bf16.mxu0 0
    %4224 = vmatpush1.bf16.msra.mxu0 0
    %4225 = vmatprep.subr.bf16.mxu0 0
    %4226 = vmatpush1.bf16.msra.mxu0 0
    %4227 = vmatprep.mubr.bf16.mxu0 0
    %4228 = vmatmul.mubr.bf16.gmra.mrb[0].mxu0 0
    %v4229 = vpop.f32.mrb[0].mxu0
    %v4230 = vadd.f32 0.0, %v4229
    %v4231 = vpop.f32.mrb[0].mxu0
    %v4232 = vadd.f32 0.0, %v4231
    %v4233 = vpop.f32.mrb[0].mxu0
    %v4234 = vadd.f32 0.0, %v4233
    %v4235 = vpop.f32.mrb[0].mxu0
    %v4236 = vadd.f32 0.0, %v4235
    %4237 = vdwg.mxu0
    %4238 = vmatprep.subr.bf16.mxu0 %v4134
    %4239 = vmatpush1.bf16.msra.mxu0 %v4133
    %4240 = vmatprep.subr.bf16.mxu0 %v4138
    %4241 = vmatpush1.bf16.msra.mxu0 %v4137
    %4242 = vmatprep.subr.bf16.mxu0 %v4142
    %4243 = vmatpush1.bf16.msra.mxu0 %v4141
    %4244 = vmatprep.subr.bf16.mxu0 %v4146
    %4245 = vmatpush1.bf16.msra.mxu0 %v4145
    %4246 = vmatprep.subr.bf16.mxu0 %v4150
    %4247 = vmatpush1.bf16.msra.mxu0 %v4149
    %4248 = vmatprep.subr.bf16.mxu0 %v4154
    %4249 = vmatpush1.bf16.msra.mxu0 %v4153
    %4250 = vmatprep.subr.bf16.mxu0 %v4158
    %4251 = vmatpush1.bf16.msra.mxu0 %v4157
    %4252 = vmatprep.subr.bf16.mxu0 %v4162
    %4253 = vmatpush1.bf16.msra.mxu0 %v4161
    %4254 = vmatprep.subr.bf16.mxu0 0
    %4255 = vmatpush1.bf16.msra.mxu0 0
    %4256 = vmatprep.subr.bf16.mxu0 0
    %4257 = vmatpush1.bf16.msra.mxu0 0
    %4258 = vmatprep.subr.bf16.mxu0 0
    %4259 = vmatpush1.bf16.msra.mxu0 0
    %4260 = vmatprep.subr.bf16.mxu0 0
    %4261 = vmatpush1.bf16.msra.mxu0 0
    %4262 = vmatprep.subr.bf16.mxu0 0
    %4263 = vmatpush1.bf16.msra.mxu0 0
    %4264 = vmatprep.subr.bf16.mxu0 0
    %4265 = vmatpush1.bf16.msra.mxu0 0
    %4266 = vmatprep.subr.bf16.mxu0 0
    %4267 = vmatpush1.bf16.msra.mxu0 0
    %4268 = vmatprep.subr.bf16.mxu0 0
    %4269 = vmatpush1.bf16.msra.mxu0 0
    %4270 = vmatprep.mubr.bf16.mxu0 0
    %4271 = vmatmul.mubr.bf16.gmra.mrb[0].mxu0 0
    %v4272 = vpop.f32.mrb[0].mxu0
    %v4273 = vadd.f32 0.0, %v4272
    %v4274 = vpop.f32.mrb[0].mxu0
    %v4275 = vadd.f32 0.0, %v4274
    %v4276 = vpop.f32.mrb[0].mxu0
    %v4277 = vadd.f32 0.0, %v4276
    %v4278 = vpop.f32.mrb[0].mxu0
    %v4279 = vadd.f32 0.0, %v4278
    %4280 = vdwg.mxu0
    %v4281 = vadd.f32 %v3995, %v4230
    %v4282 = vadd.f32 %v3996, %v4232
    %v4283 = vadd.f32 %v3997, %v4273
    %v4284 = vadd.f32 %v3998, %v4275
    %v4285 = vadd.f32 %v3999, %v4234
    %v4286 = vadd.f32 %v4000, %v4236
    %v4287 = vadd.f32 %v4001, %v4277
    %v4288 = vadd.f32 %v4002, %v4279
    %v4289 = vxor.u32 %v4281, 2147483648
    %v4290 = vxor.u32 %v4285, 2147483648
    %v4291 = vmul.f32 %v4289, 1.442695
    %v4292 = vpow.pop %v4291
    %v4293 = vmul.f32 %v4290, 1.442695
    %v4294 = vpow.pop %v4293
    %v4295 = vadd.f32 %v4292, 1.0
    %v4296 = vadd.f32 %v4294, 1.0
    %v4297 = vrcp.pop %v4295
    %v4298 = vmul.f32 1.0, %v4297
    %v4299 = vrcp.pop %v4296
    %v4300 = vmul.f32 1.0, %v4299
    %v4301 = vxor.u32 %v4282, 2147483648
    %v4302 = vxor.u32 %v4286, 2147483648
    %v4303 = vmul.f32 %v4301, 1.442695
    %v4304 = vpow.pop %v4303
    %v4305 = vmul.f32 %v4302, 1.442695
    %v4306 = vpow.pop %v4305
    %v4307 = vadd.f32 %v4304, 1.0
    %v4308 = vadd.f32 %v4306, 1.0
    %v4309 = vrcp.pop %v4307
    %v4310 = vmul.f32 1.0, %v4309
    %v4311 = vrcp.pop %v4308
    %v4312 = vmul.f32 1.0, %v4311
    %v4313 = vtanh.pop %v4283
    %v4314 = vtanh.pop %v4287
    %v4315 = vxor.u32 %v4284, 2147483648
    %v4316 = vxor.u32 %v4288, 2147483648
    %v4317 = vmul.f32 %v4315, 1.442695
    %v4318 = vpow.pop %v4317
    %v4319 = vmul.f32 %v4316, 1.442695
    %v4320 = vpow.pop %v4319
    %v4321 = vadd.f32 %v4318, 1.0
    %v4322 = vadd.f32 %v4320, 1.0
    %v4323 = vrcp.pop %v4321
    %v4324 = vmul.f32 1.0, %v4323
    %v4325 = vrcp.pop %v4322
    %v4326 = vmul.f32 1.0, %v4325
    %v4327 = vmul.f32 %v4310, 0.0
    %v4328 = vmul.f32 %v4312, 0.0
    %v4329 = vmul.f32 %v4298, %v4313
    %v4330 = vmul.f32 %v4300, %v4314
    %v4331 = vadd.f32 %v4327, %v4329
    %v4332 = vadd.f32 %v4328, %v4330
    %v4333 = vtanh.pop %v4331
    %v4334 = vtanh.pop %v4332
    %v4335 = vmul.f32 %v4324, %v4333
    %v4336 = vmul.f32 %v4326, %v4334
    %v4337 = vld [vmem:[%s1017] sm:$0xff]
    %v4338 = vld [vmem:[%s1017 + $0x8] sm:$0xff]
    %v4339 = vld [vmem:[%s1017 + $0x10] sm:$0xff]
    %v4340 = vld [vmem:[%s1017 + $0x18] sm:$0xff]
    %v4341 = vunpack.c.l.bf16 %v4337
    %v4342 = vunpack.c.l.bf16 %v4338
    %v4343 = vunpack.c.l.bf16 %v4339
    %v4344 = vunpack.c.l.bf16 %v4340
    %v4345 = vunpack.c.h.bf16 %v4337
    %v4346 = vunpack.c.h.bf16 %v4338
    %v4347 = vunpack.c.h.bf16 %v4339
    %v4348 = vunpack.c.h.bf16 %v4340
    %v4349 = vpack.c.bf16 %v4336, %v4335
    %4350 = vmatprep.subr.bf16.mxu0 %v4132
    %4351 = vmatpush1.bf16.msra.mxu0 %v4131
    %4352 = vmatprep.subr.bf16.mxu0 %v4136
    %4353 = vmatpush1.bf16.msra.mxu0 %v4135
    %4354 = vmatprep.subr.bf16.mxu0 %v4140
    %4355 = vmatpush1.bf16.msra.mxu0 %v4139
    %4356 = vmatprep.subr.bf16.mxu0 %v4144
    %4357 = vmatpush1.bf16.msra.mxu0 %v4143
    %4358 = vmatprep.subr.bf16.mxu0 %v4148
    %4359 = vmatpush1.bf16.msra.mxu0 %v4147
    %4360 = vmatprep.subr.bf16.mxu0 %v4152
    %4361 = vmatpush1.bf16.msra.mxu0 %v4151
    %4362 = vmatprep.subr.bf16.mxu0 %v4156
    %4363 = vmatpush1.bf16.msra.mxu0 %v4155
    %4364 = vmatprep.subr.bf16.mxu0 %v4160
    %4365 = vmatpush1.bf16.msra.mxu0 %v4159
    %4366 = vmatprep.subr.bf16.mxu0 0
    %4367 = vmatpush1.bf16.msra.mxu0 0
    %4368 = vmatprep.subr.bf16.mxu0 0
    %4369 = vmatpush1.bf16.msra.mxu0 0
    %4370 = vmatprep.subr.bf16.mxu0 0
    %4371 = vmatpush1.bf16.msra.mxu0 0
    %4372 = vmatprep.subr.bf16.mxu0 0
    %4373 = vmatpush1.bf16.msra.mxu0 0
    %4374 = vmatprep.subr.bf16.mxu0 0
    %4375 = vmatpush1.bf16.msra.mxu0 0
    %4376 = vmatprep.subr.bf16.mxu0 0
    %4377 = vmatpush1.bf16.msra.mxu0 0
    %4378 = vmatprep.subr.bf16.mxu0 0
    %4379 = vmatpush1.bf16.msra.mxu0 0
    %4380 = vmatprep.subr.bf16.mxu0 0
    %4381 = vmatpush1.bf16.msra.mxu0 0
    %4382 = vmatprep.mubr.bf16.mxu0 0
    %4383 = vmatmul.mubr.bf16.gmra.mrb[0].mxu0 %v4349
    %v4384 = vpop.f32.mrb[0].mxu0
    %v4385 = vadd.f32 0.0, %v4384
    %v4386 = vpop.f32.mrb[0].mxu0
    %v4387 = vadd.f32 0.0, %v4386
    %v4388 = vpop.f32.mrb[0].mxu0
    %v4389 = vadd.f32 0.0, %v4388
    %v4390 = vpop.f32.mrb[0].mxu0
    %v4391 = vadd.f32 0.0, %v4390
    %4392 = vdwg.mxu0
    %4393 = vmatprep.subr.bf16.mxu0 %v4134
    %4394 = vmatpush1.bf16.msra.mxu0 %v4133
    %4395 = vmatprep.subr.bf16.mxu0 %v4138
    %4396 = vmatpush1.bf16.msra.mxu0 %v4137
    %4397 = vmatprep.subr.bf16.mxu0 %v4142
    %4398 = vmatpush1.bf16.msra.mxu0 %v4141
    %4399 = vmatprep.subr.bf16.mxu0 %v4146
    %4400 = vmatpush1.bf16.msra.mxu0 %v4145
    %4401 = vmatprep.subr.bf16.mxu0 %v4150
    %4402 = vmatpush1.bf16.msra.mxu0 %v4149
    %4403 = vmatprep.subr.bf16.mxu0 %v4154
    %4404 = vmatpush1.bf16.msra.mxu0 %v4153
    %4405 = vmatprep.subr.bf16.mxu0 %v4158
    %4406 = vmatpush1.bf16.msra.mxu0 %v4157
    %4407 = vmatprep.subr.bf16.mxu0 %v4162
    %4408 = vmatpush1.bf16.msra.mxu0 %v4161
    %4409 = vmatprep.subr.bf16.mxu0 0
    %4410 = vmatpush1.bf16.msra.mxu0 0
    %4411 = vmatprep.subr.bf16.mxu0 0
    %4412 = vmatpush1.bf16.msra.mxu0 0
    %4413 = vmatprep.subr.bf16.mxu0 0
    %4414 = vmatpush1.bf16.msra.mxu0 0
    %4415 = vmatprep.subr.bf16.mxu0 0
    %4416 = vmatpush1.bf16.msra.mxu0 0
    %4417 = vmatprep.subr.bf16.mxu0 0
    %4418 = vmatpush1.bf16.msra.mxu0 0
    %4419 = vmatprep.subr.bf16.mxu0 0
    %4420 = vmatpush1.bf16.msra.mxu0 0
    %4421 = vmatprep.subr.bf16.mxu0 0
    %4422 = vmatpush1.bf16.msra.mxu0 0
    %4423 = vmatprep.subr.bf16.mxu0 0
    %4424 = vmatpush1.bf16.msra.mxu0 0
    %4425 = vmatprep.mubr.bf16.mxu0 0
    %4426 = vmatmul.mubr.bf16.gmra.mrb[0].mxu0 %v4349
    %v4427 = vpop.f32.mrb[0].mxu0
    %v4428 = vadd.f32 0.0, %v4427
    %v4429 = vpop.f32.mrb[0].mxu0
    %v4430 = vadd.f32 0.0, %v4429
    %v4431 = vpop.f32.mrb[0].mxu0
    %v4432 = vadd.f32 0.0, %v4431
    %v4433 = vpop.f32.mrb[0].mxu0
    %v4434 = vadd.f32 0.0, %v4433
    %4435 = vdwg.mxu0
    %v4436 = vadd.f32 %v4341, %v4385
    %v4437 = vadd.f32 %v4342, %v4387
    %v4438 = vadd.f32 %v4343, %v4428
    %v4439 = vadd.f32 %v4344, %v4430
    %v4440 = vadd.f32 %v4345, %v4389
    %v4441 = vadd.f32 %v4346, %v4391
    %v4442 = vadd.f32 %v4347, %v4432
    %v4443 = vadd.f32 %v4348, %v4434
    %v4444 = vxor.u32 %v4436, 2147483648
    %v4445 = vxor.u32 %v4440, 2147483648
    %v4446 = vmul.f32 %v4444, 1.442695
    %v4447 = vpow.pop %v4446
    %v4448 = vmul.f32 %v4445, 1.442695
    %v4449 = vpow.pop %v4448
    %v4450 = vadd.f32 %v4447, 1.0
    %v4451 = vadd.f32 %v4449, 1.0
    %v4452 = vrcp.pop %v4450
    %v4453 = vmul.f32 1.0, %v4452
    %v4454 = vrcp.pop %v4451
    %v4455 = vmul.f32 1.0, %v4454
    %v4456 = vxor.u32 %v4437, 2147483648
    %v4457 = vxor.u32 %v4441, 2147483648
    %v4458 = vmul.f32 %v4456, 1.442695
    %v4459 = vpow.pop %v4458
    %v4460 = vmul.f32 %v4457, 1.442695
    %v4461 = vpow.pop %v4460
    %v4462 = vadd.f32 %v4459, 1.0
    %v4463 = vadd.f32 %v4461, 1.0
    %v4464 = vrcp.pop %v4462
    %v4465 = vmul.f32 1.0, %v4464
    %v4466 = vrcp.pop %v4463
    %v4467 = vmul.f32 1.0, %v4466
    %v4468 = vtanh.pop %v4438
    %v4469 = vtanh.pop %v4442
    %v4470 = vxor.u32 %v4439, 2147483648
    %v4471 = vxor.u32 %v4443, 2147483648
    %v4472 = vmul.f32 %v4470, 1.442695
    %v4473 = vpow.pop %v4472
    %v4474 = vmul.f32 %v4471, 1.442695
    %v4475 = vpow.pop %v4474
    %v4476 = vadd.f32 %v4473, 1.0
    %v4477 = vadd.f32 %v4475, 1.0
    %v4478 = vrcp.pop %v4476
    %v4479 = vmul.f32 1.0, %v4478
    %v4480 = vrcp.pop %v4477
    %v4481 = vmul.f32 1.0, %v4480
    %v4482 = vmul.f32 %v4465, %v4331
    %v4483 = vmul.f32 %v4467, %v4332
    %v4484 = vmul.f32 %v4453, %v4468
    %v4485 = vmul.f32 %v4455, %v4469
    %v4486 = vadd.f32 %v4482, %v4484
    %v4487 = vadd.f32 %v4483, %v4485
    %v4488 = vtanh.pop %v4486
    %v4489 = vtanh.pop %v4487
    %v4490 = vmul.f32 %v4479, %v4488
    %v4491 = vmul.f32 %v4481, %v4489
    %v4492 = vld [vmem:[%s1369] sm:$0xff]
    %v4493 = vld [vmem:[%s1369 + $0x8] sm:$0xff]
    %v4494 = vld [vmem:[%s1369 + $0x10] sm:$0xff]
    %v4495 = vld [vmem:[%s1369 + $0x18] sm:$0xff]
    %v4496 = vunpack.c.l.bf16 %v4492
    %v4497 = vunpack.c.l.bf16 %v4493
    %v4498 = vunpack.c.l.bf16 %v4494
    %v4499 = vunpack.c.l.bf16 %v4495
    %v4500 = vunpack.c.h.bf16 %v4492
    %v4501 = vunpack.c.h.bf16 %v4493
    %v4502 = vunpack.c.h.bf16 %v4494
    %v4503 = vunpack.c.h.bf16 %v4495
    %v4504 = vpack.c.bf16 %v4491, %v4490
    %4505 = vmatprep.subr.bf16.mxu0 %v4132
    %4506 = vmatpush1.bf16.msra.mxu0 %v4131
    %4507 = vmatprep.subr.bf16.mxu0 %v4136
    %4508 = vmatpush1.bf16.msra.mxu0 %v4135
    %4509 = vmatprep.subr.bf16.mxu0 %v4140
    %4510 = vmatpush1.bf16.msra.mxu0 %v4139
    %4511 = vmatprep.subr.bf16.mxu0 %v4144
    %4512 = vmatpush1.bf16.msra.mxu0 %v4143
    %4513 = vmatprep.subr.bf16.mxu0 %v4148
    %4514 = vmatpush1.bf16.msra.mxu0 %v4147
    %4515 = vmatprep.subr.bf16.mxu0 %v4152
    %4516 = vmatpush1.bf16.msra.mxu0 %v4151
    %4517 = vmatprep.subr.bf16.mxu0 %v4156
    %4518 = vmatpush1.bf16.msra.mxu0 %v4155
    %4519 = vmatprep.subr.bf16.mxu0 %v4160
    %4520 = vmatpush1.bf16.msra.mxu0 %v4159
    %4521 = vmatprep.subr.bf16.mxu0 0
    %4522 = vmatpush1.bf16.msra.mxu0 0
    %4523 = vmatprep.subr.bf16.mxu0 0
    %4524 = vmatpush1.bf16.msra.mxu0 0
    %4525 = vmatprep.subr.bf16.mxu0 0
    %4526 = vmatpush1.bf16.msra.mxu0 0
    %4527 = vmatprep.subr.bf16.mxu0 0
    %4528 = vmatpush1.bf16.msra.mxu0 0
    %4529 = vmatprep.subr.bf16.mxu0 0
    %4530 = vmatpush1.bf16.msra.mxu0 0
    %4531 = vmatprep.subr.bf16.mxu0 0
    %4532 = vmatpush1.bf16.msra.mxu0 0
    %4533 = vmatprep.subr.bf16.mxu0 0
    %4534 = vmatpush1.bf16.msra.mxu0 0
    %4535 = vmatprep.subr.bf16.mxu0 0
    %4536 = vmatpush1.bf16.msra.mxu0 0
    %4537 = vmatprep.mubr.bf16.mxu0 0
    %4538 = vmatmul.mubr.bf16.gmra.mrb[0].mxu0 %v4504
    %v4539 = vpop.f32.mrb[0].mxu0
    %v4540 = vadd.f32 0.0, %v4539
    %v4541 = vpop.f32.mrb[0].mxu0
    %v4542 = vadd.f32 0.0, %v4541
    %v4543 = vpop.f32.mrb[0].mxu0
    %v4544 = vadd.f32 0.0, %v4543
    %v4545 = vpop.f32.mrb[0].mxu0
    %v4546 = vadd.f32 0.0, %v4545
    %4547 = vdwg.mxu0
    %4548 = vmatprep.subr.bf16.mxu0 %v4134
    %4549 = vmatpush1.bf16.msra.mxu0 %v4133
    %4550 = vmatprep.subr.bf16.mxu0 %v4138
    %4551 = vmatpush1.bf16.msra.mxu0 %v4137
    %4552 = vmatprep.subr.bf16.mxu0 %v4142
    %4553 = vmatpush1.bf16.msra.mxu0 %v4141
    %4554 = vmatprep.subr.bf16.mxu0 %v4146
    %4555 = vmatpush1.bf16.msra.mxu0 %v4145
    %4556 = vmatprep.subr.bf16.mxu0 %v4150
    %4557 = vmatpush1.bf16.msra.mxu0 %v4149
    %4558 = vmatprep.subr.bf16.mxu0 %v4154
    %4559 = vmatpush1.bf16.msra.mxu0 %v4153
    %4560 = vmatprep.subr.bf16.mxu0 %v4158
    %4561 = vmatpush1.bf16.msra.mxu0 %v4157
    %4562 = vmatprep.subr.bf16.mxu0 %v4162
    %4563 = vmatpush1.bf16.msra.mxu0 %v4161
    %4564 = vmatprep.subr.bf16.mxu0 0
    %4565 = vmatpush1.bf16.msra.mxu0 0
    %4566 = vmatprep.subr.bf16.mxu0 0
    %4567 = vmatpush1.bf16.msra.mxu0 0
    %4568 = vmatprep.subr.bf16.mxu0 0
    %4569 = vmatpush1.bf16.msra.mxu0 0
    %4570 = vmatprep.subr.bf16.mxu0 0
    %4571 = vmatpush1.bf16.msra.mxu0 0
    %4572 = vmatprep.subr.bf16.mxu0 0
    %4573 = vmatpush1.bf16.msra.mxu0 0
    %4574 = vmatprep.subr.bf16.mxu0 0
    %4575 = vmatpush1.bf16.msra.mxu0 0
    %4576 = vmatprep.subr.bf16.mxu0 0
    %4577 = vmatpush1.bf16.msra.mxu0 0
    %4578 = vmatprep.subr.bf16.mxu0 0
    %4579 = vmatpush1.bf16.msra.mxu0 0
    %4580 = vmatprep.mubr.bf16.mxu0 0
    %4581 = vmatmul.mubr.bf16.gmra.mrb[0].mxu0 %v4504
    %v4582 = vpop.f32.mrb[0].mxu0
    %v4583 = vadd.f32 0.0, %v4582
    %v4584 = vpop.f32.mrb[0].mxu0
    %v4585 = vadd.f32 0.0, %v4584
    %v4586 = vpop.f32.mrb[0].mxu0
    %v4587 = vadd.f32 0.0, %v4586
    %v4588 = vpop.f32.mrb[0].mxu0
    %v4589 = vadd.f32 0.0, %v4588
    %4590 = vdwg.mxu0
    %v4591 = vadd.f32 %v4496, %v4540
    %v4592 = vadd.f32 %v4497, %v4542
    %v4593 = vadd.f32 %v4498, %v4583
    %v4594 = vadd.f32 %v4499, %v4585
    %v4595 = vadd.f32 %v4500, %v4544
    %v4596 = vadd.f32 %v4501, %v4546
    %v4597 = vadd.f32 %v4502, %v4587
    %v4598 = vadd.f32 %v4503, %v4589
    %v4599 = vxor.u32 %v4591, 2147483648
    %v4600 = vxor.u32 %v4595, 2147483648
    %v4601 = vmul.f32 %v4599, 1.442695
    %v4602 = vpow.pop %v4601
    %v4603 = vmul.f32 %v4600, 1.442695
    %v4604 = vpow.pop %v4603
    %v4605 = vadd.f32 %v4602, 1.0
    %v4606 = vadd.f32 %v4604, 1.0
    %v4607 = vrcp.pop %v4605
    %v4608 = vmul.f32 1.0, %v4607
    %v4609 = vrcp.pop %v4606
    %v4610 = vmul.f32 1.0, %v4609
    %v4611 = vxor.u32 %v4592, 2147483648
    %v4612 = vxor.u32 %v4596, 2147483648
    %v4613 = vmul.f32 %v4611, 1.442695
    %v4614 = vpow.pop %v4613
    %v4615 = vmul.f32 %v4612, 1.442695
    %v4616 = vpow.pop %v4615
    %v4617 = vadd.f32 %v4614, 1.0
    %v4618 = vadd.f32 %v4616, 1.0
    %v4619 = vrcp.pop %v4617
    %v4620 = vmul.f32 1.0, %v4619
    %v4621 = vrcp.pop %v4618
    %v4622 = vmul.f32 1.0, %v4621
    %v4623 = vtanh.pop %v4593
    %v4624 = vtanh.pop %v4597
    %v4625 = vxor.u32 %v4594, 2147483648
    %v4626 = vxor.u32 %v4598, 2147483648
    %v4627 = vmul.f32 %v4625, 1.442695
    %v4628 = vpow.pop %v4627
    %v4629 = vmul.f32 %v4626, 1.442695
    %v4630 = vpow.pop %v4629
    %v4631 = vadd.f32 %v4628, 1.0
    %v4632 = vadd.f32 %v4630, 1.0
    %v4633 = vrcp.pop %v4631
    %v4634 = vmul.f32 1.0, %v4633
    %v4635 = vrcp.pop %v4632
    %v4636 = vmul.f32 1.0, %v4635
    %v4637 = vmul.f32 %v4620, %v4486
    %v4638 = vmul.f32 %v4622, %v4487
    %v4639 = vmul.f32 %v4608, %v4623
    %v4640 = vmul.f32 %v4610, %v4624
    %v4641 = vadd.f32 %v4637, %v4639
    %v4642 = vadd.f32 %v4638, %v4640
    %v4643 = vtanh.pop %v4641
    %v4644 = vtanh.pop %v4642
    %v4645 = vmul.f32 %v4634, %v4643
    %v4646 = vmul.f32 %v4636, %v4644
    %v4647 = vld [vmem:[%s1721] sm:$0xff]
    %v4648 = vld [vmem:[%s1721 + $0x8] sm:$0xff]
    %v4649 = vld [vmem:[%s1721 + $0x10] sm:$0xff]
    %v4650 = vld [vmem:[%s1721 + $0x18] sm:$0xff]
    %v4651 = vunpack.c.l.bf16 %v4647
    %v4652 = vunpack.c.l.bf16 %v4648
    %v4653 = vunpack.c.l.bf16 %v4649
    %v4654 = vunpack.c.l.bf16 %v4650
    %v4655 = vunpack.c.h.bf16 %v4647
    %v4656 = vunpack.c.h.bf16 %v4648
    %v4657 = vunpack.c.h.bf16 %v4649
    %v4658 = vunpack.c.h.bf16 %v4650
    %v4659 = vpack.c.bf16 %v4646, %v4645
    %4660 = vmatprep.subr.bf16.mxu0 %v4132
    %4661 = vmatpush1.bf16.msra.mxu0 %v4131
    %4662 = vmatprep.subr.bf16.mxu0 %v4136
    %4663 = vmatpush1.bf16.msra.mxu0 %v4135
    %4664 = vmatprep.subr.bf16.mxu0 %v4140
    %4665 = vmatpush1.bf16.msra.mxu0 %v4139
    %4666 = vmatprep.subr.bf16.mxu0 %v4144
    %4667 = vmatpush1.bf16.msra.mxu0 %v4143
    %4668 = vmatprep.subr.bf16.mxu0 %v4148
    %4669 = vmatpush1.bf16.msra.mxu0 %v4147
    %4670 = vmatprep.subr.bf16.mxu0 %v4152
    %4671 = vmatpush1.bf16.msra.mxu0 %v4151
    %4672 = vmatprep.subr.bf16.mxu0 %v4156
    %4673 = vmatpush1.bf16.msra.mxu0 %v4155
    %4674 = vmatprep.subr.bf16.mxu0 %v4160
    %4675 = vmatpush1.bf16.msra.mxu0 %v4159
    %4676 = vmatprep.subr.bf16.mxu0 0
    %4677 = vmatpush1.bf16.msra.mxu0 0
    %4678 = vmatprep.subr.bf16.mxu0 0
    %4679 = vmatpush1.bf16.msra.mxu0 0
    %4680 = vmatprep.subr.bf16.mxu0 0
    %4681 = vmatpush1.bf16.msra.mxu0 0
    %4682 = vmatprep.subr.bf16.mxu0 0
    %4683 = vmatpush1.bf16.msra.mxu0 0
    %4684 = vmatprep.subr.bf16.mxu0 0
    %4685 = vmatpush1.bf16.msra.mxu0 0
    %4686 = vmatprep.subr.bf16.mxu0 0
    %4687 = vmatpush1.bf16.msra.mxu0 0
    %4688 = vmatprep.subr.bf16.mxu0 0
    %4689 = vmatpush1.bf16.msra.mxu0 0
    %4690 = vmatprep.subr.bf16.mxu0 0
    %4691 = vmatpush1.bf16.msra.mxu0 0
    %4692 = vmatprep.mubr.bf16.mxu0 0
    %4693 = vmatmul.mubr.bf16.gmra.mrb[0].mxu0 %v4659
    %v4694 = vpop.f32.mrb[0].mxu0
    %v4695 = vadd.f32 0.0, %v4694
    %v4696 = vpop.f32.mrb[0].mxu0
    %v4697 = vadd.f32 0.0, %v4696
    %v4698 = vpop.f32.mrb[0].mxu0
    %v4699 = vadd.f32 0.0, %v4698
    %v4700 = vpop.f32.mrb[0].mxu0
    %v4701 = vadd.f32 0.0, %v4700
    %4702 = vdwg.mxu0
    %4703 = vmatprep.subr.bf16.mxu0 %v4134
    %4704 = vmatpush1.bf16.msra.mxu0 %v4133
    %4705 = vmatprep.subr.bf16.mxu0 %v4138
    %4706 = vmatpush1.bf16.msra.mxu0 %v4137
    %4707 = vmatprep.subr.bf16.mxu0 %v4142
    %4708 = vmatpush1.bf16.msra.mxu0 %v4141
    %4709 = vmatprep.subr.bf16.mxu0 %v4146
    %4710 = vmatpush1.bf16.msra.mxu0 %v4145
    %4711 = vmatprep.subr.bf16.mxu0 %v4150
    %4712 = vmatpush1.bf16.msra.mxu0 %v4149
    %4713 = vmatprep.subr.bf16.mxu0 %v4154
    %4714 = vmatpush1.bf16.msra.mxu0 %v4153
    %4715 = vmatprep.subr.bf16.mxu0 %v4158
    %4716 = vmatpush1.bf16.msra.mxu0 %v4157
    %4717 = vmatprep.subr.bf16.mxu0 %v4162
    %4718 = vmatpush1.bf16.msra.mxu0 %v4161
    %4719 = vmatprep.subr.bf16.mxu0 0
    %4720 = vmatpush1.bf16.msra.mxu0 0
    %4721 = vmatprep.subr.bf16.mxu0 0
    %4722 = vmatpush1.bf16.msra.mxu0 0
    %4723 = vmatprep.subr.bf16.mxu0 0
    %4724 = vmatpush1.bf16.msra.mxu0 0
    %4725 = vmatprep.subr.bf16.mxu0 0
    %4726 = vmatpush1.bf16.msra.mxu0 0
    %4727 = vmatprep.subr.bf16.mxu0 0
    %4728 = vmatpush1.bf16.msra.mxu0 0
    %4729 = vmatprep.subr.bf16.mxu0 0
    %4730 = vmatpush1.bf16.msra.mxu0 0
    %4731 = vmatprep.subr.bf16.mxu0 0
    %4732 = vmatpush1.bf16.msra.mxu0 0
    %4733 = vmatprep.subr.bf16.mxu0 0
    %4734 = vmatpush1.bf16.msra.mxu0 0
    %4735 = vmatprep.mubr.bf16.mxu0 0
    %4736 = vmatmul.mubr.bf16.gmra.mrb[0].mxu0 %v4659
    %v4737 = vpop.f32.mrb[0].mxu0
    %v4738 = vadd.f32 0.0, %v4737
    %v4739 = vpop.f32.mrb[0].mxu0
    %v4740 = vadd.f32 0.0, %v4739
    %v4741 = vpop.f32.mrb[0].mxu0
    %v4742 = vadd.f32 0.0, %v4741
    %v4743 = vpop.f32.mrb[0].mxu0
    %v4744 = vadd.f32 0.0, %v4743
    %4745 = vdwg.mxu0
    %v4746 = vadd.f32 %v4651, %v4695
    %v4747 = vadd.f32 %v4652, %v4697
    %v4748 = vadd.f32 %v4653, %v4738
    %v4749 = vadd.f32 %v4654, %v4740
    %v4750 = vadd.f32 %v4655, %v4699
    %v4751 = vadd.f32 %v4656, %v4701
    %v4752 = vadd.f32 %v4657, %v4742
    %v4753 = vadd.f32 %v4658, %v4744
    %v4754 = vxor.u32 %v4746, 2147483648
    %v4755 = vxor.u32 %v4750, 2147483648
    %v4756 = vmul.f32 %v4754, 1.442695
    %v4757 = vpow.pop %v4756
    %v4758 = vmul.f32 %v4755, 1.442695
    %v4759 = vpow.pop %v4758
    %v4760 = vadd.f32 %v4757, 1.0
    %v4761 = vadd.f32 %v4759, 1.0
    %v4762 = vrcp.pop %v4760
    %v4763 = vmul.f32 1.0, %v4762
    %v4764 = vrcp.pop %v4761
    %v4765 = vmul.f32 1.0, %v4764
    %v4766 = vxor.u32 %v4747, 2147483648
    %v4767 = vxor.u32 %v4751, 2147483648
    %v4768 = vmul.f32 %v4766, 1.442695
    %v4769 = vpow.pop %v4768
    %v4770 = vmul.f32 %v4767, 1.442695
    %v4771 = vpow.pop %v4770
    %v4772 = vadd.f32 %v4769, 1.0
    %v4773 = vadd.f32 %v4771, 1.0
    %v4774 = vrcp.pop %v4772
    %v4775 = vmul.f32 1.0, %v4774
    %v4776 = vrcp.pop %v4773
    %v4777 = vmul.f32 1.0, %v4776
    %v4778 = vtanh.pop %v4748
    %v4779 = vtanh.pop %v4752
    %v4780 = vxor.u32 %v4749, 2147483648
    %v4781 = vxor.u32 %v4753, 2147483648
    %v4782 = vmul.f32 %v4780, 1.442695
    %v4783 = vpow.pop %v4782
    %v4784 = vmul.f32 %v4781, 1.442695
    %v4785 = vpow.pop %v4784
    %v4786 = vadd.f32 %v4783, 1.0
    %v4787 = vadd.f32 %v4785, 1.0
    %v4788 = vrcp.pop %v4786
    %v4789 = vmul.f32 1.0, %v4788
    %v4790 = vrcp.pop %v4787
    %v4791 = vmul.f32 1.0, %v4790
    %v4792 = vmul.f32 %v4775, %v4641
    %v4793 = vmul.f32 %v4777, %v4642
    %v4794 = vmul.f32 %v4763, %v4778
    %v4795 = vmul.f32 %v4765, %v4779
    %v4796 = vadd.f32 %v4792, %v4794
    %v4797 = vadd.f32 %v4793, %v4795
    %v4798 = vtanh.pop %v4796
    %v4799 = vtanh.pop %v4797
    %v4800 = vmul.f32 %v4789, %v4798
    %v4801 = vmul.f32 %v4791, %v4799
    %v4802 = vld [vmem:[%s2073] sm:$0xff]
    %v4803 = vld [vmem:[%s2073 + $0x8] sm:$0xff]
    %v4804 = vld [vmem:[%s2073 + $0x10] sm:$0xff]
    %v4805 = vld [vmem:[%s2073 + $0x18] sm:$0xff]
    %v4806 = vunpack.c.l.bf16 %v4802
    %v4807 = vunpack.c.l.bf16 %v4803
    %v4808 = vunpack.c.l.bf16 %v4804
    %v4809 = vunpack.c.l.bf16 %v4805
    %v4810 = vunpack.c.h.bf16 %v4802
    %v4811 = vunpack.c.h.bf16 %v4803
    %v4812 = vunpack.c.h.bf16 %v4804
    %v4813 = vunpack.c.h.bf16 %v4805
    %v4814 = vpack.c.bf16 %v4801, %v4800
    %4815 = vmatprep.subr.bf16.mxu0 %v4132
    %4816 = vmatpush1.bf16.msra.mxu0 %v4131
    %4817 = vmatprep.subr.bf16.mxu0 %v4136
    %4818 = vmatpush1.bf16.msra.mxu0 %v4135
    %4819 = vmatprep.subr.bf16.mxu0 %v4140
    %4820 = vmatpush1.bf16.msra.mxu0 %v4139
    %4821 = vmatprep.subr.bf16.mxu0 %v4144
    %4822 = vmatpush1.bf16.msra.mxu0 %v4143
    %4823 = vmatprep.subr.bf16.mxu0 %v4148
    %4824 = vmatpush1.bf16.msra.mxu0 %v4147
    %4825 = vmatprep.subr.bf16.mxu0 %v4152
    %4826 = vmatpush1.bf16.msra.mxu0 %v4151
    %4827 = vmatprep.subr.bf16.mxu0 %v4156
    %4828 = vmatpush1.bf16.msra.mxu0 %v4155
    %4829 = vmatprep.subr.bf16.mxu0 %v4160
    %4830 = vmatpush1.bf16.msra.mxu0 %v4159
    %4831 = vmatprep.subr.bf16.mxu0 0
    %4832 = vmatpush1.bf16.msra.mxu0 0
    %4833 = vmatprep.subr.bf16.mxu0 0
    %4834 = vmatpush1.bf16.msra.mxu0 0
    %4835 = vmatprep.subr.bf16.mxu0 0
    %4836 = vmatpush1.bf16.msra.mxu0 0
    %4837 = vmatprep.subr.bf16.mxu0 0
    %4838 = vmatpush1.bf16.msra.mxu0 0
    %4839 = vmatprep.subr.bf16.mxu0 0
    %4840 = vmatpush1.bf16.msra.mxu0 0
    %4841 = vmatprep.subr.bf16.mxu0 0
    %4842 = vmatpush1.bf16.msra.mxu0 0
    %4843 = vmatprep.subr.bf16.mxu0 0
    %4844 = vmatpush1.bf16.msra.mxu0 0
    %4845 = vmatprep.subr.bf16.mxu0 0
    %4846 = vmatpush1.bf16.msra.mxu0 0
    %4847 = vmatprep.mubr.bf16.mxu0 0
    %4848 = vmatmul.mubr.bf16.gmra.mrb[0].mxu0 %v4814
    %v4849 = vpop.f32.mrb[0].mxu0
    %v4850 = vadd.f32 0.0, %v4849
    %v4851 = vpop.f32.mrb[0].mxu0
    %v4852 = vadd.f32 0.0, %v4851
    %v4853 = vpop.f32.mrb[0].mxu0
    %v4854 = vadd.f32 0.0, %v4853
    %v4855 = vpop.f32.mrb[0].mxu0
    %v4856 = vadd.f32 0.0, %v4855
    %4857 = vdwg.mxu0
    %4858 = vmatprep.subr.bf16.mxu0 %v4134
    %4859 = vmatpush1.bf16.msra.mxu0 %v4133
    %4860 = vmatprep.subr.bf16.mxu0 %v4138
    %4861 = vmatpush1.bf16.msra.mxu0 %v4137
    %4862 = vmatprep.subr.bf16.mxu0 %v4142
    %4863 = vmatpush1.bf16.msra.mxu0 %v4141
    %4864 = vmatprep.subr.bf16.mxu0 %v4146
    %4865 = vmatpush1.bf16.msra.mxu0 %v4145
    %4866 = vmatprep.subr.bf16.mxu0 %v4150
    %4867 = vmatpush1.bf16.msra.mxu0 %v4149
    %4868 = vmatprep.subr.bf16.mxu0 %v4154
    %4869 = vmatpush1.bf16.msra.mxu0 %v4153
    %4870 = vmatprep.subr.bf16.mxu0 %v4158
    %4871 = vmatpush1.bf16.msra.mxu0 %v4157
    %4872 = vmatprep.subr.bf16.mxu0 %v4162
    %4873 = vmatpush1.bf16.msra.mxu0 %v4161
    %4874 = vmatprep.subr.bf16.mxu0 0
    %4875 = vmatpush1.bf16.msra.mxu0 0
    %4876 = vmatprep.subr.bf16.mxu0 0
    %4877 = vmatpush1.bf16.msra.mxu0 0
    %4878 = vmatprep.subr.bf16.mxu0 0
    %4879 = vmatpush1.bf16.msra.mxu0 0
    %4880 = vmatprep.subr.bf16.mxu0 0
    %4881 = vmatpush1.bf16.msra.mxu0 0
    %4882 = vmatprep.subr.bf16.mxu0 0
    %4883 = vmatpush1.bf16.msra.mxu0 0
    %4884 = vmatprep.subr.bf16.mxu0 0
    %4885 = vmatpush1.bf16.msra.mxu0 0
    %4886 = vmatprep.subr.bf16.mxu0 0
    %4887 = vmatpush1.bf16.msra.mxu0 0
    %4888 = vmatprep.subr.bf16.mxu0 0
    %4889 = vmatpush1.bf16.msra.mxu0 0
    %4890 = vmatprep.mubr.bf16.mxu0 0
    %4891 = vmatmul.mubr.bf16.gmra.mrb[0].mxu0 %v4814
    %v4892 = vpop.f32.mrb[0].mxu0
    %v4893 = vadd.f32 0.0, %v4892
    %v4894 = vpop.f32.mrb[0].mxu0
    %v4895 = vadd.f32 0.0, %v4894
    %v4896 = vpop.f32.mrb[0].mxu0
    %v4897 = vadd.f32 0.0, %v4896
    %v4898 = vpop.f32.mrb[0].mxu0
    %v4899 = vadd.f32 0.0, %v4898
    %4900 = vdwg.mxu0
    %v4901 = vadd.f32 %v4806, %v4850
    %v4902 = vadd.f32 %v4807, %v4852
    %v4903 = vadd.f32 %v4808, %v4893
    %v4904 = vadd.f32 %v4809, %v4895
    %v4905 = vadd.f32 %v4810, %v4854
    %v4906 = vadd.f32 %v4811, %v4856
    %v4907 = vadd.f32 %v4812, %v4897
    %v4908 = vadd.f32 %v4813, %v4899
    %v4909 = vxor.u32 %v4901, 2147483648
    %v4910 = vxor.u32 %v4905, 2147483648
    %v4911 = vmul.f32 %v4909, 1.442695
    %v4912 = vpow.pop %v4911
    %v4913 = vmul.f32 %v4910, 1.442695
    %v4914 = vpow.pop %v4913
    %v4915 = vadd.f32 %v4912, 1.0
    %v4916 = vadd.f32 %v4914, 1.0
    %v4917 = vrcp.pop %v4915
    %v4918 = vmul.f32 1.0, %v4917
    %v4919 = vrcp.pop %v4916
    %v4920 = vmul.f32 1.0, %v4919
    %v4921 = vxor.u32 %v4902, 2147483648
    %v4922 = vxor.u32 %v4906, 2147483648
    %v4923 = vmul.f32 %v4921, 1.442695
    %v4924 = vpow.pop %v4923
    %v4925 = vmul.f32 %v4922, 1.442695
    %v4926 = vpow.pop %v4925
    %v4927 = vadd.f32 %v4924, 1.0
    %v4928 = vadd.f32 %v4926, 1.0
    %v4929 = vrcp.pop %v4927
    %v4930 = vmul.f32 1.0, %v4929
    %v4931 = vrcp.pop %v4928
    %v4932 = vmul.f32 1.0, %v4931
    %v4933 = vtanh.pop %v4903
    %v4934 = vtanh.pop %v4907
    %v4935 = vxor.u32 %v4904, 2147483648
    %v4936 = vxor.u32 %v4908, 2147483648
    %v4937 = vmul.f32 %v4935, 1.442695
    %v4938 = vpow.pop %v4937
    %v4939 = vmul.f32 %v4936, 1.442695
    %v4940 = vpow.pop %v4939
    %v4941 = vadd.f32 %v4938, 1.0
    %v4942 = vadd.f32 %v4940, 1.0
    %v4943 = vrcp.pop %v4941
    %v4944 = vmul.f32 1.0, %v4943
    %v4945 = vrcp.pop %v4942
    %v4946 = vmul.f32 1.0, %v4945
    %v4947 = vmul.f32 %v4930, %v4796
    %v4948 = vmul.f32 %v4932, %v4797
    %v4949 = vmul.f32 %v4918, %v4933
    %v4950 = vmul.f32 %v4920, %v4934
    %v4951 = vadd.f32 %v4947, %v4949
    %v4952 = vadd.f32 %v4948, %v4950
    %v4953 = vtanh.pop %v4951
    %v4954 = vtanh.pop %v4952
    %v4955 = vmul.f32 %v4944, %v4953
    %v4956 = vmul.f32 %v4946, %v4954
    %v4957 = vld [vmem:[%s2425] sm:$0xff]
    %v4958 = vld [vmem:[%s2425 + $0x8] sm:$0xff]
    %v4959 = vld [vmem:[%s2425 + $0x10] sm:$0xff]
    %v4960 = vld [vmem:[%s2425 + $0x18] sm:$0xff]
    %v4961 = vunpack.c.l.bf16 %v4957
    %v4962 = vunpack.c.l.bf16 %v4958
    %v4963 = vunpack.c.l.bf16 %v4959
    %v4964 = vunpack.c.l.bf16 %v4960
    %v4965 = vunpack.c.h.bf16 %v4957
    %v4966 = vunpack.c.h.bf16 %v4958
    %v4967 = vunpack.c.h.bf16 %v4959
    %v4968 = vunpack.c.h.bf16 %v4960
    %v4969 = vpack.c.bf16 %v4956, %v4955
    %4970 = vmatprep.subr.bf16.mxu0 %v4132
    %4971 = vmatpush1.bf16.msra.mxu0 %v4131
    %4972 = vmatprep.subr.bf16.mxu0 %v4136
    %4973 = vmatpush1.bf16.msra.mxu0 %v4135
    %4974 = vmatprep.subr.bf16.mxu0 %v4140
    %4975 = vmatpush1.bf16.msra.mxu0 %v4139
    %4976 = vmatprep.subr.bf16.mxu0 %v4144
    %4977 = vmatpush1.bf16.msra.mxu0 %v4143
    %4978 = vmatprep.subr.bf16.mxu0 %v4148
    %4979 = vmatpush1.bf16.msra.mxu0 %v4147
    %4980 = vmatprep.subr.bf16.mxu0 %v4152
    %4981 = vmatpush1.bf16.msra.mxu0 %v4151
    %4982 = vmatprep.subr.bf16.mxu0 %v4156
    %4983 = vmatpush1.bf16.msra.mxu0 %v4155
    %4984 = vmatprep.subr.bf16.mxu0 %v4160
    %4985 = vmatpush1.bf16.msra.mxu0 %v4159
    %4986 = vmatprep.subr.bf16.mxu0 0
    %4987 = vmatpush1.bf16.msra.mxu0 0
    %4988 = vmatprep.subr.bf16.mxu0 0
    %4989 = vmatpush1.bf16.msra.mxu0 0
    %4990 = vmatprep.subr.bf16.mxu0 0
    %4991 = vmatpush1.bf16.msra.mxu0 0
    %4992 = vmatprep.subr.bf16.mxu0 0
    %4993 = vmatpush1.bf16.msra.mxu0 0
    %4994 = vmatprep.subr.bf16.mxu0 0
    %4995 = vmatpush1.bf16.msra.mxu0 0
    %4996 = vmatprep.subr.bf16.mxu0 0
    %4997 = vmatpush1.bf16.msra.mxu0 0
    %4998 = vmatprep.subr.bf16.mxu0 0
    %4999 = vmatpush1.bf16.msra.mxu0 0
    %5000 = vmatprep.subr.bf16.mxu0 0
    %5001 = vmatpush1.bf16.msra.mxu0 0
    %5002 = vmatprep.mubr.bf16.mxu0 0
    %5003 = vmatmul.mubr.bf16.gmra.mrb[0].mxu0 %v4969
    %v5004 = vpop.f32.mrb[0].mxu0
    %v5005 = vadd.f32 0.0, %v5004
    %v5006 = vpop.f32.mrb[0].mxu0
    %v5007 = vadd.f32 0.0, %v5006
    %v5008 = vpop.f32.mrb[0].mxu0
    %v5009 = vadd.f32 0.0, %v5008
    %v5010 = vpop.f32.mrb[0].mxu0
    %v5011 = vadd.f32 0.0, %v5010
    %5012 = vdwg.mxu0
    %5013 = vmatprep.subr.bf16.mxu0 %v4134
    %5014 = vmatpush1.bf16.msra.mxu0 %v4133
    %5015 = vmatprep.subr.bf16.mxu0 %v4138
    %5016 = vmatpush1.bf16.msra.mxu0 %v4137
    %5017 = vmatprep.subr.bf16.mxu0 %v4142
    %5018 = vmatpush1.bf16.msra.mxu0 %v4141
    %5019 = vmatprep.subr.bf16.mxu0 %v4146
    %5020 = vmatpush1.bf16.msra.mxu0 %v4145
    %5021 = vmatprep.subr.bf16.mxu0 %v4150
    %5022 = vmatpush1.bf16.msra.mxu0 %v4149
    %5023 = vmatprep.subr.bf16.mxu0 %v4154
    %5024 = vmatpush1.bf16.msra.mxu0 %v4153
    %5025 = vmatprep.subr.bf16.mxu0 %v4158
    %5026 = vmatpush1.bf16.msra.mxu0 %v4157
    %5027 = vmatprep.subr.bf16.mxu0 %v4162
    %5028 = vmatpush1.bf16.msra.mxu0 %v4161
    %5029 = vmatprep.subr.bf16.mxu0 0
    %5030 = vmatpush1.bf16.msra.mxu0 0
    %5031 = vmatprep.subr.bf16.mxu0 0
    %5032 = vmatpush1.bf16.msra.mxu0 0
    %5033 = vmatprep.subr.bf16.mxu0 0
    %5034 = vmatpush1.bf16.msra.mxu0 0
    %5035 = vmatprep.subr.bf16.mxu0 0
    %5036 = vmatpush1.bf16.msra.mxu0 0
    %5037 = vmatprep.subr.bf16.mxu0 0
    %5038 = vmatpush1.bf16.msra.mxu0 0
    %5039 = vmatprep.subr.bf16.mxu0 0
    %5040 = vmatpush1.bf16.msra.mxu0 0
    %5041 = vmatprep.subr.bf16.mxu0 0
    %5042 = vmatpush1.bf16.msra.mxu0 0
    %5043 = vmatprep.subr.bf16.mxu0 0
    %5044 = vmatpush1.bf16.msra.mxu0 0
    %5045 = vmatprep.mubr.bf16.mxu0 0
    %5046 = vmatmul.mubr.bf16.gmra.mrb[0].mxu0 %v4969
    %v5047 = vpop.f32.mrb[0].mxu0
    %v5048 = vadd.f32 0.0, %v5047
    %v5049 = vpop.f32.mrb[0].mxu0
    %v5050 = vadd.f32 0.0, %v5049
    %v5051 = vpop.f32.mrb[0].mxu0
    %v5052 = vadd.f32 0.0, %v5051
    %v5053 = vpop.f32.mrb[0].mxu0
    %v5054 = vadd.f32 0.0, %v5053
    %5055 = vdwg.mxu0
    %v5056 = vadd.f32 %v4961, %v5005
    %v5057 = vadd.f32 %v4962, %v5007
    %v5058 = vadd.f32 %v4963, %v5048
    %v5059 = vadd.f32 %v4964, %v5050
    %v5060 = vadd.f32 %v4965, %v5009
    %v5061 = vadd.f32 %v4966, %v5011
    %v5062 = vadd.f32 %v4967, %v5052
    %v5063 = vadd.f32 %v4968, %v5054
    %v5064 = vxor.u32 %v5056, 2147483648
    %v5065 = vxor.u32 %v5060, 2147483648
    %v5066 = vmul.f32 %v5064, 1.442695
    %v5067 = vpow.pop %v5066
    %v5068 = vmul.f32 %v5065, 1.442695
    %v5069 = vpow.pop %v5068
    %v5070 = vadd.f32 %v5067, 1.0
    %v5071 = vadd.f32 %v5069, 1.0
    %v5072 = vrcp.pop %v5070
    %v5073 = vmul.f32 1.0, %v5072
    %v5074 = vrcp.pop %v5071
    %v5075 = vmul.f32 1.0, %v5074
    %v5076 = vxor.u32 %v5057, 2147483648
    %v5077 = vxor.u32 %v5061, 2147483648
    %v5078 = vmul.f32 %v5076, 1.442695
    %v5079 = vpow.pop %v5078
    %v5080 = vmul.f32 %v5077, 1.442695
    %v5081 = vpow.pop %v5080
    %v5082 = vadd.f32 %v5079, 1.0
    %v5083 = vadd.f32 %v5081, 1.0
    %v5084 = vrcp.pop %v5082
    %v5085 = vmul.f32 1.0, %v5084
    %v5086 = vrcp.pop %v5083
    %v5087 = vmul.f32 1.0, %v5086
    %v5088 = vtanh.pop %v5058
    %v5089 = vtanh.pop %v5062
    %v5090 = vxor.u32 %v5059, 2147483648
    %v5091 = vxor.u32 %v5063, 2147483648
    %v5092 = vmul.f32 %v5090, 1.442695
    %v5093 = vpow.pop %v5092
    %v5094 = vmul.f32 %v5091, 1.442695
    %v5095 = vpow.pop %v5094
    %v5096 = vadd.f32 %v5093, 1.0
    %v5097 = vadd.f32 %v5095, 1.0
    %v5098 = vrcp.pop %v5096
    %v5099 = vmul.f32 1.0, %v5098
    %v5100 = vrcp.pop %v5097
    %v5101 = vmul.f32 1.0, %v5100
    %v5102 = vmul.f32 %v5085, %v4951
    %v5103 = vmul.f32 %v5087, %v4952
    %v5104 = vmul.f32 %v5073, %v5088
    %v5105 = vmul.f32 %v5075, %v5089
    %v5106 = vadd.f32 %v5102, %v5104
    %v5107 = vadd.f32 %v5103, %v5105
    %v5108 = vtanh.pop %v5106
    %v5109 = vtanh.pop %v5107
    %v5110 = vmul.f32 %v5099, %v5108
    %v5111 = vmul.f32 %v5101, %v5109
    %v5112 = vld [vmem:[%s2777] sm:$0xff]
    %v5113 = vld [vmem:[%s2777 + $0x8] sm:$0xff]
    %v5114 = vld [vmem:[%s2777 + $0x10] sm:$0xff]
    %v5115 = vld [vmem:[%s2777 + $0x18] sm:$0xff]
    %v5116 = vunpack.c.l.bf16 %v5112
    %v5117 = vunpack.c.l.bf16 %v5113
    %v5118 = vunpack.c.l.bf16 %v5114
    %v5119 = vunpack.c.l.bf16 %v5115
    %v5120 = vunpack.c.h.bf16 %v5112
    %v5121 = vunpack.c.h.bf16 %v5113
    %v5122 = vunpack.c.h.bf16 %v5114
    %v5123 = vunpack.c.h.bf16 %v5115
    %v5124 = vpack.c.bf16 %v5111, %v5110
    %5125 = vmatprep.subr.bf16.mxu0 %v4132
    %5126 = vmatpush1.bf16.msra.mxu0 %v4131
    %5127 = vmatprep.subr.bf16.mxu0 %v4136
    %5128 = vmatpush1.bf16.msra.mxu0 %v4135
    %5129 = vmatprep.subr.bf16.mxu0 %v4140
    %5130 = vmatpush1.bf16.msra.mxu0 %v4139
    %5131 = vmatprep.subr.bf16.mxu0 %v4144
    %5132 = vmatpush1.bf16.msra.mxu0 %v4143
    %5133 = vmatprep.subr.bf16.mxu0 %v4148
    %5134 = vmatpush1.bf16.msra.mxu0 %v4147
    %5135 = vmatprep.subr.bf16.mxu0 %v4152
    %5136 = vmatpush1.bf16.msra.mxu0 %v4151
    %5137 = vmatprep.subr.bf16.mxu0 %v4156
    %5138 = vmatpush1.bf16.msra.mxu0 %v4155
    %5139 = vmatprep.subr.bf16.mxu0 %v4160
    %5140 = vmatpush1.bf16.msra.mxu0 %v4159
    %5141 = vmatprep.subr.bf16.mxu0 0
    %5142 = vmatpush1.bf16.msra.mxu0 0
    %5143 = vmatprep.subr.bf16.mxu0 0
    %5144 = vmatpush1.bf16.msra.mxu0 0
    %5145 = vmatprep.subr.bf16.mxu0 0
    %5146 = vmatpush1.bf16.msra.mxu0 0
    %5147 = vmatprep.subr.bf16.mxu0 0
    %5148 = vmatpush1.bf16.msra.mxu0 0
    %5149 = vmatprep.subr.bf16.mxu0 0
    %5150 = vmatpush1.bf16.msra.mxu0 0
    %5151 = vmatprep.subr.bf16.mxu0 0
    %5152 = vmatpush1.bf16.msra.mxu0 0
    %5153 = vmatprep.subr.bf16.mxu0 0
    %5154 = vmatpush1.bf16.msra.mxu0 0
    %5155 = vmatprep.subr.bf16.mxu0 0
    %5156 = vmatpush1.bf16.msra.mxu0 0
    %5157 = vmatprep.mubr.bf16.mxu0 0
    %5158 = vmatmul.mubr.bf16.gmra.mrb[0].mxu0 %v5124
    %v5159 = vpop.f32.mrb[0].mxu0
    %v5160 = vadd.f32 0.0, %v5159
    %v5161 = vpop.f32.mrb[0].mxu0
    %v5162 = vadd.f32 0.0, %v5161
    %v5163 = vpop.f32.mrb[0].mxu0
    %v5164 = vadd.f32 0.0, %v5163
    %v5165 = vpop.f32.mrb[0].mxu0
    %v5166 = vadd.f32 0.0, %v5165
    %5167 = vdwg.mxu0
    %5168 = vmatprep.subr.bf16.mxu0 %v4134
    %5169 = vmatpush1.bf16.msra.mxu0 %v4133
    %5170 = vmatprep.subr.bf16.mxu0 %v4138
    %5171 = vmatpush1.bf16.msra.mxu0 %v4137
    %5172 = vmatprep.subr.bf16.mxu0 %v4142
    %5173 = vmatpush1.bf16.msra.mxu0 %v4141
    %5174 = vmatprep.subr.bf16.mxu0 %v4146
    %5175 = vmatpush1.bf16.msra.mxu0 %v4145
    %5176 = vmatprep.subr.bf16.mxu0 %v4150
    %5177 = vmatpush1.bf16.msra.mxu0 %v4149
    %5178 = vmatprep.subr.bf16.mxu0 %v4154
    %5179 = vmatpush1.bf16.msra.mxu0 %v4153
    %5180 = vmatprep.subr.bf16.mxu0 %v4158
    %5181 = vmatpush1.bf16.msra.mxu0 %v4157
    %5182 = vmatprep.subr.bf16.mxu0 %v4162
    %5183 = vmatpush1.bf16.msra.mxu0 %v4161
    %5184 = vmatprep.subr.bf16.mxu0 0
    %5185 = vmatpush1.bf16.msra.mxu0 0
    %5186 = vmatprep.subr.bf16.mxu0 0
    %5187 = vmatpush1.bf16.msra.mxu0 0
    %5188 = vmatprep.subr.bf16.mxu0 0
    %5189 = vmatpush1.bf16.msra.mxu0 0
    %5190 = vmatprep.subr.bf16.mxu0 0
    %5191 = vmatpush1.bf16.msra.mxu0 0
    %5192 = vmatprep.subr.bf16.mxu0 0
    %5193 = vmatpush1.bf16.msra.mxu0 0
    %5194 = vmatprep.subr.bf16.mxu0 0
    %5195 = vmatpush1.bf16.msra.mxu0 0
    %5196 = vmatprep.subr.bf16.mxu0 0
    %5197 = vmatpush1.bf16.msra.mxu0 0
    %5198 = vmatprep.subr.bf16.mxu0 0
    %5199 = vmatpush1.bf16.msra.mxu0 0
    %5200 = vmatprep.mubr.bf16.mxu0 0
    %5201 = vmatmul.mubr.bf16.gmra.mrb[0].mxu0 %v5124
    %v5202 = vpop.f32.mrb[0].mxu0
    %v5203 = vadd.f32 0.0, %v5202
    %v5204 = vpop.f32.mrb[0].mxu0
    %v5205 = vadd.f32 0.0, %v5204
    %v5206 = vpop.f32.mrb[0].mxu0
    %v5207 = vadd.f32 0.0, %v5206
    %v5208 = vpop.f32.mrb[0].mxu0
    %v5209 = vadd.f32 0.0, %v5208
    %5210 = vdwg.mxu0
    %v5211 = vadd.f32 %v5116, %v5160
    %v5212 = vadd.f32 %v5117, %v5162
    %v5213 = vadd.f32 %v5118, %v5203
    %v5214 = vadd.f32 %v5119, %v5205
    %v5215 = vadd.f32 %v5120, %v5164
    %v5216 = vadd.f32 %v5121, %v5166
    %v5217 = vadd.f32 %v5122, %v5207
    %v5218 = vadd.f32 %v5123, %v5209
    %v5219 = vxor.u32 %v5211, 2147483648
    %v5220 = vxor.u32 %v5215, 2147483648
    %v5221 = vmul.f32 %v5219, 1.442695
    %v5222 = vpow.pop %v5221
    %v5223 = vmul.f32 %v5220, 1.442695
    %v5224 = vpow.pop %v5223
    %v5225 = vadd.f32 %v5222, 1.0
    %v5226 = vadd.f32 %v5224, 1.0
    %v5227 = vrcp.pop %v5225
    %v5228 = vmul.f32 1.0, %v5227
    %v5229 = vrcp.pop %v5226
    %v5230 = vmul.f32 1.0, %v5229
    %v5231 = vxor.u32 %v5212, 2147483648
    %v5232 = vxor.u32 %v5216, 2147483648
    %v5233 = vmul.f32 %v5231, 1.442695
    %v5234 = vpow.pop %v5233
    %v5235 = vmul.f32 %v5232, 1.442695
    %v5236 = vpow.pop %v5235
    %v5237 = vadd.f32 %v5234, 1.0
    %v5238 = vadd.f32 %v5236, 1.0
    %v5239 = vrcp.pop %v5237
    %v5240 = vmul.f32 1.0, %v5239
    %v5241 = vrcp.pop %v5238
    %v5242 = vmul.f32 1.0, %v5241
    %v5243 = vtanh.pop %v5213
    %v5244 = vtanh.pop %v5217
    %v5245 = vxor.u32 %v5214, 2147483648
    %v5246 = vxor.u32 %v5218, 2147483648
    %v5247 = vmul.f32 %v5245, 1.442695
    %v5248 = vpow.pop %v5247
    %v5249 = vmul.f32 %v5246, 1.442695
    %v5250 = vpow.pop %v5249
    %v5251 = vadd.f32 %v5248, 1.0
    %v5252 = vadd.f32 %v5250, 1.0
    %v5253 = vrcp.pop %v5251
    %v5254 = vmul.f32 1.0, %v5253
    %v5255 = vrcp.pop %v5252
    %v5256 = vmul.f32 1.0, %v5255
    %v5257 = vmul.f32 %v5240, %v5106
    %v5258 = vmul.f32 %v5242, %v5107
    %v5259 = vmul.f32 %v5228, %v5243
    %v5260 = vmul.f32 %v5230, %v5244
    %v5261 = vadd.f32 %v5257, %v5259
    %v5262 = vadd.f32 %v5258, %v5260
    %v5263 = vtanh.pop %v5261
    %v5264 = vtanh.pop %v5262
    %v5265 = vmul.f32 %v5254, %v5263
    %v5266 = vmul.f32 %v5256, %v5264
    %v5267 = vld [vmem:[%s3129] sm:$0xff]
    %v5268 = vld [vmem:[%s3129 + $0x8] sm:$0xff]
    %v5269 = vld [vmem:[%s3129 + $0x10] sm:$0xff]
    %v5270 = vld [vmem:[%s3129 + $0x18] sm:$0xff]
    %v5271 = vunpack.c.l.bf16 %v5267
    %v5272 = vunpack.c.l.bf16 %v5268
    %v5273 = vunpack.c.l.bf16 %v5269
    %v5274 = vunpack.c.l.bf16 %v5270
    %v5275 = vunpack.c.h.bf16 %v5267
    %v5276 = vunpack.c.h.bf16 %v5268
    %v5277 = vunpack.c.h.bf16 %v5269
    %v5278 = vunpack.c.h.bf16 %v5270
    %v5279 = vpack.c.bf16 %v5266, %v5265
    %5280 = vmatprep.subr.bf16.mxu0 %v4132
    %5281 = vmatpush1.bf16.msra.mxu0 %v4131
    %5282 = vmatprep.subr.bf16.mxu0 %v4136
    %5283 = vmatpush1.bf16.msra.mxu0 %v4135
    %5284 = vmatprep.subr.bf16.mxu0 %v4140
    %5285 = vmatpush1.bf16.msra.mxu0 %v4139
    %5286 = vmatprep.subr.bf16.mxu0 %v4144
    %5287 = vmatpush1.bf16.msra.mxu0 %v4143
    %5288 = vmatprep.subr.bf16.mxu0 %v4148
    %5289 = vmatpush1.bf16.msra.mxu0 %v4147
    %5290 = vmatprep.subr.bf16.mxu0 %v4152
    %5291 = vmatpush1.bf16.msra.mxu0 %v4151
    %5292 = vmatprep.subr.bf16.mxu0 %v4156
    %5293 = vmatpush1.bf16.msra.mxu0 %v4155
    %5294 = vmatprep.subr.bf16.mxu0 %v4160
    %5295 = vmatpush1.bf16.msra.mxu0 %v4159
    %5296 = vmatprep.subr.bf16.mxu0 0
    %5297 = vmatpush1.bf16.msra.mxu0 0
    %5298 = vmatprep.subr.bf16.mxu0 0
    %5299 = vmatpush1.bf16.msra.mxu0 0
    %5300 = vmatprep.subr.bf16.mxu0 0
    %5301 = vmatpush1.bf16.msra.mxu0 0
    %5302 = vmatprep.subr.bf16.mxu0 0
    %5303 = vmatpush1.bf16.msra.mxu0 0
    %5304 = vmatprep.subr.bf16.mxu0 0
    %5305 = vmatpush1.bf16.msra.mxu0 0
    %5306 = vmatprep.subr.bf16.mxu0 0
    %5307 = vmatpush1.bf16.msra.mxu0 0
    %5308 = vmatprep.subr.bf16.mxu0 0
    %5309 = vmatpush1.bf16.msra.mxu0 0
    %5310 = vmatprep.subr.bf16.mxu0 0
    %5311 = vmatpush1.bf16.msra.mxu0 0
    %5312 = vmatprep.mubr.bf16.mxu0 0
    %5313 = vmatmul.mubr.bf16.gmra.mrb[0].mxu0 %v5279
    %v5314 = vpop.f32.mrb[0].mxu0
    %v5315 = vadd.f32 0.0, %v5314
    %v5316 = vpop.f32.mrb[0].mxu0
    %v5317 = vadd.f32 0.0, %v5316
    %v5318 = vpop.f32.mrb[0].mxu0
    %v5319 = vadd.f32 0.0, %v5318
    %v5320 = vpop.f32.mrb[0].mxu0
    %v5321 = vadd.f32 0.0, %v5320
    %5322 = vdwg.mxu0
    %5323 = vmatprep.subr.bf16.mxu0 %v4134
    %5324 = vmatpush1.bf16.msra.mxu0 %v4133
    %5325 = vmatprep.subr.bf16.mxu0 %v4138
    %5326 = vmatpush1.bf16.msra.mxu0 %v4137
    %5327 = vmatprep.subr.bf16.mxu0 %v4142
    %5328 = vmatpush1.bf16.msra.mxu0 %v4141
    %5329 = vmatprep.subr.bf16.mxu0 %v4146
    %5330 = vmatpush1.bf16.msra.mxu0 %v4145
    %5331 = vmatprep.subr.bf16.mxu0 %v4150
    %5332 = vmatpush1.bf16.msra.mxu0 %v4149
    %5333 = vmatprep.subr.bf16.mxu0 %v4154
    %5334 = vmatpush1.bf16.msra.mxu0 %v4153
    %5335 = vmatprep.subr.bf16.mxu0 %v4158
    %5336 = vmatpush1.bf16.msra.mxu0 %v4157
    %5337 = vmatprep.subr.bf16.mxu0 %v4162
    %5338 = vmatpush1.bf16.msra.mxu0 %v4161
    %5339 = vmatprep.subr.bf16.mxu0 0
    %5340 = vmatpush1.bf16.msra.mxu0 0
    %5341 = vmatprep.subr.bf16.mxu0 0
    %5342 = vmatpush1.bf16.msra.mxu0 0
    %5343 = vmatprep.subr.bf16.mxu0 0
    %5344 = vmatpush1.bf16.msra.mxu0 0
    %5345 = vmatprep.subr.bf16.mxu0 0
    %5346 = vmatpush1.bf16.msra.mxu0 0
    %5347 = vmatprep.subr.bf16.mxu0 0
    %5348 = vmatpush1.bf16.msra.mxu0 0
    %5349 = vmatprep.subr.bf16.mxu0 0
    %5350 = vmatpush1.bf16.msra.mxu0 0
    %5351 = vmatprep.subr.bf16.mxu0 0
    %5352 = vmatpush1.bf16.msra.mxu0 0
    %5353 = vmatprep.subr.bf16.mxu0 0
    %5354 = vmatpush1.bf16.msra.mxu0 0
    %5355 = vmatprep.mubr.bf16.mxu0 0
    %5356 = vmatmul.mubr.bf16.gmra.mrb[0].mxu0 %v5279
    %v5357 = vpop.f32.mrb[0].mxu0
    %v5358 = vadd.f32 0.0, %v5357
    %v5359 = vpop.f32.mrb[0].mxu0
    %v5360 = vadd.f32 0.0, %v5359
    %v5361 = vpop.f32.mrb[0].mxu0
    %v5362 = vadd.f32 0.0, %v5361
    %v5363 = vpop.f32.mrb[0].mxu0
    %v5364 = vadd.f32 0.0, %v5363
    %5365 = vdwg.mxu0
    %v5366 = vadd.f32 %v5271, %v5315
    %v5367 = vadd.f32 %v5272, %v5317
    %v5368 = vadd.f32 %v5273, %v5358
    %v5369 = vadd.f32 %v5274, %v5360
    %v5370 = vadd.f32 %v5275, %v5319
    %v5371 = vadd.f32 %v5276, %v5321
    %v5372 = vadd.f32 %v5277, %v5362
    %v5373 = vadd.f32 %v5278, %v5364
    %v5374 = vxor.u32 %v5366, 2147483648
    %v5375 = vxor.u32 %v5370, 2147483648
    %v5376 = vmul.f32 %v5374, 1.442695
    %v5377 = vpow.pop %v5376
    %v5378 = vmul.f32 %v5375, 1.442695
    %v5379 = vpow.pop %v5378
    %v5380 = vadd.f32 %v5377, 1.0
    %v5381 = vadd.f32 %v5379, 1.0
    %v5382 = vrcp.pop %v5380
    %v5383 = vmul.f32 1.0, %v5382
    %v5384 = vrcp.pop %v5381
    %v5385 = vmul.f32 1.0, %v5384
    %v5386 = vxor.u32 %v5367, 2147483648
    %v5387 = vxor.u32 %v5371, 2147483648
    %v5388 = vmul.f32 %v5386, 1.442695
    %v5389 = vpow.pop %v5388
    %v5390 = vmul.f32 %v5387, 1.442695
    %v5391 = vpow.pop %v5390
    %v5392 = vadd.f32 %v5389, 1.0
    %v5393 = vadd.f32 %v5391, 1.0
    %v5394 = vrcp.pop %v5392
    %v5395 = vmul.f32 1.0, %v5394
    %v5396 = vrcp.pop %v5393
    %v5397 = vmul.f32 1.0, %v5396
    %v5398 = vtanh.pop %v5368
    %v5399 = vtanh.pop %v5372
    %v5400 = vxor.u32 %v5369, 2147483648
    %v5401 = vxor.u32 %v5373, 2147483648
    %v5402 = vmul.f32 %v5400, 1.442695
    %v5403 = vpow.pop %v5402
    %v5404 = vmul.f32 %v5401, 1.442695
    %v5405 = vpow.pop %v5404
    %v5406 = vadd.f32 %v5403, 1.0
    %v5407 = vadd.f32 %v5405, 1.0
    %v5408 = vrcp.pop %v5406
    %v5409 = vmul.f32 1.0, %v5408
    %v5410 = vrcp.pop %v5407
    %v5411 = vmul.f32 1.0, %v5410
    %v5412 = vmul.f32 %v5395, %v5261
    %v5413 = vmul.f32 %v5397, %v5262
    %v5414 = vmul.f32 %v5383, %v5398
    %v5415 = vmul.f32 %v5385, %v5399
    %v5416 = vadd.f32 %v5412, %v5414
    %v5417 = vadd.f32 %v5413, %v5415
    %v5418 = vtanh.pop %v5416
    %v5419 = vtanh.pop %v5417
    %v5420 = vmul.f32 %v5409, %v5418
    %v5421 = vmul.f32 %v5411, %v5419
    %5422 = vst [vmem:[#allocation14] sm:$0xff] %v5420
    %5423 = vst [vmem:[#allocation14 + $0x8] sm:$0xff] %v5421
    // Predicated region
    $region50: #{tpu_custom_call.1} parent=1 // pred_check
      _
    $region51: #{tpu_custom_call.1} parent=1 // pred_check_branch
      %5425 = sbr.rel (0) target = $region53
    $region52: #{tpu_custom_call.1} parent=1 // pred_region
      %s5427 = ssub.s32 256, 256
      %5428 = vsyncadd [#allocation7], %s5427
      %s5429 = sshll.u32 [#allocation14], 4
      %s5430 = int_to_ptr.vmem [resolvable:$true] %s5429
      %5435 = dma.vmem_to_hbm [thread:$0]  %s5430, 256, %s7, [#allocation7], 128, 128, 8
    $region53: #{tpu_custom_call.1} parent=1 // pred_fallthru
      _
    // Predicated region
    $region54: #{tpu_custom_call.1} parent=1 // pred_check
      _
    $region55: #{tpu_custom_call.1} parent=1 // pred_check_branch
      %5437 = sbr.rel (0) target = $region57
    $region56: #{tpu_custom_call.1} parent=1 // pred_region
      %5438 = dma.done [#allocation7], 256
    $region57: #{tpu_custom_call.1} parent=1 // pred_fallthru
      _
    %5439 = vsyncpa [#allocation6], 1
    %5440 = vsyncpa [#allocation9], 1
    %5441 = vsyncpa [#allocation12], 1
    %5442 = vsyncpa [#allocation7], 1

</llo_original>
